<compile_context>
chip_gen: v6e
topology: v6e:2x2x1
jax: 0.10.0
libtpu: 0.0.40
codegen_flags: <defaults>
</compile_context>

<pallas_src>
import functools

import jax
import jax.numpy as jnp
from jax.experimental import pallas as pl
from jax.experimental.pallas import tpu as pltpu


# ------------------------------ fused kernel ---------------------------------

def _local_block_kernel(x_ref, s1_ref, t1_ref, dww_ref, pww_ref, pwb_ref,
                        w1_ref, b1_ref, w2_ref, b2_ref, o_ref, halo_ref,
                        *, ws, bh):
    """One (batch, row-band) step of the fused LocalBlock forward.

    x_ref   : (1, H, W, C) f32   full input image for this batch element (revisited)
    s1/t1   : (1, C)  f32        norm1 eval-BN folded to a per-channel affine
    dww_ref : (ws, ws, C) f32    depthwise weights, layout [dx, dy, c], BN scale folded
    pww_ref : (C, C)  bf16       pointwise 1x1 weights (Cin, Cout)
    pwb_ref : (1, C)  f32        pointwise bias = folded BN shift
    w1_ref  : (C, Dh) bf16       fc1 weights with norm2 folded in
    b1_ref  : (1, Dh) f32        fc1 bias with norm2 folded in
    w2_ref  : (Dh, C) bf16       fc2 weights
    b2_ref  : (1, C)  f32        fc2 bias
    o_ref   : (1, bh, W, C) f32  output row band
    halo_ref: (H+ws-1, W+ws-1, C) f32 VMEM scratch: zero/reflect-padded norm1(x)
    """
    _, H, W, C = x_ref.shape
    pad = (ws - 1) // 2
    rb = pl.program_id(1)
    r0 = pl.multiple_of(rb * bh, bh)

    # ---- once per batch element: norm1 affine + reflect/zero halo, built in VMEM ----
    @pl.when(rb == 0)
    def _build_halo():
        halo_ref[...] = jnp.zeros_like(halo_ref)                     # zero border (conv padding)
        halo_ref[pad:pad + H, pad:pad + W, :] = (
            x_ref[0] * s1_ref[0] + t1_ref[0])                        # interior = norm1(x)
        # reflect pad bottom/right by 1 (PyTorch 'reflect' excludes the edge)
        halo_ref[pad + H:pad + H + 1, pad:pad + W, :] = \
            halo_ref[pad + H - 2:pad + H - 1, pad:pad + W, :]
        halo_ref[pad:pad + H + 1, pad + W:pad + W + 1, :] = \
            halo_ref[pad:pad + H + 1, pad + W - 2:pad + W - 1, :]

    # ---- depthwise ws*ws conv, dx (sublane) shift hoisted: ws shifts, not ws*ws ----
    Hh = bh + ws - 1
    acc = jnp.zeros((bh, W, C), jnp.float32)
    for dx in range(ws):
        col = halo_ref[pl.ds(r0, Hh), dx:dx + W, :]     # one sublane relayout per dx
        wdx = dww_ref[dx]                               # (ws, C): per-dy weights for this dx
        for dy in range(ws):
            acc = acc + col[dy:dy + bh] * wdx[dy]       # cheap leading-axis slice

    # ---- pointwise 1x1 (MXU) + folded BN shift + residual (x) ----
    M = bh * W
    x_band = x_ref[0, pl.ds(r0, bh), :, :].reshape(M, C)
    pw = jnp.dot(acc.reshape(M, C).astype(jnp.bfloat16), pww_ref[...],
                 preferred_element_type=jnp.float32) + pwb_ref[...]
    x1 = pw + x_band                                    # x + LocalAttention(norm1(x))

    # ---- MLP (norm2 folded into fc1) + ReLU6 + second residual, hidden stays in VMEM ----
    h = jnp.dot(x1.astype(jnp.bfloat16), w1_ref[...],
                preferred_element_type=jnp.float32) + b1_ref[...]
    h = jnp.minimum(jnp.maximum(h, 0.0), 6.0)
    y = jnp.dot(h.astype(jnp.bfloat16), w2_ref[...],
                preferred_element_type=jnp.float32) + b2_ref[...]
    o_ref[0] = (x1 + y).reshape(bh, W, C).astype(o_ref.dtype)


# ------------------------------ JAX wrapper -----------------------------------

def init_params(key, dim, ws, hidden):
    ks = jax.random.split(key, 18)
    rnd = lambda i, shape, s=0.05: jax.random.normal(ks[i], shape, jnp.float32) * s
    p = {}
    # norm1 (BatchNorm2d, eval-mode running stats)
    p['n1_gamma'] = 1.0 + rnd(0, (dim,), 0.1)
    p['n1_beta'] = rnd(1, (dim,), 0.1)
    p['n1_mean'] = rnd(2, (dim,), 0.1)
    p['n1_var'] = jax.random.uniform(ks[3], (dim,), jnp.float32, 0.5, 1.5)
    # proj = SeparableConvBN(dim, dim, kernel_size=ws)
    p['dw_w'] = rnd(4, (dim, ws, ws))          # depthwise, groups=dim, bias=False
    p['bn_gamma'] = 1.0 + rnd(5, (dim,), 0.1)
    p['bn_beta'] = rnd(6, (dim,), 0.1)
    p['bn_mean'] = rnd(7, (dim,), 0.1)
    p['bn_var'] = jax.random.uniform(ks[8], (dim,), jnp.float32, 0.5, 1.5)
    p['pw_w'] = rnd(9, (dim, dim))             # pointwise 1x1, bias=False
    # norm2
    p['n2_gamma'] = 1.0 + rnd(10, (dim,), 0.1)
    p['n2_beta'] = rnd(11, (dim,), 0.1)
    p['n2_mean'] = rnd(12, (dim,), 0.1)
    p['n2_var'] = jax.random.uniform(ks[13], (dim,), jnp.float32, 0.5, 1.5)
    # mlp (fc1: dim -> hidden, fc2: hidden -> dim, both with bias)
    p['fc1_w'] = rnd(14, (hidden, dim))
    p['fc1_b'] = rnd(15, (hidden,), 0.02)
    p['fc2_w'] = rnd(16, (dim, hidden))
    p['fc2_b'] = rnd(17, (dim,), 0.02)
    return p


def local_block_forward(params, x, *, ws, band_h=8):
    B, C, H, W = x.shape
    eps = 1e-5
    pad = (ws - 1) // 2
    # even ws => depthwise conv over the (H+1, W+1) reflect-padded image produces
    # exactly HxW, so the reference's [:H, :W] crop is a no-op.
    assert ws % 2 == 0 and (H + 1) + 2 * pad - ws + 1 == H, "fused path assumes even ws"

    bh = band_h if H % band_h == 0 else H       # row-band height (grid length lever)
    NB = H // bh
    Dh = params['fc1_w'].shape[0]

    # ---- fold all eval-mode BatchNorms into adjacent weights/biases (tiny XLA ops) ----
    s1 = params['n1_gamma'] / jnp.sqrt(params['n1_var'] + eps)
    t1 = params['n1_beta'] - params['n1_mean'] * s1

    sbn = params['bn_gamma'] / jnp.sqrt(params['bn_var'] + eps)
    shift = params['bn_beta'] - params['bn_mean'] * sbn
    dww = (params['dw_w'] * sbn[:, None, None]).transpose(2, 1, 0)   # (dx, dy, C)
    pww = params['pw_w'].T.astype(jnp.bfloat16)                      # (Cin, Cout)
    pwb = (params['pw_w'] @ shift).reshape(1, C)                     # folded BN shift

    s2 = params['n2_gamma'] / jnp.sqrt(params['n2_var'] + eps)
    t2 = params['n2_beta'] - params['n2_mean'] * s2
    w1 = params['fc1_w'].T                                           # (C, Dh)
    w1f = (s2[:, None] * w1).astype(jnp.bfloat16)
    b1f = (t2 @ w1 + params['fc1_b']).reshape(1, Dh)
    w2 = params['fc2_w'].T.astype(jnp.bfloat16)                      # (Dh, C)
    b2 = params['fc2_b'].reshape(1, C)

    # single NCHW -> NHWC transpose at the block boundary (hoist further if blocks stack)
    x_cl = x.transpose(0, 2, 3, 1)                                   # (B, H, W, C)

    # VMEM-budget guard: halo scratch + double-buffered image/band/weights per step.
    vmem_est = ((H + ws - 1) * (W + ws - 1) * C * 4          # halo scratch
                + 2 * H * W * C * 4                          # input image (revisited)
                + 2 * bh * W * C * 4                         # output band
                + 2 * (ws * ws * C * 4 + (C * C + C * Dh + Dh * C) * 2
                       + (4 * C + Dh) * 4))                  # weights / biases
    assert vmem_est < 24 * 1024 * 1024, (
        "per-step VMEM footprint too large for v7x; shrink band_h / C "
        "(TODO(synk): row-band halo construction for production spatial sizes)")

    kern = functools.partial(_local_block_kernel, ws=ws, bh=bh)

    def const_spec(shape):
        zero = (0,) * len(shape)
        return pl.BlockSpec(shape, lambda b, rb, _z=zero: _z)

    out = pl.pallas_call(
        kern,
        out_shape=jax.ShapeDtypeStruct((B, H, W, C), jnp.float32),
        grid_spec=pltpu.PrefetchScalarGridSpec(
            num_scalar_prefetch=0,
            grid=(B, NB),
            in_specs=[
                pl.BlockSpec((1, H, W, C), lambda b, rb: (b, 0, 0, 0)),  # DMA'd once per b
                const_spec((1, C)), const_spec((1, C)),                  # s1, t1
                const_spec((ws, ws, C)),                                 # depthwise w
                const_spec((C, C)), const_spec((1, C)),                  # pointwise w, bias
                const_spec((C, Dh)), const_spec((1, Dh)),                # fc1
                const_spec((Dh, C)), const_spec((1, C)),                 # fc2
            ],
            out_specs=pl.BlockSpec((1, bh, W, C), lambda b, rb: (b, rb, 0, 0)),
            scratch_shapes=[pltpu.VMEM((H + ws - 1, W + ws - 1, C), jnp.float32)],
        ),
        compiler_params=pltpu.CompilerParams(
            # batch axis sharded across TensorCores; band axis is sequential because
            # the halo scratch built at rb == 0 is reused by the later bands of that b.
            dimension_semantics=("parallel", "arbitrary")),
    )(x_cl, s1.reshape(1, C), t1.reshape(1, C), dww, pww, pwb, w1f, b1f, w2, b2)

    return out.transpose(0, 3, 1, 2)                                 # back to NCHW


# --------------------------------- main ----------------------------------------

if __name__ == "__main__":
    B, C, H, W = 2, 128, 16, 16     # dim=128 keeps the channel axis lane-dense
    ws = 8                          # LocalAttention window_size default
    hidden = int(C * 4.0)           # mlp_ratio = 4

    key = jax.random.PRNGKey(0)
    kx, kp = jax.random.split(key)
    x = jax.random.normal(kx, (B, C, H, W), jnp.float32)
    params = init_params(kp, C, ws, hidden)

    fwd = jax.jit(functools.partial(local_block_forward, ws=ws))
    out = fwd(params, x)
    jax.block_until_ready(out)

    assert out.shape == (B, C, H, W), out.shape
    assert bool(jnp.all(jnp.isfinite(out)))
    print("KERNEL_OK")
</pallas_src>

<mosaic_0001>
module attributes {stable_mosaic.version = 11 : i64} {
  func.func @_local_block_kernel(%arg0: i32, %arg1: i32, %arg2: memref<1x16x16x128xf32, #tpu.memory_space<vmem>>, %arg3: memref<1x128xf32, #tpu.memory_space<vmem>>, %arg4: memref<1x128xf32, #tpu.memory_space<vmem>>, %arg5: memref<8x8x128xf32, #tpu.memory_space<vmem>>, %arg6: memref<128x128xbf16, #tpu.memory_space<vmem>>, %arg7: memref<1x128xf32, #tpu.memory_space<vmem>>, %arg8: memref<128x512xbf16, #tpu.memory_space<vmem>>, %arg9: memref<1x512xf32, #tpu.memory_space<vmem>>, %arg10: memref<512x128xbf16, #tpu.memory_space<vmem>>, %arg11: memref<1x128xf32, #tpu.memory_space<vmem>>, %arg12: memref<1x8x16x128xf32, #tpu.memory_space<vmem>>, %arg13: memref<23x23x128xf32, #tpu.memory_space<vmem>>) attributes {dimension_semantics = [#tpu.dimension_semantics<parallel>, #tpu.dimension_semantics<arbitrary>], iteration_bounds = array<i64: 2, 2>, scalar_prefetch = 0 : i64, scratch_operands = 1 : i64, tpu.core_type = #tpu.core_type<tc>, window_params = [{transform_indices = @transform_0, window_bounds = array<i64: 1, 16, 16, 128>}, {pipeline_mode = #tpu.pipeline_mode<synchronous>, transform_indices = @transform_1, window_bounds = array<i64: 1, 128>}, {pipeline_mode = #tpu.pipeline_mode<synchronous>, transform_indices = @transform_2, window_bounds = array<i64: 1, 128>}, {pipeline_mode = #tpu.pipeline_mode<synchronous>, transform_indices = @transform_3, window_bounds = array<i64: 8, 8, 128>}, {pipeline_mode = #tpu.pipeline_mode<synchronous>, transform_indices = @transform_4, window_bounds = array<i64: 128, 128>}, {pipeline_mode = #tpu.pipeline_mode<synchronous>, transform_indices = @transform_5, window_bounds = array<i64: 1, 128>}, {pipeline_mode = #tpu.pipeline_mode<synchronous>, transform_indices = @transform_6, window_bounds = array<i64: 128, 512>}, {pipeline_mode = #tpu.pipeline_mode<synchronous>, transform_indices = @transform_7, window_bounds = array<i64: 1, 512>}, {pipeline_mode = #tpu.pipeline_mode<synchronous>, transform_indices = @transform_8, window_bounds = array<i64: 512, 128>}, {pipeline_mode = #tpu.pipeline_mode<synchronous>, transform_indices = @transform_9, window_bounds = array<i64: 1, 128>}, {transform_indices = @transform_10, window_bounds = array<i64: 1, 8, 16, 128>}]} {
    %c8_i32 = arith.constant 8 : i32
    %0 = arith.muli %arg1, %c8_i32 : i32
    %1 = tpu.assume_multiple %0, 8 : i32
    %c0_i32 = arith.constant 0 : i32
    %2 = arith.cmpi eq, %arg1, %c0_i32 : i32
    %3 = arith.extui %2 : i1 to i32
    %c0_i32_0 = arith.constant 0 : i32
    %4 = arith.cmpi ne, %3, %c0_i32_0 : i32
    scf.if %4 {
      %cst_57 = arith.constant 0.000000e+00 : f32
      %519 = vector.broadcast %cst_57 : f32 to vector<23x23x128xf32>
      %c0_58 = arith.constant 0 : index
      %c0_59 = arith.constant 0 : index
      %c0_60 = arith.constant 0 : index
      %520 = vector.load %arg13[%c0_58, %c0_59, %c0_60] : memref<23x23x128xf32, #tpu.memory_space<vmem>>, vector<23x23x128xf32>
      tpu.vector_store %arg13[%c0_58, %c0_59, %c0_60], %519 {strides = array<i32>} : memref<23x23x128xf32, #tpu.memory_space<vmem>>, vector<23x23x128xf32>,
      %c0_61 = arith.constant 0 : index
      %c0_62 = arith.constant 0 : index
      %c0_63 = arith.constant 0 : index
      %c0_64 = arith.constant 0 : index
      %521 = vector.load %arg2[%c0_61, %c0_62, %c0_63, %c0_64] : memref<1x16x16x128xf32, #tpu.memory_space<vmem>>, vector<1x16x16x128xf32>
      %522 = vector.shape_cast %521 : vector<1x16x16x128xf32> to vector<16x16x128xf32>
      %c0_65 = arith.constant 0 : index
      %c0_66 = arith.constant 0 : index
      %523 = vector.load %arg3[%c0_65, %c0_66] : memref<1x128xf32, #tpu.memory_space<vmem>>, vector<1x128xf32>
      %524 = vector.shape_cast %523 : vector<1x128xf32> to vector<128xf32>
      %525 = vector.shape_cast %524 : vector<128xf32> to vector<1x1x128xf32>
      %526 = vector.broadcast %525 : vector<1x1x128xf32> to vector<16x16x128xf32>
      %527 = arith.mulf %522, %526 : vector<16x16x128xf32>
      %c0_67 = arith.constant 0 : index
      %c0_68 = arith.constant 0 : index
      %528 = vector.load %arg4[%c0_67, %c0_68] : memref<1x128xf32, #tpu.memory_space<vmem>>, vector<1x128xf32>
      %529 = vector.shape_cast %528 : vector<1x128xf32> to vector<128xf32>
      %530 = vector.shape_cast %529 : vector<128xf32> to vector<1x1x128xf32>
      %531 = vector.broadcast %530 : vector<1x1x128xf32> to vector<16x16x128xf32>
      %532 = arith.addf %527, %531 : vector<16x16x128xf32>
      %c3_69 = arith.constant 3 : index
      %c3_70 = arith.constant 3 : index
      %c0_71 = arith.constant 0 : index
      %533 = vector.load %arg13[%c3_69, %c3_70, %c0_71] : memref<23x23x128xf32, #tpu.memory_space<vmem>>, vector<16x16x128xf32>
      tpu.vector_store %arg13[%c3_69, %c3_70, %c0_71], %532 {strides = array<i32>} : memref<23x23x128xf32, #tpu.memory_space<vmem>>, vector<16x16x128xf32>,
      %c17 = arith.constant 17 : index
      %c3_72 = arith.constant 3 : index
      %c0_73 = arith.constant 0 : index
      %534 = vector.load %arg13[%c17, %c3_72, %c0_73] : memref<23x23x128xf32, #tpu.memory_space<vmem>>, vector<1x16x128xf32>
      %c19 = arith.constant 19 : index
      %c3_74 = arith.constant 3 : index
      %c0_75 = arith.constant 0 : index
      %535 = vector.load %arg13[%c19, %c3_74, %c0_75] : memref<23x23x128xf32, #tpu.memory_space<vmem>>, vector<1x16x128xf32>
      tpu.vector_store %arg13[%c19, %c3_74, %c0_75], %534 {strides = array<i32>} : memref<23x23x128xf32, #tpu.memory_space<vmem>>, vector<1x16x128xf32>,
      %c3_76 = arith.constant 3 : index
      %c17_77 = arith.constant 17 : index
      %c0_78 = arith.constant 0 : index
      %536 = vector.load %arg13[%c3_76, %c17_77, %c0_78] : memref<23x23x128xf32, #tpu.memory_space<vmem>>, vector<17x1x128xf32>
      %c3_79 = arith.constant 3 : index
      %c19_80 = arith.constant 19 : index
      %c0_81 = arith.constant 0 : index
      %537 = vector.load %arg13[%c3_79, %c19_80, %c0_81] : memref<23x23x128xf32, #tpu.memory_space<vmem>>, vector<17x1x128xf32>
      tpu.vector_store %arg13[%c3_79, %c19_80, %c0_81], %536 {strides = array<i32>} : memref<23x23x128xf32, #tpu.memory_space<vmem>>, vector<17x1x128xf32>,
    } else {
    }
    %cst = arith.constant 0.000000e+00 : f32
    %5 = vector.broadcast %cst : f32 to vector<8x16x128xf32>
    %6 = arith.index_cast %1 : i32 to index
    %c0 = arith.constant 0 : index
    %c0_1 = arith.constant 0 : index
    %7 = vector.load %arg13[%6, %c0, %c0_1] : memref<23x23x128xf32, #tpu.memory_space<vmem>>, vector<15x16x128xf32>
    %c0_2 = arith.constant 0 : index
    %c0_3 = arith.constant 0 : index
    %c0_4 = arith.constant 0 : index
    %8 = vector.load %arg5[%c0_2, %c0_3, %c0_4] : memref<8x8x128xf32, #tpu.memory_space<vmem>>, vector<1x8x128xf32>
    %9 = vector.shape_cast %8 : vector<1x8x128xf32> to vector<8x128xf32>
    %10 = vector.extract_strided_slice %7 {offsets = [0, 0, 0], sizes = [8, 16, 128], strides = [1, 1, 1]} : vector<15x16x128xf32> to vector<8x16x128xf32>
    %11 = vector.extract_strided_slice %9 {offsets = [0, 0], sizes = [1, 128], strides = [1, 1]} : vector<8x128xf32> to vector<1x128xf32>
    %12 = vector.shape_cast %11 : vector<1x128xf32> to vector<128xf32>
    %13 = vector.shape_cast %12 : vector<128xf32> to vector<1x1x128xf32>
    %14 = vector.broadcast %13 : vector<1x1x128xf32> to vector<8x16x128xf32>
    %15 = arith.mulf %10, %14 : vector<8x16x128xf32>
    %16 = arith.addf %5, %15 : vector<8x16x128xf32>
    %17 = vector.extract_strided_slice %7 {offsets = [1, 0, 0], sizes = [8, 16, 128], strides = [1, 1, 1]} : vector<15x16x128xf32> to vector<8x16x128xf32>
    %18 = vector.extract_strided_slice %9 {offsets = [1, 0], sizes = [1, 128], strides = [1, 1]} : vector<8x128xf32> to vector<1x128xf32>
    %19 = vector.shape_cast %18 : vector<1x128xf32> to vector<128xf32>
    %20 = vector.shape_cast %19 : vector<128xf32> to vector<1x1x128xf32>
    %21 = vector.broadcast %20 : vector<1x1x128xf32> to vector<8x16x128xf32>
    %22 = arith.mulf %17, %21 : vector<8x16x128xf32>
    %23 = arith.addf %16, %22 : vector<8x16x128xf32>
    %24 = vector.extract_strided_slice %7 {offsets = [2, 0, 0], sizes = [8, 16, 128], strides = [1, 1, 1]} : vector<15x16x128xf32> to vector<8x16x128xf32>
    %25 = vector.extract_strided_slice %9 {offsets = [2, 0], sizes = [1, 128], strides = [1, 1]} : vector<8x128xf32> to vector<1x128xf32>
    %26 = vector.shape_cast %25 : vector<1x128xf32> to vector<128xf32>
    %27 = vector.shape_cast %26 : vector<128xf32> to vector<1x1x128xf32>
    %28 = vector.broadcast %27 : vector<1x1x128xf32> to vector<8x16x128xf32>
    %29 = arith.mulf %24, %28 : vector<8x16x128xf32>
    %30 = arith.addf %23, %29 : vector<8x16x128xf32>
    %31 = vector.extract_strided_slice %7 {offsets = [3, 0, 0], sizes = [8, 16, 128], strides = [1, 1, 1]} : vector<15x16x128xf32> to vector<8x16x128xf32>
    %32 = vector.extract_strided_slice %9 {offsets = [3, 0], sizes = [1, 128], strides = [1, 1]} : vector<8x128xf32> to vector<1x128xf32>
    %33 = vector.shape_cast %32 : vector<1x128xf32> to vector<128xf32>
    %34 = vector.shape_cast %33 : vector<128xf32> to vector<1x1x128xf32>
    %35 = vector.broadcast %34 : vector<1x1x128xf32> to vector<8x16x128xf32>
    %36 = arith.mulf %31, %35 : vector<8x16x128xf32>
    %37 = arith.addf %30, %36 : vector<8x16x128xf32>
    %38 = vector.extract_strided_slice %7 {offsets = [4, 0, 0], sizes = [8, 16, 128], strides = [1, 1, 1]} : vector<15x16x128xf32> to vector<8x16x128xf32>
    %39 = vector.extract_strided_slice %9 {offsets = [4, 0], sizes = [1, 128], strides = [1, 1]} : vector<8x128xf32> to vector<1x128xf32>
    %40 = vector.shape_cast %39 : vector<1x128xf32> to vector<128xf32>
    %41 = vector.shape_cast %40 : vector<128xf32> to vector<1x1x128xf32>
    %42 = vector.broadcast %41 : vector<1x1x128xf32> to vector<8x16x128xf32>
    %43 = arith.mulf %38, %42 : vector<8x16x128xf32>
    %44 = arith.addf %37, %43 : vector<8x16x128xf32>
    %45 = vector.extract_strided_slice %7 {offsets = [5, 0, 0], sizes = [8, 16, 128], strides = [1, 1, 1]} : vector<15x16x128xf32> to vector<8x16x128xf32>
    %46 = vector.extract_strided_slice %9 {offsets = [5, 0], sizes = [1, 128], strides = [1, 1]} : vector<8x128xf32> to vector<1x128xf32>
    %47 = vector.shape_cast %46 : vector<1x128xf32> to vector<128xf32>
    %48 = vector.shape_cast %47 : vector<128xf32> to vector<1x1x128xf32>
    %49 = vector.broadcast %48 : vector<1x1x128xf32> to vector<8x16x128xf32>
    %50 = arith.mulf %45, %49 : vector<8x16x128xf32>
    %51 = arith.addf %44, %50 : vector<8x16x128xf32>
    %52 = vector.extract_strided_slice %7 {offsets = [6, 0, 0], sizes = [8, 16, 128], strides = [1, 1, 1]} : vector<15x16x128xf32> to vector<8x16x128xf32>
    %53 = vector.extract_strided_slice %9 {offsets = [6, 0], sizes = [1, 128], strides = [1, 1]} : vector<8x128xf32> to vector<1x128xf32>
    %54 = vector.shape_cast %53 : vector<1x128xf32> to vector<128xf32>
    %55 = vector.shape_cast %54 : vector<128xf32> to vector<1x1x128xf32>
    %56 = vector.broadcast %55 : vector<1x1x128xf32> to vector<8x16x128xf32>
    %57 = arith.mulf %52, %56 : vector<8x16x128xf32>
    %58 = arith.addf %51, %57 : vector<8x16x128xf32>
    %59 = vector.extract_strided_slice %7 {offsets = [7, 0, 0], sizes = [8, 16, 128], strides = [1, 1, 1]} : vector<15x16x128xf32> to vector<8x16x128xf32>
    %60 = vector.extract_strided_slice %9 {offsets = [7, 0], sizes = [1, 128], strides = [1, 1]} : vector<8x128xf32> to vector<1x128xf32>
    %61 = vector.shape_cast %60 : vector<1x128xf32> to vector<128xf32>
    %62 = vector.shape_cast %61 : vector<128xf32> to vector<1x1x128xf32>
    %63 = vector.broadcast %62 : vector<1x1x128xf32> to vector<8x16x128xf32>
    %64 = arith.mulf %59, %63 : vector<8x16x128xf32>
    %65 = arith.addf %58, %64 : vector<8x16x128xf32>
    %66 = arith.index_cast %1 : i32 to index
    %c1 = arith.constant 1 : index
    %c0_5 = arith.constant 0 : index
    %67 = vector.load %arg13[%66, %c1, %c0_5] : memref<23x23x128xf32, #tpu.memory_space<vmem>>, vector<15x16x128xf32>
    %c1_6 = arith.constant 1 : index
    %c0_7 = arith.constant 0 : index
    %c0_8 = arith.constant 0 : index
    %68 = vector.load %arg5[%c1_6, %c0_7, %c0_8] : memref<8x8x128xf32, #tpu.memory_space<vmem>>, vector<1x8x128xf32>
    %69 = vector.shape_cast %68 : vector<1x8x128xf32> to vector<8x128xf32>
    %70 = vector.extract_strided_slice %67 {offsets = [0, 0, 0], sizes = [8, 16, 128], strides = [1, 1, 1]} : vector<15x16x128xf32> to vector<8x16x128xf32>
    %71 = vector.extract_strided_slice %69 {offsets = [0, 0], sizes = [1, 128], strides = [1, 1]} : vector<8x128xf32> to vector<1x128xf32>
    %72 = vector.shape_cast %71 : vector<1x128xf32> to vector<128xf32>
    %73 = vector.shape_cast %72 : vector<128xf32> to vector<1x1x128xf32>
    %74 = vector.broadcast %73 : vector<1x1x128xf32> to vector<8x16x128xf32>
    %75 = arith.mulf %70, %74 : vector<8x16x128xf32>
    %76 = arith.addf %65, %75 : vector<8x16x128xf32>
    %77 = vector.extract_strided_slice %67 {offsets = [1, 0, 0], sizes = [8, 16, 128], strides = [1, 1, 1]} : vector<15x16x128xf32> to vector<8x16x128xf32>
    %78 = vector.extract_strided_slice %69 {offsets = [1, 0], sizes = [1, 128], strides = [1, 1]} : vector<8x128xf32> to vector<1x128xf32>
    %79 = vector.shape_cast %78 : vector<1x128xf32> to vector<128xf32>
    %80 = vector.shape_cast %79 : vector<128xf32> to vector<1x1x128xf32>
    %81 = vector.broadcast %80 : vector<1x1x128xf32> to vector<8x16x128xf32>
    %82 = arith.mulf %77, %81 : vector<8x16x128xf32>
    %83 = arith.addf %76, %82 : vector<8x16x128xf32>
    %84 = vector.extract_strided_slice %67 {offsets = [2, 0, 0], sizes = [8, 16, 128], strides = [1, 1, 1]} : vector<15x16x128xf32> to vector<8x16x128xf32>
    %85 = vector.extract_strided_slice %69 {offsets = [2, 0], sizes = [1, 128], strides = [1, 1]} : vector<8x128xf32> to vector<1x128xf32>
    %86 = vector.shape_cast %85 : vector<1x128xf32> to vector<128xf32>
    %87 = vector.shape_cast %86 : vector<128xf32> to vector<1x1x128xf32>
    %88 = vector.broadcast %87 : vector<1x1x128xf32> to vector<8x16x128xf32>
    %89 = arith.mulf %84, %88 : vector<8x16x128xf32>
    %90 = arith.addf %83, %89 : vector<8x16x128xf32>
    %91 = vector.extract_strided_slice %67 {offsets = [3, 0, 0], sizes = [8, 16, 128], strides = [1, 1, 1]} : vector<15x16x128xf32> to vector<8x16x128xf32>
    %92 = vector.extract_strided_slice %69 {offsets = [3, 0], sizes = [1, 128], strides = [1, 1]} : vector<8x128xf32> to vector<1x128xf32>
    %93 = vector.shape_cast %92 : vector<1x128xf32> to vector<128xf32>
    %94 = vector.shape_cast %93 : vector<128xf32> to vector<1x1x128xf32>
    %95 = vector.broadcast %94 : vector<1x1x128xf32> to vector<8x16x128xf32>
    %96 = arith.mulf %91, %95 : vector<8x16x128xf32>
    %97 = arith.addf %90, %96 : vector<8x16x128xf32>
    %98 = vector.extract_strided_slice %67 {offsets = [4, 0, 0], sizes = [8, 16, 128], strides = [1, 1, 1]} : vector<15x16x128xf32> to vector<8x16x128xf32>
    %99 = vector.extract_strided_slice %69 {offsets = [4, 0], sizes = [1, 128], strides = [1, 1]} : vector<8x128xf32> to vector<1x128xf32>
    %100 = vector.shape_cast %99 : vector<1x128xf32> to vector<128xf32>
    %101 = vector.shape_cast %100 : vector<128xf32> to vector<1x1x128xf32>
    %102 = vector.broadcast %101 : vector<1x1x128xf32> to vector<8x16x128xf32>
    %103 = arith.mulf %98, %102 : vector<8x16x128xf32>
    %104 = arith.addf %97, %103 : vector<8x16x128xf32>
    %105 = vector.extract_strided_slice %67 {offsets = [5, 0, 0], sizes = [8, 16, 128], strides = [1, 1, 1]} : vector<15x16x128xf32> to vector<8x16x128xf32>
    %106 = vector.extract_strided_slice %69 {offsets = [5, 0], sizes = [1, 128], strides = [1, 1]} : vector<8x128xf32> to vector<1x128xf32>
    %107 = vector.shape_cast %106 : vector<1x128xf32> to vector<128xf32>
    %108 = vector.shape_cast %107 : vector<128xf32> to vector<1x1x128xf32>
    %109 = vector.broadcast %108 : vector<1x1x128xf32> to vector<8x16x128xf32>
    %110 = arith.mulf %105, %109 : vector<8x16x128xf32>
    %111 = arith.addf %104, %110 : vector<8x16x128xf32>
    %112 = vector.extract_strided_slice %67 {offsets = [6, 0, 0], sizes = [8, 16, 128], strides = [1, 1, 1]} : vector<15x16x128xf32> to vector<8x16x128xf32>
    %113 = vector.extract_strided_slice %69 {offsets = [6, 0], sizes = [1, 128], strides = [1, 1]} : vector<8x128xf32> to vector<1x128xf32>
    %114 = vector.shape_cast %113 : vector<1x128xf32> to vector<128xf32>
    %115 = vector.shape_cast %114 : vector<128xf32> to vector<1x1x128xf32>
    %116 = vector.broadcast %115 : vector<1x1x128xf32> to vector<8x16x128xf32>
    %117 = arith.mulf %112, %116 : vector<8x16x128xf32>
    %118 = arith.addf %111, %117 : vector<8x16x128xf32>
    %119 = vector.extract_strided_slice %67 {offsets = [7, 0, 0], sizes = [8, 16, 128], strides = [1, 1, 1]} : vector<15x16x128xf32> to vector<8x16x128xf32>
    %120 = vector.extract_strided_slice %69 {offsets = [7, 0], sizes = [1, 128], strides = [1, 1]} : vector<8x128xf32> to vector<1x128xf32>
    %121 = vector.shape_cast %120 : vector<1x128xf32> to vector<128xf32>
    %122 = vector.shape_cast %121 : vector<128xf32> to vector<1x1x128xf32>
    %123 = vector.broadcast %122 : vector<1x1x128xf32> to vector<8x16x128xf32>
    %124 = arith.mulf %119, %123 : vector<8x16x128xf32>
    %125 = arith.addf %118, %124 : vector<8x16x128xf32>
    %126 = arith.index_cast %1 : i32 to index
    %c2 = arith.constant 2 : index
    %c0_9 = arith.constant 0 : index
    %127 = vector.load %arg13[%126, %c2, %c0_9] : memref<23x23x128xf32, #tpu.memory_space<vmem>>, vector<15x16x128xf32>
    %c2_10 = arith.constant 2 : index
    %c0_11 = arith.constant 0 : index
    %c0_12 = arith.constant 0 : index
    %128 = vector.load %arg5[%c2_10, %c0_11, %c0_12] : memref<8x8x128xf32, #tpu.memory_space<vmem>>, vector<1x8x128xf32>
    %129 = vector.shape_cast %128 : vector<1x8x128xf32> to vector<8x128xf32>
    %130 = vector.extract_strided_slice %127 {offsets = [0, 0, 0], sizes = [8, 16, 128], strides = [1, 1, 1]} : vector<15x16x128xf32> to vector<8x16x128xf32>
    %131 = vector.extract_strided_slice %129 {offsets = [0, 0], sizes = [1, 128], strides = [1, 1]} : vector<8x128xf32> to vector<1x128xf32>
    %132 = vector.shape_cast %131 : vector<1x128xf32> to vector<128xf32>
    %133 = vector.shape_cast %132 : vector<128xf32> to vector<1x1x128xf32>
    %134 = vector.broadcast %133 : vector<1x1x128xf32> to vector<8x16x128xf32>
    %135 = arith.mulf %130, %134 : vector<8x16x128xf32>
    %136 = arith.addf %125, %135 : vector<8x16x128xf32>
    %137 = vector.extract_strided_slice %127 {offsets = [1, 0, 0], sizes = [8, 16, 128], strides = [1, 1, 1]} : vector<15x16x128xf32> to vector<8x16x128xf32>
    %138 = vector.extract_strided_slice %129 {offsets = [1, 0], sizes = [1, 128], strides = [1, 1]} : vector<8x128xf32> to vector<1x128xf32>
    %139 = vector.shape_cast %138 : vector<1x128xf32> to vector<128xf32>
    %140 = vector.shape_cast %139 : vector<128xf32> to vector<1x1x128xf32>
    %141 = vector.broadcast %140 : vector<1x1x128xf32> to vector<8x16x128xf32>
    %142 = arith.mulf %137, %141 : vector<8x16x128xf32>
    %143 = arith.addf %136, %142 : vector<8x16x128xf32>
    %144 = vector.extract_strided_slice %127 {offsets = [2, 0, 0], sizes = [8, 16, 128], strides = [1, 1, 1]} : vector<15x16x128xf32> to vector<8x16x128xf32>
    %145 = vector.extract_strided_slice %129 {offsets = [2, 0], sizes = [1, 128], strides = [1, 1]} : vector<8x128xf32> to vector<1x128xf32>
    %146 = vector.shape_cast %145 : vector<1x128xf32> to vector<128xf32>
    %147 = vector.shape_cast %146 : vector<128xf32> to vector<1x1x128xf32>
    %148 = vector.broadcast %147 : vector<1x1x128xf32> to vector<8x16x128xf32>
    %149 = arith.mulf %144, %148 : vector<8x16x128xf32>
    %150 = arith.addf %143, %149 : vector<8x16x128xf32>
    %151 = vector.extract_strided_slice %127 {offsets = [3, 0, 0], sizes = [8, 16, 128], strides = [1, 1, 1]} : vector<15x16x128xf32> to vector<8x16x128xf32>
    %152 = vector.extract_strided_slice %129 {offsets = [3, 0], sizes = [1, 128], strides = [1, 1]} : vector<8x128xf32> to vector<1x128xf32>
    %153 = vector.shape_cast %152 : vector<1x128xf32> to vector<128xf32>
    %154 = vector.shape_cast %153 : vector<128xf32> to vector<1x1x128xf32>
    %155 = vector.broadcast %154 : vector<1x1x128xf32> to vector<8x16x128xf32>
    %156 = arith.mulf %151, %155 : vector<8x16x128xf32>
    %157 = arith.addf %150, %156 : vector<8x16x128xf32>
    %158 = vector.extract_strided_slice %127 {offsets = [4, 0, 0], sizes = [8, 16, 128], strides = [1, 1, 1]} : vector<15x16x128xf32> to vector<8x16x128xf32>
    %159 = vector.extract_strided_slice %129 {offsets = [4, 0], sizes = [1, 128], strides = [1, 1]} : vector<8x128xf32> to vector<1x128xf32>
    %160 = vector.shape_cast %159 : vector<1x128xf32> to vector<128xf32>
    %161 = vector.shape_cast %160 : vector<128xf32> to vector<1x1x128xf32>
    %162 = vector.broadcast %161 : vector<1x1x128xf32> to vector<8x16x128xf32>
    %163 = arith.mulf %158, %162 : vector<8x16x128xf32>
    %164 = arith.addf %157, %163 : vector<8x16x128xf32>
    %165 = vector.extract_strided_slice %127 {offsets = [5, 0, 0], sizes = [8, 16, 128], strides = [1, 1, 1]} : vector<15x16x128xf32> to vector<8x16x128xf32>
    %166 = vector.extract_strided_slice %129 {offsets = [5, 0], sizes = [1, 128], strides = [1, 1]} : vector<8x128xf32> to vector<1x128xf32>
    %167 = vector.shape_cast %166 : vector<1x128xf32> to vector<128xf32>
    %168 = vector.shape_cast %167 : vector<128xf32> to vector<1x1x128xf32>
    %169 = vector.broadcast %168 : vector<1x1x128xf32> to vector<8x16x128xf32>
    %170 = arith.mulf %165, %169 : vector<8x16x128xf32>
    %171 = arith.addf %164, %170 : vector<8x16x128xf32>
    %172 = vector.extract_strided_slice %127 {offsets = [6, 0, 0], sizes = [8, 16, 128], strides = [1, 1, 1]} : vector<15x16x128xf32> to vector<8x16x128xf32>
    %173 = vector.extract_strided_slice %129 {offsets = [6, 0], sizes = [1, 128], strides = [1, 1]} : vector<8x128xf32> to vector<1x128xf32>
    %174 = vector.shape_cast %173 : vector<1x128xf32> to vector<128xf32>
    %175 = vector.shape_cast %174 : vector<128xf32> to vector<1x1x128xf32>
    %176 = vector.broadcast %175 : vector<1x1x128xf32> to vector<8x16x128xf32>
    %177 = arith.mulf %172, %176 : vector<8x16x128xf32>
    %178 = arith.addf %171, %177 : vector<8x16x128xf32>
    %179 = vector.extract_strided_slice %127 {offsets = [7, 0, 0], sizes = [8, 16, 128], strides = [1, 1, 1]} : vector<15x16x128xf32> to vector<8x16x128xf32>
    %180 = vector.extract_strided_slice %129 {offsets = [7, 0], sizes = [1, 128], strides = [1, 1]} : vector<8x128xf32> to vector<1x128xf32>
    %181 = vector.shape_cast %180 : vector<1x128xf32> to vector<128xf32>
    %182 = vector.shape_cast %181 : vector<128xf32> to vector<1x1x128xf32>
    %183 = vector.broadcast %182 : vector<1x1x128xf32> to vector<8x16x128xf32>
    %184 = arith.mulf %179, %183 : vector<8x16x128xf32>
    %185 = arith.addf %178, %184 : vector<8x16x128xf32>
    %186 = arith.index_cast %1 : i32 to index
    %c3 = arith.constant 3 : index
    %c0_13 = arith.constant 0 : index
    %187 = vector.load %arg13[%186, %c3, %c0_13] : memref<23x23x128xf32, #tpu.memory_space<vmem>>, vector<15x16x128xf32>
    %c3_14 = arith.constant 3 : index
    %c0_15 = arith.constant 0 : index
    %c0_16 = arith.constant 0 : index
    %188 = vector.load %arg5[%c3_14, %c0_15, %c0_16] : memref<8x8x128xf32, #tpu.memory_space<vmem>>, vector<1x8x128xf32>
    %189 = vector.shape_cast %188 : vector<1x8x128xf32> to vector<8x128xf32>
    %190 = vector.extract_strided_slice %187 {offsets = [0, 0, 0], sizes = [8, 16, 128], strides = [1, 1, 1]} : vector<15x16x128xf32> to vector<8x16x128xf32>
    %191 = vector.extract_strided_slice %189 {offsets = [0, 0], sizes = [1, 128], strides = [1, 1]} : vector<8x128xf32> to vector<1x128xf32>
    %192 = vector.shape_cast %191 : vector<1x128xf32> to vector<128xf32>
    %193 = vector.shape_cast %192 : vector<128xf32> to vector<1x1x128xf32>
    %194 = vector.broadcast %193 : vector<1x1x128xf32> to vector<8x16x128xf32>
    %195 = arith.mulf %190, %194 : vector<8x16x128xf32>
    %196 = arith.addf %185, %195 : vector<8x16x128xf32>
    %197 = vector.extract_strided_slice %187 {offsets = [1, 0, 0], sizes = [8, 16, 128], strides = [1, 1, 1]} : vector<15x16x128xf32> to vector<8x16x128xf32>
    %198 = vector.extract_strided_slice %189 {offsets = [1, 0], sizes = [1, 128], strides = [1, 1]} : vector<8x128xf32> to vector<1x128xf32>
    %199 = vector.shape_cast %198 : vector<1x128xf32> to vector<128xf32>
    %200 = vector.shape_cast %199 : vector<128xf32> to vector<1x1x128xf32>
    %201 = vector.broadcast %200 : vector<1x1x128xf32> to vector<8x16x128xf32>
    %202 = arith.mulf %197, %201 : vector<8x16x128xf32>
    %203 = arith.addf %196, %202 : vector<8x16x128xf32>
    %204 = vector.extract_strided_slice %187 {offsets = [2, 0, 0], sizes = [8, 16, 128], strides = [1, 1, 1]} : vector<15x16x128xf32> to vector<8x16x128xf32>
    %205 = vector.extract_strided_slice %189 {offsets = [2, 0], sizes = [1, 128], strides = [1, 1]} : vector<8x128xf32> to vector<1x128xf32>
    %206 = vector.shape_cast %205 : vector<1x128xf32> to vector<128xf32>
    %207 = vector.shape_cast %206 : vector<128xf32> to vector<1x1x128xf32>
    %208 = vector.broadcast %207 : vector<1x1x128xf32> to vector<8x16x128xf32>
    %209 = arith.mulf %204, %208 : vector<8x16x128xf32>
    %210 = arith.addf %203, %209 : vector<8x16x128xf32>
    %211 = vector.extract_strided_slice %187 {offsets = [3, 0, 0], sizes = [8, 16, 128], strides = [1, 1, 1]} : vector<15x16x128xf32> to vector<8x16x128xf32>
    %212 = vector.extract_strided_slice %189 {offsets = [3, 0], sizes = [1, 128], strides = [1, 1]} : vector<8x128xf32> to vector<1x128xf32>
    %213 = vector.shape_cast %212 : vector<1x128xf32> to vector<128xf32>
    %214 = vector.shape_cast %213 : vector<128xf32> to vector<1x1x128xf32>
    %215 = vector.broadcast %214 : vector<1x1x128xf32> to vector<8x16x128xf32>
    %216 = arith.mulf %211, %215 : vector<8x16x128xf32>
    %217 = arith.addf %210, %216 : vector<8x16x128xf32>
    %218 = vector.extract_strided_slice %187 {offsets = [4, 0, 0], sizes = [8, 16, 128], strides = [1, 1, 1]} : vector<15x16x128xf32> to vector<8x16x128xf32>
    %219 = vector.extract_strided_slice %189 {offsets = [4, 0], sizes = [1, 128], strides = [1, 1]} : vector<8x128xf32> to vector<1x128xf32>
    %220 = vector.shape_cast %219 : vector<1x128xf32> to vector<128xf32>
    %221 = vector.shape_cast %220 : vector<128xf32> to vector<1x1x128xf32>
    %222 = vector.broadcast %221 : vector<1x1x128xf32> to vector<8x16x128xf32>
    %223 = arith.mulf %218, %222 : vector<8x16x128xf32>
    %224 = arith.addf %217, %223 : vector<8x16x128xf32>
    %225 = vector.extract_strided_slice %187 {offsets = [5, 0, 0], sizes = [8, 16, 128], strides = [1, 1, 1]} : vector<15x16x128xf32> to vector<8x16x128xf32>
    %226 = vector.extract_strided_slice %189 {offsets = [5, 0], sizes = [1, 128], strides = [1, 1]} : vector<8x128xf32> to vector<1x128xf32>
    %227 = vector.shape_cast %226 : vector<1x128xf32> to vector<128xf32>
    %228 = vector.shape_cast %227 : vector<128xf32> to vector<1x1x128xf32>
    %229 = vector.broadcast %228 : vector<1x1x128xf32> to vector<8x16x128xf32>
    %230 = arith.mulf %225, %229 : vector<8x16x128xf32>
    %231 = arith.addf %224, %230 : vector<8x16x128xf32>
    %232 = vector.extract_strided_slice %187 {offsets = [6, 0, 0], sizes = [8, 16, 128], strides = [1, 1, 1]} : vector<15x16x128xf32> to vector<8x16x128xf32>
    %233 = vector.extract_strided_slice %189 {offsets = [6, 0], sizes = [1, 128], strides = [1, 1]} : vector<8x128xf32> to vector<1x128xf32>
    %234 = vector.shape_cast %233 : vector<1x128xf32> to vector<128xf32>
    %235 = vector.shape_cast %234 : vector<128xf32> to vector<1x1x128xf32>
    %236 = vector.broadcast %235 : vector<1x1x128xf32> to vector<8x16x128xf32>
    %237 = arith.mulf %232, %236 : vector<8x16x128xf32>
    %238 = arith.addf %231, %237 : vector<8x16x128xf32>
    %239 = vector.extract_strided_slice %187 {offsets = [7, 0, 0], sizes = [8, 16, 128], strides = [1, 1, 1]} : vector<15x16x128xf32> to vector<8x16x128xf32>
    %240 = vector.extract_strided_slice %189 {offsets = [7, 0], sizes = [1, 128], strides = [1, 1]} : vector<8x128xf32> to vector<1x128xf32>
    %241 = vector.shape_cast %240 : vector<1x128xf32> to vector<128xf32>
    %242 = vector.shape_cast %241 : vector<128xf32> to vector<1x1x128xf32>
    %243 = vector.broadcast %242 : vector<1x1x128xf32> to vector<8x16x128xf32>
    %244 = arith.mulf %239, %243 : vector<8x16x128xf32>
    %245 = arith.addf %238, %244 : vector<8x16x128xf32>
    %246 = arith.index_cast %1 : i32 to index
    %c4 = arith.constant 4 : index
    %c0_17 = arith.constant 0 : index
    %247 = vector.load %arg13[%246, %c4, %c0_17] : memref<23x23x128xf32, #tpu.memory_space<vmem>>, vector<15x16x128xf32>
    %c4_18 = arith.constant 4 : index
    %c0_19 = arith.constant 0 : index
    %c0_20 = arith.constant 0 : index
    %248 = vector.load %arg5[%c4_18, %c0_19, %c0_20] : memref<8x8x128xf32, #tpu.memory_space<vmem>>, vector<1x8x128xf32>
    %249 = vector.shape_cast %248 : vector<1x8x128xf32> to vector<8x128xf32>
    %250 = vector.extract_strided_slice %247 {offsets = [0, 0, 0], sizes = [8, 16, 128], strides = [1, 1, 1]} : vector<15x16x128xf32> to vector<8x16x128xf32>
    %251 = vector.extract_strided_slice %249 {offsets = [0, 0], sizes = [1, 128], strides = [1, 1]} : vector<8x128xf32> to vector<1x128xf32>
    %252 = vector.shape_cast %251 : vector<1x128xf32> to vector<128xf32>
    %253 = vector.shape_cast %252 : vector<128xf32> to vector<1x1x128xf32>
    %254 = vector.broadcast %253 : vector<1x1x128xf32> to vector<8x16x128xf32>
    %255 = arith.mulf %250, %254 : vector<8x16x128xf32>
    %256 = arith.addf %245, %255 : vector<8x16x128xf32>
    %257 = vector.extract_strided_slice %247 {offsets = [1, 0, 0], sizes = [8, 16, 128], strides = [1, 1, 1]} : vector<15x16x128xf32> to vector<8x16x128xf32>
    %258 = vector.extract_strided_slice %249 {offsets = [1, 0], sizes = [1, 128], strides = [1, 1]} : vector<8x128xf32> to vector<1x128xf32>
    %259 = vector.shape_cast %258 : vector<1x128xf32> to vector<128xf32>
    %260 = vector.shape_cast %259 : vector<128xf32> to vector<1x1x128xf32>
    %261 = vector.broadcast %260 : vector<1x1x128xf32> to vector<8x16x128xf32>
    %262 = arith.mulf %257, %261 : vector<8x16x128xf32>
    %263 = arith.addf %256, %262 : vector<8x16x128xf32>
    %264 = vector.extract_strided_slice %247 {offsets = [2, 0, 0], sizes = [8, 16, 128], strides = [1, 1, 1]} : vector<15x16x128xf32> to vector<8x16x128xf32>
    %265 = vector.extract_strided_slice %249 {offsets = [2, 0], sizes = [1, 128], strides = [1, 1]} : vector<8x128xf32> to vector<1x128xf32>
    %266 = vector.shape_cast %265 : vector<1x128xf32> to vector<128xf32>
    %267 = vector.shape_cast %266 : vector<128xf32> to vector<1x1x128xf32>
    %268 = vector.broadcast %267 : vector<1x1x128xf32> to vector<8x16x128xf32>
    %269 = arith.mulf %264, %268 : vector<8x16x128xf32>
    %270 = arith.addf %263, %269 : vector<8x16x128xf32>
    %271 = vector.extract_strided_slice %247 {offsets = [3, 0, 0], sizes = [8, 16, 128], strides = [1, 1, 1]} : vector<15x16x128xf32> to vector<8x16x128xf32>
    %272 = vector.extract_strided_slice %249 {offsets = [3, 0], sizes = [1, 128], strides = [1, 1]} : vector<8x128xf32> to vector<1x128xf32>
    %273 = vector.shape_cast %272 : vector<1x128xf32> to vector<128xf32>
    %274 = vector.shape_cast %273 : vector<128xf32> to vector<1x1x128xf32>
    %275 = vector.broadcast %274 : vector<1x1x128xf32> to vector<8x16x128xf32>
    %276 = arith.mulf %271, %275 : vector<8x16x128xf32>
    %277 = arith.addf %270, %276 : vector<8x16x128xf32>
    %278 = vector.extract_strided_slice %247 {offsets = [4, 0, 0], sizes = [8, 16, 128], strides = [1, 1, 1]} : vector<15x16x128xf32> to vector<8x16x128xf32>
    %279 = vector.extract_strided_slice %249 {offsets = [4, 0], sizes = [1, 128], strides = [1, 1]} : vector<8x128xf32> to vector<1x128xf32>
    %280 = vector.shape_cast %279 : vector<1x128xf32> to vector<128xf32>
    %281 = vector.shape_cast %280 : vector<128xf32> to vector<1x1x128xf32>
    %282 = vector.broadcast %281 : vector<1x1x128xf32> to vector<8x16x128xf32>
    %283 = arith.mulf %278, %282 : vector<8x16x128xf32>
    %284 = arith.addf %277, %283 : vector<8x16x128xf32>
    %285 = vector.extract_strided_slice %247 {offsets = [5, 0, 0], sizes = [8, 16, 128], strides = [1, 1, 1]} : vector<15x16x128xf32> to vector<8x16x128xf32>
    %286 = vector.extract_strided_slice %249 {offsets = [5, 0], sizes = [1, 128], strides = [1, 1]} : vector<8x128xf32> to vector<1x128xf32>
    %287 = vector.shape_cast %286 : vector<1x128xf32> to vector<128xf32>
    %288 = vector.shape_cast %287 : vector<128xf32> to vector<1x1x128xf32>
    %289 = vector.broadcast %288 : vector<1x1x128xf32> to vector<8x16x128xf32>
    %290 = arith.mulf %285, %289 : vector<8x16x128xf32>
    %291 = arith.addf %284, %290 : vector<8x16x128xf32>
    %292 = vector.extract_strided_slice %247 {offsets = [6, 0, 0], sizes = [8, 16, 128], strides = [1, 1, 1]} : vector<15x16x128xf32> to vector<8x16x128xf32>
    %293 = vector.extract_strided_slice %249 {offsets = [6, 0], sizes = [1, 128], strides = [1, 1]} : vector<8x128xf32> to vector<1x128xf32>
    %294 = vector.shape_cast %293 : vector<1x128xf32> to vector<128xf32>
    %295 = vector.shape_cast %294 : vector<128xf32> to vector<1x1x128xf32>
    %296 = vector.broadcast %295 : vector<1x1x128xf32> to vector<8x16x128xf32>
    %297 = arith.mulf %292, %296 : vector<8x16x128xf32>
    %298 = arith.addf %291, %297 : vector<8x16x128xf32>
    %299 = vector.extract_strided_slice %247 {offsets = [7, 0, 0], sizes = [8, 16, 128], strides = [1, 1, 1]} : vector<15x16x128xf32> to vector<8x16x128xf32>
    %300 = vector.extract_strided_slice %249 {offsets = [7, 0], sizes = [1, 128], strides = [1, 1]} : vector<8x128xf32> to vector<1x128xf32>
    %301 = vector.shape_cast %300 : vector<1x128xf32> to vector<128xf32>
    %302 = vector.shape_cast %301 : vector<128xf32> to vector<1x1x128xf32>
    %303 = vector.broadcast %302 : vector<1x1x128xf32> to vector<8x16x128xf32>
    %304 = arith.mulf %299, %303 : vector<8x16x128xf32>
    %305 = arith.addf %298, %304 : vector<8x16x128xf32>
    %306 = arith.index_cast %1 : i32 to index
    %c5 = arith.constant 5 : index
    %c0_21 = arith.constant 0 : index
    %307 = vector.load %arg13[%306, %c5, %c0_21] : memref<23x23x128xf32, #tpu.memory_space<vmem>>, vector<15x16x128xf32>
    %c5_22 = arith.constant 5 : index
    %c0_23 = arith.constant 0 : index
    %c0_24 = arith.constant 0 : index
    %308 = vector.load %arg5[%c5_22, %c0_23, %c0_24] : memref<8x8x128xf32, #tpu.memory_space<vmem>>, vector<1x8x128xf32>
    %309 = vector.shape_cast %308 : vector<1x8x128xf32> to vector<8x128xf32>
    %310 = vector.extract_strided_slice %307 {offsets = [0, 0, 0], sizes = [8, 16, 128], strides = [1, 1, 1]} : vector<15x16x128xf32> to vector<8x16x128xf32>
    %311 = vector.extract_strided_slice %309 {offsets = [0, 0], sizes = [1, 128], strides = [1, 1]} : vector<8x128xf32> to vector<1x128xf32>
    %312 = vector.shape_cast %311 : vector<1x128xf32> to vector<128xf32>
    %313 = vector.shape_cast %312 : vector<128xf32> to vector<1x1x128xf32>
    %314 = vector.broadcast %313 : vector<1x1x128xf32> to vector<8x16x128xf32>
    %315 = arith.mulf %310, %314 : vector<8x16x128xf32>
    %316 = arith.addf %305, %315 : vector<8x16x128xf32>
    %317 = vector.extract_strided_slice %307 {offsets = [1, 0, 0], sizes = [8, 16, 128], strides = [1, 1, 1]} : vector<15x16x128xf32> to vector<8x16x128xf32>
    %318 = vector.extract_strided_slice %309 {offsets = [1, 0], sizes = [1, 128], strides = [1, 1]} : vector<8x128xf32> to vector<1x128xf32>
    %319 = vector.shape_cast %318 : vector<1x128xf32> to vector<128xf32>
    %320 = vector.shape_cast %319 : vector<128xf32> to vector<1x1x128xf32>
    %321 = vector.broadcast %320 : vector<1x1x128xf32> to vector<8x16x128xf32>
    %322 = arith.mulf %317, %321 : vector<8x16x128xf32>
    %323 = arith.addf %316, %322 : vector<8x16x128xf32>
    %324 = vector.extract_strided_slice %307 {offsets = [2, 0, 0], sizes = [8, 16, 128], strides = [1, 1, 1]} : vector<15x16x128xf32> to vector<8x16x128xf32>
    %325 = vector.extract_strided_slice %309 {offsets = [2, 0], sizes = [1, 128], strides = [1, 1]} : vector<8x128xf32> to vector<1x128xf32>
    %326 = vector.shape_cast %325 : vector<1x128xf32> to vector<128xf32>
    %327 = vector.shape_cast %326 : vector<128xf32> to vector<1x1x128xf32>
    %328 = vector.broadcast %327 : vector<1x1x128xf32> to vector<8x16x128xf32>
    %329 = arith.mulf %324, %328 : vector<8x16x128xf32>
    %330 = arith.addf %323, %329 : vector<8x16x128xf32>
    %331 = vector.extract_strided_slice %307 {offsets = [3, 0, 0], sizes = [8, 16, 128], strides = [1, 1, 1]} : vector<15x16x128xf32> to vector<8x16x128xf32>
    %332 = vector.extract_strided_slice %309 {offsets = [3, 0], sizes = [1, 128], strides = [1, 1]} : vector<8x128xf32> to vector<1x128xf32>
    %333 = vector.shape_cast %332 : vector<1x128xf32> to vector<128xf32>
    %334 = vector.shape_cast %333 : vector<128xf32> to vector<1x1x128xf32>
    %335 = vector.broadcast %334 : vector<1x1x128xf32> to vector<8x16x128xf32>
    %336 = arith.mulf %331, %335 : vector<8x16x128xf32>
    %337 = arith.addf %330, %336 : vector<8x16x128xf32>
    %338 = vector.extract_strided_slice %307 {offsets = [4, 0, 0], sizes = [8, 16, 128], strides = [1, 1, 1]} : vector<15x16x128xf32> to vector<8x16x128xf32>
    %339 = vector.extract_strided_slice %309 {offsets = [4, 0], sizes = [1, 128], strides = [1, 1]} : vector<8x128xf32> to vector<1x128xf32>
    %340 = vector.shape_cast %339 : vector<1x128xf32> to vector<128xf32>
    %341 = vector.shape_cast %340 : vector<128xf32> to vector<1x1x128xf32>
    %342 = vector.broadcast %341 : vector<1x1x128xf32> to vector<8x16x128xf32>
    %343 = arith.mulf %338, %342 : vector<8x16x128xf32>
    %344 = arith.addf %337, %343 : vector<8x16x128xf32>
    %345 = vector.extract_strided_slice %307 {offsets = [5, 0, 0], sizes = [8, 16, 128], strides = [1, 1, 1]} : vector<15x16x128xf32> to vector<8x16x128xf32>
    %346 = vector.extract_strided_slice %309 {offsets = [5, 0], sizes = [1, 128], strides = [1, 1]} : vector<8x128xf32> to vector<1x128xf32>
    %347 = vector.shape_cast %346 : vector<1x128xf32> to vector<128xf32>
    %348 = vector.shape_cast %347 : vector<128xf32> to vector<1x1x128xf32>
    %349 = vector.broadcast %348 : vector<1x1x128xf32> to vector<8x16x128xf32>
    %350 = arith.mulf %345, %349 : vector<8x16x128xf32>
    %351 = arith.addf %344, %350 : vector<8x16x128xf32>
    %352 = vector.extract_strided_slice %307 {offsets = [6, 0, 0], sizes = [8, 16, 128], strides = [1, 1, 1]} : vector<15x16x128xf32> to vector<8x16x128xf32>
    %353 = vector.extract_strided_slice %309 {offsets = [6, 0], sizes = [1, 128], strides = [1, 1]} : vector<8x128xf32> to vector<1x128xf32>
    %354 = vector.shape_cast %353 : vector<1x128xf32> to vector<128xf32>
    %355 = vector.shape_cast %354 : vector<128xf32> to vector<1x1x128xf32>
    %356 = vector.broadcast %355 : vector<1x1x128xf32> to vector<8x16x128xf32>
    %357 = arith.mulf %352, %356 : vector<8x16x128xf32>
    %358 = arith.addf %351, %357 : vector<8x16x128xf32>
    %359 = vector.extract_strided_slice %307 {offsets = [7, 0, 0], sizes = [8, 16, 128], strides = [1, 1, 1]} : vector<15x16x128xf32> to vector<8x16x128xf32>
    %360 = vector.extract_strided_slice %309 {offsets = [7, 0], sizes = [1, 128], strides = [1, 1]} : vector<8x128xf32> to vector<1x128xf32>
    %361 = vector.shape_cast %360 : vector<1x128xf32> to vector<128xf32>
    %362 = vector.shape_cast %361 : vector<128xf32> to vector<1x1x128xf32>
    %363 = vector.broadcast %362 : vector<1x1x128xf32> to vector<8x16x128xf32>
    %364 = arith.mulf %359, %363 : vector<8x16x128xf32>
    %365 = arith.addf %358, %364 : vector<8x16x128xf32>
    %366 = arith.index_cast %1 : i32 to index
    %c6 = arith.constant 6 : index
    %c0_25 = arith.constant 0 : index
    %367 = vector.load %arg13[%366, %c6, %c0_25] : memref<23x23x128xf32, #tpu.memory_space<vmem>>, vector<15x16x128xf32>
    %c6_26 = arith.constant 6 : index
    %c0_27 = arith.constant 0 : index
    %c0_28 = arith.constant 0 : index
    %368 = vector.load %arg5[%c6_26, %c0_27, %c0_28] : memref<8x8x128xf32, #tpu.memory_space<vmem>>, vector<1x8x128xf32>
    %369 = vector.shape_cast %368 : vector<1x8x128xf32> to vector<8x128xf32>
    %370 = vector.extract_strided_slice %367 {offsets = [0, 0, 0], sizes = [8, 16, 128], strides = [1, 1, 1]} : vector<15x16x128xf32> to vector<8x16x128xf32>
    %371 = vector.extract_strided_slice %369 {offsets = [0, 0], sizes = [1, 128], strides = [1, 1]} : vector<8x128xf32> to vector<1x128xf32>
    %372 = vector.shape_cast %371 : vector<1x128xf32> to vector<128xf32>
    %373 = vector.shape_cast %372 : vector<128xf32> to vector<1x1x128xf32>
    %374 = vector.broadcast %373 : vector<1x1x128xf32> to vector<8x16x128xf32>
    %375 = arith.mulf %370, %374 : vector<8x16x128xf32>
    %376 = arith.addf %365, %375 : vector<8x16x128xf32>
    %377 = vector.extract_strided_slice %367 {offsets = [1, 0, 0], sizes = [8, 16, 128], strides = [1, 1, 1]} : vector<15x16x128xf32> to vector<8x16x128xf32>
    %378 = vector.extract_strided_slice %369 {offsets = [1, 0], sizes = [1, 128], strides = [1, 1]} : vector<8x128xf32> to vector<1x128xf32>
    %379 = vector.shape_cast %378 : vector<1x128xf32> to vector<128xf32>
    %380 = vector.shape_cast %379 : vector<128xf32> to vector<1x1x128xf32>
    %381 = vector.broadcast %380 : vector<1x1x128xf32> to vector<8x16x128xf32>
    %382 = arith.mulf %377, %381 : vector<8x16x128xf32>
    %383 = arith.addf %376, %382 : vector<8x16x128xf32>
    %384 = vector.extract_strided_slice %367 {offsets = [2, 0, 0], sizes = [8, 16, 128], strides = [1, 1, 1]} : vector<15x16x128xf32> to vector<8x16x128xf32>
    %385 = vector.extract_strided_slice %369 {offsets = [2, 0], sizes = [1, 128], strides = [1, 1]} : vector<8x128xf32> to vector<1x128xf32>
    %386 = vector.shape_cast %385 : vector<1x128xf32> to vector<128xf32>
    %387 = vector.shape_cast %386 : vector<128xf32> to vector<1x1x128xf32>
    %388 = vector.broadcast %387 : vector<1x1x128xf32> to vector<8x16x128xf32>
    %389 = arith.mulf %384, %388 : vector<8x16x128xf32>
    %390 = arith.addf %383, %389 : vector<8x16x128xf32>
    %391 = vector.extract_strided_slice %367 {offsets = [3, 0, 0], sizes = [8, 16, 128], strides = [1, 1, 1]} : vector<15x16x128xf32> to vector<8x16x128xf32>
    %392 = vector.extract_strided_slice %369 {offsets = [3, 0], sizes = [1, 128], strides = [1, 1]} : vector<8x128xf32> to vector<1x128xf32>
    %393 = vector.shape_cast %392 : vector<1x128xf32> to vector<128xf32>
    %394 = vector.shape_cast %393 : vector<128xf32> to vector<1x1x128xf32>
    %395 = vector.broadcast %394 : vector<1x1x128xf32> to vector<8x16x128xf32>
    %396 = arith.mulf %391, %395 : vector<8x16x128xf32>
    %397 = arith.addf %390, %396 : vector<8x16x128xf32>
    %398 = vector.extract_strided_slice %367 {offsets = [4, 0, 0], sizes = [8, 16, 128], strides = [1, 1, 1]} : vector<15x16x128xf32> to vector<8x16x128xf32>
    %399 = vector.extract_strided_slice %369 {offsets = [4, 0], sizes = [1, 128], strides = [1, 1]} : vector<8x128xf32> to vector<1x128xf32>
    %400 = vector.shape_cast %399 : vector<1x128xf32> to vector<128xf32>
    %401 = vector.shape_cast %400 : vector<128xf32> to vector<1x1x128xf32>
    %402 = vector.broadcast %401 : vector<1x1x128xf32> to vector<8x16x128xf32>
    %403 = arith.mulf %398, %402 : vector<8x16x128xf32>
    %404 = arith.addf %397, %403 : vector<8x16x128xf32>
    %405 = vector.extract_strided_slice %367 {offsets = [5, 0, 0], sizes = [8, 16, 128], strides = [1, 1, 1]} : vector<15x16x128xf32> to vector<8x16x128xf32>
    %406 = vector.extract_strided_slice %369 {offsets = [5, 0], sizes = [1, 128], strides = [1, 1]} : vector<8x128xf32> to vector<1x128xf32>
    %407 = vector.shape_cast %406 : vector<1x128xf32> to vector<128xf32>
    %408 = vector.shape_cast %407 : vector<128xf32> to vector<1x1x128xf32>
    %409 = vector.broadcast %408 : vector<1x1x128xf32> to vector<8x16x128xf32>
    %410 = arith.mulf %405, %409 : vector<8x16x128xf32>
    %411 = arith.addf %404, %410 : vector<8x16x128xf32>
    %412 = vector.extract_strided_slice %367 {offsets = [6, 0, 0], sizes = [8, 16, 128], strides = [1, 1, 1]} : vector<15x16x128xf32> to vector<8x16x128xf32>
    %413 = vector.extract_strided_slice %369 {offsets = [6, 0], sizes = [1, 128], strides = [1, 1]} : vector<8x128xf32> to vector<1x128xf32>
    %414 = vector.shape_cast %413 : vector<1x128xf32> to vector<128xf32>
    %415 = vector.shape_cast %414 : vector<128xf32> to vector<1x1x128xf32>
    %416 = vector.broadcast %415 : vector<1x1x128xf32> to vector<8x16x128xf32>
    %417 = arith.mulf %412, %416 : vector<8x16x128xf32>
    %418 = arith.addf %411, %417 : vector<8x16x128xf32>
    %419 = vector.extract_strided_slice %367 {offsets = [7, 0, 0], sizes = [8, 16, 128], strides = [1, 1, 1]} : vector<15x16x128xf32> to vector<8x16x128xf32>
    %420 = vector.extract_strided_slice %369 {offsets = [7, 0], sizes = [1, 128], strides = [1, 1]} : vector<8x128xf32> to vector<1x128xf32>
    %421 = vector.shape_cast %420 : vector<1x128xf32> to vector<128xf32>
    %422 = vector.shape_cast %421 : vector<128xf32> to vector<1x1x128xf32>
    %423 = vector.broadcast %422 : vector<1x1x128xf32> to vector<8x16x128xf32>
    %424 = arith.mulf %419, %423 : vector<8x16x128xf32>
    %425 = arith.addf %418, %424 : vector<8x16x128xf32>
    %426 = arith.index_cast %1 : i32 to index
    %c7 = arith.constant 7 : index
    %c0_29 = arith.constant 0 : index
    %427 = vector.load %arg13[%426, %c7, %c0_29] : memref<23x23x128xf32, #tpu.memory_space<vmem>>, vector<15x16x128xf32>
    %c7_30 = arith.constant 7 : index
    %c0_31 = arith.constant 0 : index
    %c0_32 = arith.constant 0 : index
    %428 = vector.load %arg5[%c7_30, %c0_31, %c0_32] : memref<8x8x128xf32, #tpu.memory_space<vmem>>, vector<1x8x128xf32>
    %429 = vector.shape_cast %428 : vector<1x8x128xf32> to vector<8x128xf32>
    %430 = vector.extract_strided_slice %427 {offsets = [0, 0, 0], sizes = [8, 16, 128], strides = [1, 1, 1]} : vector<15x16x128xf32> to vector<8x16x128xf32>
    %431 = vector.extract_strided_slice %429 {offsets = [0, 0], sizes = [1, 128], strides = [1, 1]} : vector<8x128xf32> to vector<1x128xf32>
    %432 = vector.shape_cast %431 : vector<1x128xf32> to vector<128xf32>
    %433 = vector.shape_cast %432 : vector<128xf32> to vector<1x1x128xf32>
    %434 = vector.broadcast %433 : vector<1x1x128xf32> to vector<8x16x128xf32>
    %435 = arith.mulf %430, %434 : vector<8x16x128xf32>
    %436 = arith.addf %425, %435 : vector<8x16x128xf32>
    %437 = vector.extract_strided_slice %427 {offsets = [1, 0, 0], sizes = [8, 16, 128], strides = [1, 1, 1]} : vector<15x16x128xf32> to vector<8x16x128xf32>
    %438 = vector.extract_strided_slice %429 {offsets = [1, 0], sizes = [1, 128], strides = [1, 1]} : vector<8x128xf32> to vector<1x128xf32>
    %439 = vector.shape_cast %438 : vector<1x128xf32> to vector<128xf32>
    %440 = vector.shape_cast %439 : vector<128xf32> to vector<1x1x128xf32>
    %441 = vector.broadcast %440 : vector<1x1x128xf32> to vector<8x16x128xf32>
    %442 = arith.mulf %437, %441 : vector<8x16x128xf32>
    %443 = arith.addf %436, %442 : vector<8x16x128xf32>
    %444 = vector.extract_strided_slice %427 {offsets = [2, 0, 0], sizes = [8, 16, 128], strides = [1, 1, 1]} : vector<15x16x128xf32> to vector<8x16x128xf32>
    %445 = vector.extract_strided_slice %429 {offsets = [2, 0], sizes = [1, 128], strides = [1, 1]} : vector<8x128xf32> to vector<1x128xf32>
    %446 = vector.shape_cast %445 : vector<1x128xf32> to vector<128xf32>
    %447 = vector.shape_cast %446 : vector<128xf32> to vector<1x1x128xf32>
    %448 = vector.broadcast %447 : vector<1x1x128xf32> to vector<8x16x128xf32>
    %449 = arith.mulf %444, %448 : vector<8x16x128xf32>
    %450 = arith.addf %443, %449 : vector<8x16x128xf32>
    %451 = vector.extract_strided_slice %427 {offsets = [3, 0, 0], sizes = [8, 16, 128], strides = [1, 1, 1]} : vector<15x16x128xf32> to vector<8x16x128xf32>
    %452 = vector.extract_strided_slice %429 {offsets = [3, 0], sizes = [1, 128], strides = [1, 1]} : vector<8x128xf32> to vector<1x128xf32>
    %453 = vector.shape_cast %452 : vector<1x128xf32> to vector<128xf32>
    %454 = vector.shape_cast %453 : vector<128xf32> to vector<1x1x128xf32>
    %455 = vector.broadcast %454 : vector<1x1x128xf32> to vector<8x16x128xf32>
    %456 = arith.mulf %451, %455 : vector<8x16x128xf32>
    %457 = arith.addf %450, %456 : vector<8x16x128xf32>
    %458 = vector.extract_strided_slice %427 {offsets = [4, 0, 0], sizes = [8, 16, 128], strides = [1, 1, 1]} : vector<15x16x128xf32> to vector<8x16x128xf32>
    %459 = vector.extract_strided_slice %429 {offsets = [4, 0], sizes = [1, 128], strides = [1, 1]} : vector<8x128xf32> to vector<1x128xf32>
    %460 = vector.shape_cast %459 : vector<1x128xf32> to vector<128xf32>
    %461 = vector.shape_cast %460 : vector<128xf32> to vector<1x1x128xf32>
    %462 = vector.broadcast %461 : vector<1x1x128xf32> to vector<8x16x128xf32>
    %463 = arith.mulf %458, %462 : vector<8x16x128xf32>
    %464 = arith.addf %457, %463 : vector<8x16x128xf32>
    %465 = vector.extract_strided_slice %427 {offsets = [5, 0, 0], sizes = [8, 16, 128], strides = [1, 1, 1]} : vector<15x16x128xf32> to vector<8x16x128xf32>
    %466 = vector.extract_strided_slice %429 {offsets = [5, 0], sizes = [1, 128], strides = [1, 1]} : vector<8x128xf32> to vector<1x128xf32>
    %467 = vector.shape_cast %466 : vector<1x128xf32> to vector<128xf32>
    %468 = vector.shape_cast %467 : vector<128xf32> to vector<1x1x128xf32>
    %469 = vector.broadcast %468 : vector<1x1x128xf32> to vector<8x16x128xf32>
    %470 = arith.mulf %465, %469 : vector<8x16x128xf32>
    %471 = arith.addf %464, %470 : vector<8x16x128xf32>
    %472 = vector.extract_strided_slice %427 {offsets = [6, 0, 0], sizes = [8, 16, 128], strides = [1, 1, 1]} : vector<15x16x128xf32> to vector<8x16x128xf32>
    %473 = vector.extract_strided_slice %429 {offsets = [6, 0], sizes = [1, 128], strides = [1, 1]} : vector<8x128xf32> to vector<1x128xf32>
    %474 = vector.shape_cast %473 : vector<1x128xf32> to vector<128xf32>
    %475 = vector.shape_cast %474 : vector<128xf32> to vector<1x1x128xf32>
    %476 = vector.broadcast %475 : vector<1x1x128xf32> to vector<8x16x128xf32>
    %477 = arith.mulf %472, %476 : vector<8x16x128xf32>
    %478 = arith.addf %471, %477 : vector<8x16x128xf32>
    %479 = vector.extract_strided_slice %427 {offsets = [7, 0, 0], sizes = [8, 16, 128], strides = [1, 1, 1]} : vector<15x16x128xf32> to vector<8x16x128xf32>
    %480 = vector.extract_strided_slice %429 {offsets = [7, 0], sizes = [1, 128], strides = [1, 1]} : vector<8x128xf32> to vector<1x128xf32>
    %481 = vector.shape_cast %480 : vector<1x128xf32> to vector<128xf32>
    %482 = vector.shape_cast %481 : vector<128xf32> to vector<1x1x128xf32>
    %483 = vector.broadcast %482 : vector<1x1x128xf32> to vector<8x16x128xf32>
    %484 = arith.mulf %479, %483 : vector<8x16x128xf32>
    %485 = arith.addf %478, %484 : vector<8x16x128xf32>
    %c0_33 = arith.constant 0 : index
    %486 = arith.index_cast %1 : i32 to index
    %c0_34 = arith.constant 0 : index
    %c0_35 = arith.constant 0 : index
    %487 = vector.load %arg2[%c0_33, %486, %c0_34, %c0_35] : memref<1x16x16x128xf32, #tpu.memory_space<vmem>>, vector<1x8x16x128xf32>
    %488 = vector.shape_cast %487 : vector<1x8x16x128xf32> to vector<8x16x128xf32>
    %489 = vector.shape_cast %488 : vector<8x16x128xf32> to vector<128x128xf32>
    %490 = vector.shape_cast %485 : vector<8x16x128xf32> to vector<128x128xf32>
    %491 = arith.truncf %490 : vector<128x128xf32> to vector<128x128xbf16>
    %c0_36 = arith.constant 0 : index
    %c0_37 = arith.constant 0 : index
    %492 = vector.load %arg6[%c0_36, %c0_37] : memref<128x128xbf16, #tpu.memory_space<vmem>>, vector<128x128xbf16>
    %cst_38 = arith.constant dense<0.000000e+00> : vector<128x128xf32>
    %493 = tpu.matmul %491, %492, %cst_38 {dimension_numbers = #tpu.dot_dimension_numbers<[1], [0], [0], [1], [0, 0, 1, 1], [], []>} : vector<128x128xbf16>, vector<128x128xbf16>, vector<128x128xf32> -> vector<128x128xf32>
    %c0_39 = arith.constant 0 : index
    %c0_40 = arith.constant 0 : index
    %494 = vector.load %arg7[%c0_39, %c0_40] : memref<1x128xf32, #tpu.memory_space<vmem>>, vector<1x128xf32>
    %495 = vector.broadcast %494 : vector<1x128xf32> to vector<128x128xf32>
    %496 = arith.addf %493, %495 : vector<128x128xf32>
    %497 = arith.addf %496, %489 : vector<128x128xf32>
    %498 = arith.truncf %497 : vector<128x128xf32> to vector<128x128xbf16>
    %c0_41 = arith.constant 0 : index
    %c0_42 = arith.constant 0 : index
    %499 = vector.load %arg8[%c0_41, %c0_42] : memref<128x512xbf16, #tpu.memory_space<vmem>>, vector<128x512xbf16>
    %cst_43 = arith.constant dense<0.000000e+00> : vector<128x512xf32>
    %500 = tpu.matmul %498, %499, %cst_43 {dimension_numbers = #tpu.dot_dimension_numbers<[1], [0], [0], [1], [0, 0, 1, 1], [], []>} : vector<128x128xbf16>, vector<128x512xbf16>, vector<128x512xf32> -> vector<128x512xf32>
    %c0_44 = arith.constant 0 : index
    %c0_45 = arith.constant 0 : index
    %501 = vector.load %arg9[%c0_44, %c0_45] : memref<1x512xf32, #tpu.memory_space<vmem>>, vector<1x512xf32>
    %502 = vector.broadcast %501 : vector<1x512xf32> to vector<128x512xf32>
    %503 = arith.addf %500, %502 : vector<128x512xf32>
    %cst_46 = arith.constant 0.000000e+00 : f32
    %504 = vector.broadcast %cst_46 : f32 to vector<128x512xf32>
    %505 = arith.maximumf %503, %504 : vector<128x512xf32>
    %cst_47 = arith.constant 6.000000e+00 : f32
    %506 = vector.broadcast %cst_47 : f32 to vector<128x512xf32>
    %507 = arith.minimumf %505, %506 : vector<128x512xf32>
    %508 = arith.truncf %507 : vector<128x512xf32> to vector<128x512xbf16>
    %c0_48 = arith.constant 0 : index
    %c0_49 = arith.constant 0 : index
    %509 = vector.load %arg10[%c0_48, %c0_49] : memref<512x128xbf16, #tpu.memory_space<vmem>>, vector<512x128xbf16>
    %cst_50 = arith.constant dense<0.000000e+00> : vector<128x128xf32>
    %510 = tpu.matmul %508, %509, %cst_50 {dimension_numbers = #tpu.dot_dimension_numbers<[1], [0], [0], [1], [0, 0, 1, 1], [], []>} : vector<128x512xbf16>, vector<512x128xbf16>, vector<128x128xf32> -> vector<128x128xf32>
    %c0_51 = arith.constant 0 : index
    %c0_52 = arith.constant 0 : index
    %511 = vector.load %arg11[%c0_51, %c0_52] : memref<1x128xf32, #tpu.memory_space<vmem>>, vector<1x128xf32>
    %512 = vector.broadcast %511 : vector<1x128xf32> to vector<128x128xf32>
    %513 = arith.addf %510, %512 : vector<128x128xf32>
    %514 = arith.addf %497, %513 : vector<128x128xf32>
    %515 = vector.shape_cast %514 : vector<128x128xf32> to vector<8x16x128xf32>
    %c0_53 = arith.constant 0 : index
    %c0_54 = arith.constant 0 : index
    %c0_55 = arith.constant 0 : index
    %c0_56 = arith.constant 0 : index
    %516 = vector.load %arg12[%c0_53, %c0_54, %c0_55, %c0_56] : memref<1x8x16x128xf32, #tpu.memory_space<vmem>>, vector<1x8x16x128xf32>
    %517 = vector.shape_cast %516 : vector<1x8x16x128xf32> to vector<8x16x128xf32>
    %518 = vector.shape_cast %515 : vector<8x16x128xf32> to vector<1x8x16x128xf32>
    tpu.vector_store %arg12[%c0_53, %c0_54, %c0_55, %c0_56], %518 {strides = array<i32>} : memref<1x8x16x128xf32, #tpu.memory_space<vmem>>, vector<1x8x16x128xf32>,
    return
  }
  func.func @transform_0(%arg0: i32, %arg1: i32) -> (i32, i32, i32, i32) {
    %c0_i32 = arith.constant 0 : i32
    %c0_i32_0 = arith.constant 0 : i32
    %c0_i32_1 = arith.constant 0 : i32
    %c0_i32_2 = arith.constant 0 : i32
    return %arg0, %c0_i32, %c0_i32_0, %c0_i32_1 : i32, i32, i32, i32
  }
  func.func @transform_1(%arg0: i32, %arg1: i32) -> (i32, i32) {
    %c0_i32 = arith.constant 0 : i32
    %c0_i32_0 = arith.constant 0 : i32
    %c0_i32_1 = arith.constant 0 : i32
    return %c0_i32, %c0_i32_0 : i32, i32
  }
  func.func @transform_2(%arg0: i32, %arg1: i32) -> (i32, i32) {
    %c0_i32 = arith.constant 0 : i32
    %c0_i32_0 = arith.constant 0 : i32
    %c0_i32_1 = arith.constant 0 : i32
    return %c0_i32, %c0_i32_0 : i32, i32
  }
  func.func @transform_3(%arg0: i32, %arg1: i32) -> (i32, i32, i32) {
    %c0_i32 = arith.constant 0 : i32
    %c0_i32_0 = arith.constant 0 : i32
    %c0_i32_1 = arith.constant 0 : i32
    %c0_i32_2 = arith.constant 0 : i32
    return %c0_i32, %c0_i32_0, %c0_i32_1 : i32, i32, i32
  }
  func.func @transform_4(%arg0: i32, %arg1: i32) -> (i32, i32) {
    %c0_i32 = arith.constant 0 : i32
    %c0_i32_0 = arith.constant 0 : i32
    %c0_i32_1 = arith.constant 0 : i32
    return %c0_i32, %c0_i32_0 : i32, i32
  }
  func.func @transform_5(%arg0: i32, %arg1: i32) -> (i32, i32) {
    %c0_i32 = arith.constant 0 : i32
    %c0_i32_0 = arith.constant 0 : i32
    %c0_i32_1 = arith.constant 0 : i32
    return %c0_i32, %c0_i32_0 : i32, i32
  }
  func.func @transform_6(%arg0: i32, %arg1: i32) -> (i32, i32) {
    %c0_i32 = arith.constant 0 : i32
    %c0_i32_0 = arith.constant 0 : i32
    %c0_i32_1 = arith.constant 0 : i32
    return %c0_i32, %c0_i32_0 : i32, i32
  }
  func.func @transform_7(%arg0: i32, %arg1: i32) -> (i32, i32) {
    %c0_i32 = arith.constant 0 : i32
    %c0_i32_0 = arith.constant 0 : i32
    %c0_i32_1 = arith.constant 0 : i32
    return %c0_i32, %c0_i32_0 : i32, i32
  }
  func.func @transform_8(%arg0: i32, %arg1: i32) -> (i32, i32) {
    %c0_i32 = arith.constant 0 : i32
    %c0_i32_0 = arith.constant 0 : i32
    %c0_i32_1 = arith.constant 0 : i32
    return %c0_i32, %c0_i32_0 : i32, i32
  }
  func.func @transform_9(%arg0: i32, %arg1: i32) -> (i32, i32) {
    %c0_i32 = arith.constant 0 : i32
    %c0_i32_0 = arith.constant 0 : i32
    %c0_i32_1 = arith.constant 0 : i32
    return %c0_i32, %c0_i32_0 : i32, i32
  }
  func.func @transform_10(%arg0: i32, %arg1: i32) -> (i32, i32, i32, i32) {
    %c0_i32 = arith.constant 0 : i32
    %c0_i32_0 = arith.constant 0 : i32
    %c0_i32_1 = arith.constant 0 : i32
    return %arg0, %arg1, %c0_i32, %c0_i32_0 : i32, i32, i32, i32
  }
}

</mosaic_0001>

<llo_original>
// kernel: local_block_forward.1
$region0: #{local_block_forward.1}
  #allocation0 [shape = 'u32[]', space=smem, size = 0x4, offset = 0x4, fixed_abs, tag = 'smem constant byte address 0x4 - core index']
  #allocation1 [shape = 'u32[144,128]{1,0:T(1,128)}', space=vmem, size = 0x12000, scoped, tag = 'internal scratch']
  #allocation2 [shape = 'f32[23,23,128]{2,1,0:T(8,128)}', space=vmem, size = 0x45000, scoped, tag = 'scratch operand']
  %s0 = inlined_call_operand.vmem [shape: f32[2,16,16,128], index: 0, kind: input, shape index: {}]
  %s1 = inlined_call_operand.vmem [shape: f32[1,128], index: 1, kind: input, shape index: {}]
  %s2 = inlined_call_operand.vmem [shape: f32[1,128], index: 2, kind: input, shape index: {}]
  %s3 = inlined_call_operand.vmem [shape: f32[8,8,128], index: 3, kind: input, shape index: {}]
  %s4 = inlined_call_operand.vmem [shape: bf16[128,128], index: 4, kind: input, shape index: {}]
  %s5 = inlined_call_operand.vmem [shape: f32[1,128], index: 5, kind: input, shape index: {}]
  %s6 = inlined_call_operand.vmem [shape: bf16[128,512], index: 6, kind: input, shape index: {}]
  %s7 = inlined_call_operand.vmem [shape: f32[1,512], index: 7, kind: input, shape index: {}]
  %s8 = inlined_call_operand.vmem [shape: bf16[512,128], index: 8, kind: input, shape index: {}]
  %s9 = inlined_call_operand.vmem [shape: f32[1,128], index: 9, kind: input, shape index: {}]
  %s10 = inlined_call_operand.hbm [shape: f32[2,16,16,128], index: 10, kind: output, shape index: {}]
  %s11 = sld [smem:[#allocation0]]
  $region77: #{local_block_forward.1} parent=0
    _
  %s13 = ssub.s32 1, %s11
  %s14 = scalar_select 0, %s13, %s11
  $region1: #{local_block_forward.1} parent=0
    #allocation3 [shape = 'u8[131072]{0}', space=vmem, size = 0x20000, scoped, tag = 'output window, operand 0']
    #allocation4 [shape = 's32[2]{0}', space=sflag, size = 0x8, scoped, tag = 'scoped memory for local_block_forward.1']
    %15 = vsyncpa [#allocation4], 0
    %s16 = scalar_lea.sflag [#allocation4], 1
    %17 = vsyncpa %s16, 0
    loop: start=0, step=1, limit=6
    $region2: #{local_block_forward.1} parent=1 // loop_pre_header
      _
    $region3: #{local_block_forward.1} parent=1 // loop_header
      %s19 = sphi 0, %s23
      %p20 = scmp.ge.s32.totalorder %s19, 6
      %s26 = sphi 0, %s38
      %s27 = sphi 0, %s34
      %s28 = sphi 0, %s26
      %s29 = sphi 0, %s27
      %s30 = sphi 0, %s28
      %s31 = sphi 0, %s29
      %s41 = sphi 0, %s43
      %s44 = sphi 0, %s41
      %s45 = sphi 0, %s44
      %s61 = sphi 0, %s45
      %s65 = sphi 0, %s65
      %s67 = sphi 0, %s65
      %s68 = sphi 0, %s67
      %s82 = sphi 0, %s68
      %s86 = sphi 0, %s86
      %s88 = sphi 0, %s86
      %s89 = sphi 0, %s88
      %s103 = sphi 0, %s89
      %s107 = sphi 0, %s107
      %s109 = sphi 0, %s107
      %s110 = sphi 0, %s109
      %s124 = sphi 0, %s110
      %s128 = sphi 0, %s128
      %s130 = sphi 0, %s128
      %s131 = sphi 0, %s130
      %s145 = sphi 0, %s131
      %s149 = sphi 0, %s149
      %s151 = sphi 0, %s149
      %s152 = sphi 0, %s151
      %s166 = sphi 0, %s152
      %s170 = sphi 0, %s170
      %s172 = sphi 0, %s170
      %s173 = sphi 0, %s172
      %s187 = sphi 0, %s173
      %s191 = sphi 0, %s191
      %s193 = sphi 0, %s191
      %s194 = sphi 0, %s193
      %s208 = sphi 0, %s194
      %s212 = sphi 0, %s212
      %s214 = sphi 0, %s212
      %s215 = sphi 0, %s214
      %s229 = sphi 0, %s215
      %s233 = sphi 0, %s233
      %s235 = sphi 0, %s233
      %s236 = sphi 0, %s235
      %s250 = sphi 0, %s236
      %s258 = sphi 0, %s260
      %s261 = sphi 0, %s258
      %s262 = sphi 0, %s261
      %s278 = sphi 0, %s262
    $region4: #{local_block_forward.1} parent=1 // loop_header_branch
      %22 = sbr.rel (%p20) target = $region8
    $region5: #{local_block_forward.1} parent=1 // loop_body
      %s24 = ssub.s32 %s19, 1
      %s25 = ssub.s32 %s19, 2
      %s32 = sadd.s32 1, %s27
      %p33 = scmp.ge.s32.totalorder %s32, 2
      %s34 = scalar_select %p33, 0, %s32
      %s35 = sadd.s32 1, %s26
      %s36 = scalar_select %p33, %s35, %s26
      %p37 = scmp.ge.s32.totalorder %s36, 2
      %s38 = scalar_select %p37, 0, %s36
      %s39 = ssub.s32 %s26, %s38
      %p40 = scmp.eq.s32.totalorder %s39, 0
      %s42 = sadd.s32 %s41, 1
      %s43 = scalar_select %p40, %s41, %s42
      %p46 = pneg %p40
      %p47 = scmp.eq.s32.totalorder %s19, 3
      %p48 = por %p46, %p47
      %p49 = scmp.ne.s32.totalorder %s41, %s44
      %p50 = scmp.eq.s32.totalorder %s19, 0
      %p51 = por %p49, %p50
      %p52 = scmp.ne.s32.totalorder %s41, %s44
      %p53 = scmp.eq.s32.totalorder %s24, 3
      %p54 = por %p52, %p53
      %p55 = scmp.ne.s32.totalorder %s44, %s45
      %p56 = scmp.eq.s32.totalorder %s24, 0
      %p57 = por %p55, %p56
      %p58 = scmp.ne.s32.totalorder %s44, %s45
      %p59 = scmp.eq.s32.totalorder %s25, 3
      %p60 = por %p58, %p59
      %p62 = scmp.ne.s32.totalorder %s45, %s61
      %p63 = scmp.eq.s32.totalorder %s25, 0
      %p64 = por %p62, %p63
      %s66 = sadd.s32 %s65, 1
      %p69 = scmp.eq.s32.totalorder %s19, 3
      %p70 = scmp.ne.s32.totalorder %s65, %s67
      %p71 = scmp.eq.s32.totalorder %s19, 0
      %p72 = por %p70, %p71
      %p73 = scmp.ne.s32.totalorder %s65, %s67
      %p74 = scmp.eq.s32.totalorder %s24, 3
      %p75 = por %p73, %p74
      %p76 = scmp.ne.s32.totalorder %s67, %s68
      %p77 = scmp.eq.s32.totalorder %s24, 0
      %p78 = por %p76, %p77
      %p79 = scmp.ne.s32.totalorder %s67, %s68
      %p80 = scmp.eq.s32.totalorder %s25, 3
      %p81 = por %p79, %p80
      %p83 = scmp.ne.s32.totalorder %s68, %s82
      %p84 = scmp.eq.s32.totalorder %s25, 0
      %p85 = por %p83, %p84
      %s87 = sadd.s32 %s86, 1
      %p90 = scmp.eq.s32.totalorder %s19, 3
      %p91 = scmp.ne.s32.totalorder %s86, %s88
      %p92 = scmp.eq.s32.totalorder %s19, 0
      %p93 = por %p91, %p92
      %p94 = scmp.ne.s32.totalorder %s86, %s88
      %p95 = scmp.eq.s32.totalorder %s24, 3
      %p96 = por %p94, %p95
      %p97 = scmp.ne.s32.totalorder %s88, %s89
      %p98 = scmp.eq.s32.totalorder %s24, 0
      %p99 = por %p97, %p98
      %p100 = scmp.ne.s32.totalorder %s88, %s89
      %p101 = scmp.eq.s32.totalorder %s25, 3
      %p102 = por %p100, %p101
      %p104 = scmp.ne.s32.totalorder %s89, %s103
      %p105 = scmp.eq.s32.totalorder %s25, 0
      %p106 = por %p104, %p105
      %s108 = sadd.s32 %s107, 1
      %p111 = scmp.eq.s32.totalorder %s19, 3
      %p112 = scmp.ne.s32.totalorder %s107, %s109
      %p113 = scmp.eq.s32.totalorder %s19, 0
      %p114 = por %p112, %p113
      %p115 = scmp.ne.s32.totalorder %s107, %s109
      %p116 = scmp.eq.s32.totalorder %s24, 3
      %p117 = por %p115, %p116
      %p118 = scmp.ne.s32.totalorder %s109, %s110
      %p119 = scmp.eq.s32.totalorder %s24, 0
      %p120 = por %p118, %p119
      %p121 = scmp.ne.s32.totalorder %s109, %s110
      %p122 = scmp.eq.s32.totalorder %s25, 3
      %p123 = por %p121, %p122
      %p125 = scmp.ne.s32.totalorder %s110, %s124
      %p126 = scmp.eq.s32.totalorder %s25, 0
      %p127 = por %p125, %p126
      %s129 = sadd.s32 %s128, 1
      %p132 = scmp.eq.s32.totalorder %s19, 3
      %p133 = scmp.ne.s32.totalorder %s128, %s130
      %p134 = scmp.eq.s32.totalorder %s19, 0
      %p135 = por %p133, %p134
      %p136 = scmp.ne.s32.totalorder %s128, %s130
      %p137 = scmp.eq.s32.totalorder %s24, 3
      %p138 = por %p136, %p137
      %p139 = scmp.ne.s32.totalorder %s130, %s131
      %p140 = scmp.eq.s32.totalorder %s24, 0
      %p141 = por %p139, %p140
      %p142 = scmp.ne.s32.totalorder %s130, %s131
      %p143 = scmp.eq.s32.totalorder %s25, 3
      %p144 = por %p142, %p143
      %p146 = scmp.ne.s32.totalorder %s131, %s145
      %p147 = scmp.eq.s32.totalorder %s25, 0
      %p148 = por %p146, %p147
      %s150 = sadd.s32 %s149, 1
      %p153 = scmp.eq.s32.totalorder %s19, 3
      %p154 = scmp.ne.s32.totalorder %s149, %s151
      %p155 = scmp.eq.s32.totalorder %s19, 0
      %p156 = por %p154, %p155
      %p157 = scmp.ne.s32.totalorder %s149, %s151
      %p158 = scmp.eq.s32.totalorder %s24, 3
      %p159 = por %p157, %p158
      %p160 = scmp.ne.s32.totalorder %s151, %s152
      %p161 = scmp.eq.s32.totalorder %s24, 0
      %p162 = por %p160, %p161
      %p163 = scmp.ne.s32.totalorder %s151, %s152
      %p164 = scmp.eq.s32.totalorder %s25, 3
      %p165 = por %p163, %p164
      %p167 = scmp.ne.s32.totalorder %s152, %s166
      %p168 = scmp.eq.s32.totalorder %s25, 0
      %p169 = por %p167, %p168
      %s171 = sadd.s32 %s170, 1
      %p174 = scmp.eq.s32.totalorder %s19, 3
      %p175 = scmp.ne.s32.totalorder %s170, %s172
      %p176 = scmp.eq.s32.totalorder %s19, 0
      %p177 = por %p175, %p176
      %p178 = scmp.ne.s32.totalorder %s170, %s172
      %p179 = scmp.eq.s32.totalorder %s24, 3
      %p180 = por %p178, %p179
      %p181 = scmp.ne.s32.totalorder %s172, %s173
      %p182 = scmp.eq.s32.totalorder %s24, 0
      %p183 = por %p181, %p182
      %p184 = scmp.ne.s32.totalorder %s172, %s173
      %p185 = scmp.eq.s32.totalorder %s25, 3
      %p186 = por %p184, %p185
      %p188 = scmp.ne.s32.totalorder %s173, %s187
      %p189 = scmp.eq.s32.totalorder %s25, 0
      %p190 = por %p188, %p189
      %s192 = sadd.s32 %s191, 1
      %p195 = scmp.eq.s32.totalorder %s19, 3
      %p196 = scmp.ne.s32.totalorder %s191, %s193
      %p197 = scmp.eq.s32.totalorder %s19, 0
      %p198 = por %p196, %p197
      %p199 = scmp.ne.s32.totalorder %s191, %s193
      %p200 = scmp.eq.s32.totalorder %s24, 3
      %p201 = por %p199, %p200
      %p202 = scmp.ne.s32.totalorder %s193, %s194
      %p203 = scmp.eq.s32.totalorder %s24, 0
      %p204 = por %p202, %p203
      %p205 = scmp.ne.s32.totalorder %s193, %s194
      %p206 = scmp.eq.s32.totalorder %s25, 3
      %p207 = por %p205, %p206
      %p209 = scmp.ne.s32.totalorder %s194, %s208
      %p210 = scmp.eq.s32.totalorder %s25, 0
      %p211 = por %p209, %p210
      %s213 = sadd.s32 %s212, 1
      %p216 = scmp.eq.s32.totalorder %s19, 3
      %p217 = scmp.ne.s32.totalorder %s212, %s214
      %p218 = scmp.eq.s32.totalorder %s19, 0
      %p219 = por %p217, %p218
      %p220 = scmp.ne.s32.totalorder %s212, %s214
      %p221 = scmp.eq.s32.totalorder %s24, 3
      %p222 = por %p220, %p221
      %p223 = scmp.ne.s32.totalorder %s214, %s215
      %p224 = scmp.eq.s32.totalorder %s24, 0
      %p225 = por %p223, %p224
      %p226 = scmp.ne.s32.totalorder %s214, %s215
      %p227 = scmp.eq.s32.totalorder %s25, 3
      %p228 = por %p226, %p227
      %p230 = scmp.ne.s32.totalorder %s215, %s229
      %p231 = scmp.eq.s32.totalorder %s25, 0
      %p232 = por %p230, %p231
      %s234 = sadd.s32 %s233, 1
      %p237 = scmp.eq.s32.totalorder %s19, 3
      %p238 = scmp.ne.s32.totalorder %s233, %s235
      %p239 = scmp.eq.s32.totalorder %s19, 0
      %p240 = por %p238, %p239
      %p241 = scmp.ne.s32.totalorder %s233, %s235
      %p242 = scmp.eq.s32.totalorder %s24, 3
      %p243 = por %p241, %p242
      %p244 = scmp.ne.s32.totalorder %s235, %s236
      %p245 = scmp.eq.s32.totalorder %s24, 0
      %p246 = por %p244, %p245
      %p247 = scmp.ne.s32.totalorder %s235, %s236
      %p248 = scmp.eq.s32.totalorder %s25, 3
      %p249 = por %p247, %p248
      %p251 = scmp.ne.s32.totalorder %s236, %s250
      %p252 = scmp.eq.s32.totalorder %s25, 0
      %p253 = por %p251, %p252
      %s254 = ssub.s32 %s26, %s38
      %s255 = ssub.s32 %s27, %s34
      %s256 = sor.u32 %s254, %s255
      %p257 = scmp.eq.s32.totalorder %s256, 0
      %s259 = sadd.s32 %s258, 1
      %s260 = scalar_select %p257, %s258, %s259
      %p263 = pneg %p257
      %p264 = scmp.eq.s32.totalorder %s19, 3
      %p265 = por %p263, %p264
      %p266 = scmp.ne.s32.totalorder %s258, %s261
      %p267 = scmp.eq.s32.totalorder %s19, 0
      %p268 = por %p266, %p267
      %p269 = scmp.ne.s32.totalorder %s258, %s261
      %p270 = scmp.eq.s32.totalorder %s24, 3
      %p271 = por %p269, %p270
      %p272 = scmp.ne.s32.totalorder %s261, %s262
      %p273 = scmp.eq.s32.totalorder %s24, 0
      %p274 = por %p272, %p273
      %p275 = scmp.ne.s32.totalorder %s261, %s262
      %p276 = scmp.eq.s32.totalorder %s25, 3
      %p277 = por %p275, %p276
      %p279 = scmp.ne.s32.totalorder %s262, %s278
      %p280 = scmp.eq.s32.totalorder %s25, 0
      %p281 = por %p279, %p280
      %p282 = scmp.le.s32.totalorder 1, %s19
      %p283 = scmp.lt.s32.totalorder %s19, 5
      %p284 = pnand %p282, %p283
      %p285 = pneg %p284
      // Predicated region
      $region9: #{local_block_forward.1} parent=5 // pred_check
        _
      $region10: #{local_block_forward.1} parent=5 // pred_check_branch
        %287 = sbr.rel (%p284) target = $region12
      $region11: #{local_block_forward.1} parent=5 // pred_region
        %s288 = ssub.s32 %s19, 1
        // Predicated region
        $region13: #{local_block_forward.1} parent=11 // pred_check
          %p289 = pneg %p78
        $region14: #{local_block_forward.1} parent=11 // pred_check_branch
          %291 = sbr.rel (%p289) target = $region16
        $region15: #{local_block_forward.1} parent=11 // pred_region
          _
        $region16: #{local_block_forward.1} parent=11 // pred_fallthru
          _
        // Predicated region
        $region17: #{local_block_forward.1} parent=11 // pred_check
          %p292 = pneg %p99
        $region18: #{local_block_forward.1} parent=11 // pred_check_branch
          %294 = sbr.rel (%p292) target = $region20
        $region19: #{local_block_forward.1} parent=11 // pred_region
          _
        $region20: #{local_block_forward.1} parent=11 // pred_fallthru
          _
        // Predicated region
        $region21: #{local_block_forward.1} parent=11 // pred_check
          %p295 = pneg %p120
        $region22: #{local_block_forward.1} parent=11 // pred_check_branch
          %297 = sbr.rel (%p295) target = $region24
        $region23: #{local_block_forward.1} parent=11 // pred_region
          _
        $region24: #{local_block_forward.1} parent=11 // pred_fallthru
          _
        // Predicated region
        $region25: #{local_block_forward.1} parent=11 // pred_check
          %p298 = pneg %p141
        $region26: #{local_block_forward.1} parent=11 // pred_check_branch
          %300 = sbr.rel (%p298) target = $region28
        $region27: #{local_block_forward.1} parent=11 // pred_region
          _
        $region28: #{local_block_forward.1} parent=11 // pred_fallthru
          _
        // Predicated region
        $region29: #{local_block_forward.1} parent=11 // pred_check
          %p301 = pneg %p162
        $region30: #{local_block_forward.1} parent=11 // pred_check_branch
          %303 = sbr.rel (%p301) target = $region32
        $region31: #{local_block_forward.1} parent=11 // pred_region
          _
        $region32: #{local_block_forward.1} parent=11 // pred_fallthru
          _
        // Predicated region
        $region33: #{local_block_forward.1} parent=11 // pred_check
          %p304 = pneg %p183
        $region34: #{local_block_forward.1} parent=11 // pred_check_branch
          %306 = sbr.rel (%p304) target = $region36
        $region35: #{local_block_forward.1} parent=11 // pred_region
          _
        $region36: #{local_block_forward.1} parent=11 // pred_fallthru
          _
        // Predicated region
        $region37: #{local_block_forward.1} parent=11 // pred_check
          %p307 = pneg %p204
        $region38: #{local_block_forward.1} parent=11 // pred_check_branch
          %309 = sbr.rel (%p307) target = $region40
        $region39: #{local_block_forward.1} parent=11 // pred_region
          _
        $region40: #{local_block_forward.1} parent=11 // pred_fallthru
          _
        // Predicated region
        $region41: #{local_block_forward.1} parent=11 // pred_check
          %p310 = pneg %p225
        $region42: #{local_block_forward.1} parent=11 // pred_check_branch
          %312 = sbr.rel (%p310) target = $region44
        $region43: #{local_block_forward.1} parent=11 // pred_region
          _
        $region44: #{local_block_forward.1} parent=11 // pred_fallthru
          _
        // Predicated region
        $region45: #{local_block_forward.1} parent=11 // pred_check
          %p313 = pneg %p246
        $region46: #{local_block_forward.1} parent=11 // pred_check_branch
          %315 = sbr.rel (%p313) target = $region48
        $region47: #{local_block_forward.1} parent=11 // pred_region
          _
        $region48: #{local_block_forward.1} parent=11 // pred_fallthru
          _
      $region12: #{local_block_forward.1} parent=5 // pred_fallthru
        _
      %p316 = scmp.lt.s32.totalorder %s19, 4
      // Predicated region
      $region49: #{local_block_forward.1} parent=5 // pred_check
        %p317 = pneg %p316
      $region50: #{local_block_forward.1} parent=5 // pred_check_branch
        %319 = sbr.rel (%p317) target = $region52
      $region51: #{local_block_forward.1} parent=5 // pred_region
        // Predicated region
        $region53: #{local_block_forward.1} parent=51 // pred_check
          %p320 = pneg %p51
        $region54: #{local_block_forward.1} parent=51 // pred_check_branch
          %322 = sbr.rel (%p320) target = $region56
        $region55: #{local_block_forward.1} parent=51 // pred_region
          %p323 = scmp.lt.s32.totalorder %s26, 1
          %s324 = scalar_select %p323, %s26, 1
          %s325 = smul.addr %s324, 32
          %s326 = smul.addr %s325, 8
          %s327 = scalar_lea.vmem %s0, %s326
        $region56: #{local_block_forward.1} parent=51 // pred_fallthru
          _
      $region52: #{local_block_forward.1} parent=5 // pred_fallthru
        _
      %p328 = scmp.le.s32.totalorder 1, %s19
      %p329 = scmp.lt.s32.totalorder %s19, 5
      %p330 = pnand %p328, %p329
      %p331 = pneg %p330
      // Predicated region
      $region57: #{local_block_forward.1} parent=5 // pred_check
        _
      $region58: #{local_block_forward.1} parent=5 // pred_check_branch
        %333 = sbr.rel (%p330) target = $region60
      $region59: #{local_block_forward.1} parent=5 // pred_region
        %s334 = ssub.s32 %s19, 1
        %p335 = scmp.lt.s32.totalorder %s28, 1
        %s336 = scalar_select %p335, %s28, 1
        %s337 = smul.addr %s336, 32
        %s338 = smul.addr %s337, 8
        %s339 = scalar_lea.vmem %s0, %s338
        %p340 = pneg %p57
        %p341 = pneg %p54
        %p342 = pneg %p78
        %p343 = pneg %p75
        %p344 = pneg %p99
        %p345 = pneg %p96
        %p346 = pneg %p120
        %p347 = pneg %p117
        %p348 = pneg %p141
        %p349 = pneg %p138
        %p350 = pneg %p162
        %p351 = pneg %p159
        %p352 = pneg %p183
        %p353 = pneg %p180
        %p354 = pneg %p204
        %p355 = pneg %p201
        %p356 = pneg %p225
        %p357 = pneg %p222
        %p358 = pneg %p246
        %p359 = pneg %p243
        %p360 = pneg %p274
        %p361 = pneg %p271
        %s362 = sand.u32 %s261, 1
        %s363 = scalar_lea.sflag [#allocation4], %s362
        %s364 = sand.u32 %s261, 1
        %s365 = smul.addr %s364, 128
        %s366 = scalar_lea.vmem [#allocation3], %s365
        %p367 = scmp.lt.s32.totalorder %s28, 1
        %s368 = scalar_select %p367, %s28, 1
        %s369 = smul.addr %s368, 32
        %s370 = smul.addr %s369, 8
        %s371 = scalar_lea.vmem %s0, %s370
        %s372 = smul.u32 8, %s29
        %s374 = smul.u32 %s29, 8
        %p375 = scmp.eq.s32.totalorder %s29, 0
        // Predicated region
        $region61: #{local_block_forward.1} parent=59 // pred_check
          %p376 = pneg %p375
        $region62: #{local_block_forward.1} parent=59 // pred_check_branch
          %378 = sbr.rel (%p376) target = $region64
        $region63: #{local_block_forward.1} parent=59 // pred_region
          %379 = vst [vmem:[#allocation2] sm:$0xff] 0.0
          %380 = vst [vmem:[#allocation2 + $0x8] sm:$0xff] 0.0
          %381 = vst [vmem:[#allocation2 + $0x10] sm:$0x7f] 0.0
          %382 = vst [vmem:[#allocation2 + $0x18] sm:$0xff] 0.0
          %383 = vst [vmem:[#allocation2 + $0x20] sm:$0xff] 0.0
          %384 = vst [vmem:[#allocation2 + $0x28] sm:$0x7f] 0.0
          %385 = vst [vmem:[#allocation2 + $0x30] sm:$0xff] 0.0
          %386 = vst [vmem:[#allocation2 + $0x38] sm:$0xff] 0.0
          %387 = vst [vmem:[#allocation2 + $0x40] sm:$0x7f] 0.0
          %388 = vst [vmem:[#allocation2 + $0x48] sm:$0xff] 0.0
          %389 = vst [vmem:[#allocation2 + $0x50] sm:$0xff] 0.0
          %390 = vst [vmem:[#allocation2 + $0x58] sm:$0x7f] 0.0
          %391 = vst [vmem:[#allocation2 + $0x60] sm:$0xff] 0.0
          %392 = vst [vmem:[#allocation2 + $0x68] sm:$0xff] 0.0
          %393 = vst [vmem:[#allocation2 + $0x70] sm:$0x7f] 0.0
          %394 = vst [vmem:[#allocation2 + $0x78] sm:$0xff] 0.0
          %395 = vst [vmem:[#allocation2 + $0x80] sm:$0xff] 0.0
          %396 = vst [vmem:[#allocation2 + $0x88] sm:$0x7f] 0.0
          %397 = vst [vmem:[#allocation2 + $0x90] sm:$0xff] 0.0
          %398 = vst [vmem:[#allocation2 + $0x98] sm:$0xff] 0.0
          %399 = vst [vmem:[#allocation2 + $0xa0] sm:$0x7f] 0.0
          %400 = vst [vmem:[#allocation2 + $0xa8] sm:$0xff] 0.0
          %401 = vst [vmem:[#allocation2 + $0xb0] sm:$0xff] 0.0
          %402 = vst [vmem:[#allocation2 + $0xb8] sm:$0x7f] 0.0
          %403 = vst [vmem:[#allocation2 + $0xc0] sm:$0xff] 0.0
          %404 = vst [vmem:[#allocation2 + $0xc8] sm:$0xff] 0.0
          %405 = vst [vmem:[#allocation2 + $0xd0] sm:$0x7f] 0.0
          %406 = vst [vmem:[#allocation2 + $0xd8] sm:$0xff] 0.0
          %407 = vst [vmem:[#allocation2 + $0xe0] sm:$0xff] 0.0
          %408 = vst [vmem:[#allocation2 + $0xe8] sm:$0x7f] 0.0
          %409 = vst [vmem:[#allocation2 + $0xf0] sm:$0xff] 0.0
          %410 = vst [vmem:[#allocation2 + $0xf8] sm:$0xff] 0.0
          %411 = vst [vmem:[#allocation2 + $0x100] sm:$0x7f] 0.0
          %412 = vst [vmem:[#allocation2 + $0x108] sm:$0xff] 0.0
          %413 = vst [vmem:[#allocation2 + $0x110] sm:$0xff] 0.0
          %414 = vst [vmem:[#allocation2 + $0x118] sm:$0x7f] 0.0
          %415 = vst [vmem:[#allocation2 + $0x120] sm:$0xff] 0.0
          %416 = vst [vmem:[#allocation2 + $0x128] sm:$0xff] 0.0
          %417 = vst [vmem:[#allocation2 + $0x130] sm:$0x7f] 0.0
          %418 = vst [vmem:[#allocation2 + $0x138] sm:$0xff] 0.0
          %419 = vst [vmem:[#allocation2 + $0x140] sm:$0xff] 0.0
          %420 = vst [vmem:[#allocation2 + $0x148] sm:$0x7f] 0.0
          %421 = vst [vmem:[#allocation2 + $0x150] sm:$0xff] 0.0
          %422 = vst [vmem:[#allocation2 + $0x158] sm:$0xff] 0.0
          %423 = vst [vmem:[#allocation2 + $0x160] sm:$0x7f] 0.0
          %424 = vst [vmem:[#allocation2 + $0x168] sm:$0xff] 0.0
          %425 = vst [vmem:[#allocation2 + $0x170] sm:$0xff] 0.0
          %426 = vst [vmem:[#allocation2 + $0x178] sm:$0x7f] 0.0
          %427 = vst [vmem:[#allocation2 + $0x180] sm:$0xff] 0.0
          %428 = vst [vmem:[#allocation2 + $0x188] sm:$0xff] 0.0
          %429 = vst [vmem:[#allocation2 + $0x190] sm:$0x7f] 0.0
          %430 = vst [vmem:[#allocation2 + $0x198] sm:$0xff] 0.0
          %431 = vst [vmem:[#allocation2 + $0x1a0] sm:$0xff] 0.0
          %432 = vst [vmem:[#allocation2 + $0x1a8] sm:$0x7f] 0.0
          %433 = vst [vmem:[#allocation2 + $0x1b0] sm:$0xff] 0.0
          %434 = vst [vmem:[#allocation2 + $0x1b8] sm:$0xff] 0.0
          %435 = vst [vmem:[#allocation2 + $0x1c0] sm:$0x7f] 0.0
          %436 = vst [vmem:[#allocation2 + $0x1c8] sm:$0xff] 0.0
          %437 = vst [vmem:[#allocation2 + $0x1d0] sm:$0xff] 0.0
          %438 = vst [vmem:[#allocation2 + $0x1d8] sm:$0x7f] 0.0
          %439 = vst [vmem:[#allocation2 + $0x1e0] sm:$0xff] 0.0
          %440 = vst [vmem:[#allocation2 + $0x1e8] sm:$0xff] 0.0
          %441 = vst [vmem:[#allocation2 + $0x1f0] sm:$0x7f] 0.0
          %442 = vst [vmem:[#allocation2 + $0x1f8] sm:$0xff] 0.0
          %443 = vst [vmem:[#allocation2 + $0x200] sm:$0xff] 0.0
          %444 = vst [vmem:[#allocation2 + $0x208] sm:$0x7f] 0.0
          %445 = vst [vmem:[#allocation2 + $0x210] sm:$0xff] 0.0
          %446 = vst [vmem:[#allocation2 + $0x218] sm:$0xff] 0.0
          %447 = vst [vmem:[#allocation2 + $0x220] sm:$0x7f] 0.0
          %v448 = vld [vmem:[%s371] sm:$0xff]
          %v449 = vld [vmem:[%s371 + $0x8] sm:$0xff]
          %v450 = vld [vmem:[%s371 + $0x10] sm:$0xff]
          %v451 = vld [vmem:[%s371 + $0x18] sm:$0xff]
          %v452 = vld [vmem:[%s371 + $0x20] sm:$0xff]
          %v453 = vld [vmem:[%s371 + $0x28] sm:$0xff]
          %v454 = vld [vmem:[%s371 + $0x30] sm:$0xff]
          %v455 = vld [vmem:[%s371 + $0x38] sm:$0xff]
          %v456 = vld [vmem:[%s371 + $0x40] sm:$0xff]
          %v457 = vld [vmem:[%s371 + $0x48] sm:$0xff]
          %v458 = vld [vmem:[%s371 + $0x50] sm:$0xff]
          %v459 = vld [vmem:[%s371 + $0x58] sm:$0xff]
          %v460 = vld [vmem:[%s371 + $0x60] sm:$0xff]
          %v461 = vld [vmem:[%s371 + $0x68] sm:$0xff]
          %v462 = vld [vmem:[%s371 + $0x70] sm:$0xff]
          %v463 = vld [vmem:[%s371 + $0x78] sm:$0xff]
          %v464 = vld [vmem:[%s371 + $0x80] sm:$0xff]
          %v465 = vld [vmem:[%s371 + $0x88] sm:$0xff]
          %v466 = vld [vmem:[%s371 + $0x90] sm:$0xff]
          %v467 = vld [vmem:[%s371 + $0x98] sm:$0xff]
          %v468 = vld [vmem:[%s371 + $0xa0] sm:$0xff]
          %v469 = vld [vmem:[%s371 + $0xa8] sm:$0xff]
          %v470 = vld [vmem:[%s371 + $0xb0] sm:$0xff]
          %v471 = vld [vmem:[%s371 + $0xb8] sm:$0xff]
          %v472 = vld [vmem:[%s371 + $0xc0] sm:$0xff]
          %v473 = vld [vmem:[%s371 + $0xc8] sm:$0xff]
          %v474 = vld [vmem:[%s371 + $0xd0] sm:$0xff]
          %v475 = vld [vmem:[%s371 + $0xd8] sm:$0xff]
          %v476 = vld [vmem:[%s371 + $0xe0] sm:$0xff]
          %v477 = vld [vmem:[%s371 + $0xe8] sm:$0xff]
          %v478 = vld [vmem:[%s371 + $0xf0] sm:$0xff]
          %v479 = vld [vmem:[%s371 + $0xf8] sm:$0xff]
          %v480 = vld [vmem:[%s1] sm:$0x1]
          %v482 = vlaneseq
          %v483 = vshrl.u32 %v482, 7
          %v484 = vsub.s32 0, %v483
          %v485 = vrot.slane %v480, %v484
          %v487 = vmul.f32 %v448, %v485
          %v488 = vmul.f32 %v449, %v485
          %v489 = vmul.f32 %v450, %v485
          %v490 = vmul.f32 %v451, %v485
          %v491 = vmul.f32 %v452, %v485
          %v492 = vmul.f32 %v453, %v485
          %v493 = vmul.f32 %v454, %v485
          %v494 = vmul.f32 %v455, %v485
          %v495 = vmul.f32 %v456, %v485
          %v496 = vmul.f32 %v457, %v485
          %v497 = vmul.f32 %v458, %v485
          %v498 = vmul.f32 %v459, %v485
          %v499 = vmul.f32 %v460, %v485
          %v500 = vmul.f32 %v461, %v485
          %v501 = vmul.f32 %v462, %v485
          %v502 = vmul.f32 %v463, %v485
          %v503 = vmul.f32 %v464, %v485
          %v504 = vmul.f32 %v465, %v485
          %v505 = vmul.f32 %v466, %v485
          %v506 = vmul.f32 %v467, %v485
          %v507 = vmul.f32 %v468, %v485
          %v508 = vmul.f32 %v469, %v485
          %v509 = vmul.f32 %v470, %v485
          %v510 = vmul.f32 %v471, %v485
          %v511 = vmul.f32 %v472, %v485
          %v512 = vmul.f32 %v473, %v485
          %v513 = vmul.f32 %v474, %v485
          %v514 = vmul.f32 %v475, %v485
          %v515 = vmul.f32 %v476, %v485
          %v516 = vmul.f32 %v477, %v485
          %v517 = vmul.f32 %v478, %v485
          %v518 = vmul.f32 %v479, %v485
          %v519 = vld [vmem:[%s2] sm:$0x1]
          %v521 = vlaneseq
          %v522 = vshrl.u32 %v521, 7
          %v523 = vsub.s32 0, %v522
          %v524 = vrot.slane %v519, %v523
          %v526 = vadd.f32 %v487, %v524
          %v527 = vadd.f32 %v488, %v524
          %v528 = vadd.f32 %v489, %v524
          %v529 = vadd.f32 %v490, %v524
          %v530 = vadd.f32 %v491, %v524
          %v531 = vadd.f32 %v492, %v524
          %v532 = vadd.f32 %v493, %v524
          %v533 = vadd.f32 %v494, %v524
          %v534 = vadd.f32 %v495, %v524
          %v535 = vadd.f32 %v496, %v524
          %v536 = vadd.f32 %v497, %v524
          %v537 = vadd.f32 %v498, %v524
          %v538 = vadd.f32 %v499, %v524
          %v539 = vadd.f32 %v500, %v524
          %v540 = vadd.f32 %v501, %v524
          %v541 = vadd.f32 %v502, %v524
          %v542 = vadd.f32 %v503, %v524
          %v543 = vadd.f32 %v504, %v524
          %v544 = vadd.f32 %v505, %v524
          %v545 = vadd.f32 %v506, %v524
          %v546 = vadd.f32 %v507, %v524
          %v547 = vadd.f32 %v508, %v524
          %v548 = vadd.f32 %v509, %v524
          %v549 = vadd.f32 %v510, %v524
          %v550 = vadd.f32 %v511, %v524
          %v551 = vadd.f32 %v512, %v524
          %v552 = vadd.f32 %v513, %v524
          %v553 = vadd.f32 %v514, %v524
          %v554 = vadd.f32 %v515, %v524
          %v555 = vadd.f32 %v516, %v524
          %v556 = vadd.f32 %v517, %v524
          %v557 = vadd.f32 %v518, %v524
          %s558 = scalar_lea.vmem [#allocation2], 72
          %559 = vst [vmem:[%s558 + $0x3] sm:$0xff] %v526
          %560 = vst [vmem:[%s558 + $0xb] sm:$0xff] %v527
          %561 = vst [vmem:[%s558 + $0x1b] sm:$0xff] %v528
          %562 = vst [vmem:[%s558 + $0x23] sm:$0xff] %v529
          %563 = vst [vmem:[%s558 + $0x33] sm:$0xff] %v530
          %564 = vst [vmem:[%s558 + $0x3b] sm:$0xff] %v531
          %565 = vst [vmem:[%s558 + $0x4b] sm:$0xff] %v532
          %566 = vst [vmem:[%s558 + $0x53] sm:$0xff] %v533
          %567 = vst [vmem:[%s558 + $0x63] sm:$0xff] %v534
          %568 = vst [vmem:[%s558 + $0x6b] sm:$0xff] %v535
          %569 = vst [vmem:[%s558 + $0x7b] sm:$0xff] %v536
          %570 = vst [vmem:[%s558 + $0x83] sm:$0xff] %v537
          %571 = vst [vmem:[%s558 + $0x93] sm:$0xff] %v538
          %572 = vst [vmem:[%s558 + $0x9b] sm:$0xff] %v539
          %573 = vst [vmem:[%s558 + $0xab] sm:$0xff] %v540
          %574 = vst [vmem:[%s558 + $0xb3] sm:$0xff] %v541
          %575 = vst [vmem:[%s558 + $0xc3] sm:$0xff] %v542
          %576 = vst [vmem:[%s558 + $0xcb] sm:$0xff] %v543
          %577 = vst [vmem:[%s558 + $0xdb] sm:$0xff] %v544
          %578 = vst [vmem:[%s558 + $0xe3] sm:$0xff] %v545
          %579 = vst [vmem:[%s558 + $0xf3] sm:$0xff] %v546
          %580 = vst [vmem:[%s558 + $0xfb] sm:$0xff] %v547
          %581 = vst [vmem:[%s558 + $0x10b] sm:$0xff] %v548
          %582 = vst [vmem:[%s558 + $0x113] sm:$0xff] %v549
          %583 = vst [vmem:[%s558 + $0x123] sm:$0xff] %v550
          %584 = vst [vmem:[%s558 + $0x12b] sm:$0xff] %v551
          %585 = vst [vmem:[%s558 + $0x13b] sm:$0xff] %v552
          %586 = vst [vmem:[%s558 + $0x143] sm:$0xff] %v553
          %587 = vst [vmem:[%s558 + $0x153] sm:$0xff] %v554
          %588 = vst [vmem:[%s558 + $0x15b] sm:$0xff] %v555
          %589 = vst [vmem:[%s558 + $0x16b] sm:$0xff] %v556
          %590 = vst [vmem:[%s558 + $0x173] sm:$0xff] %v557
          %s591 = scalar_lea.vmem [#allocation2], 408
          %v592 = vld [vmem:[%s591 + $0x3] sm:$0xff]
          %v593 = vld [vmem:[%s591 + $0xb] sm:$0xff]
          %s594 = scalar_lea.vmem [#allocation2], 456
          %595 = vst [vmem:[%s594 + $0x3] sm:$0xff] %v592
          %596 = vst [vmem:[%s594 + $0xb] sm:$0xff] %v593
          %v597 = vld [vmem:[%s558 + $0x11] sm:$0x1]
          %v598 = vld [vmem:[%s558 + $0x29] sm:$0x1]
          %v599 = vld [vmem:[%s558 + $0x41] sm:$0x1]
          %v600 = vld [vmem:[%s558 + $0x59] sm:$0x1]
          %v601 = vld [vmem:[%s558 + $0x71] sm:$0x1]
          %v602 = vld [vmem:[%s558 + $0x89] sm:$0x1]
          %v603 = vld [vmem:[%s558 + $0xa1] sm:$0x1]
          %v604 = vld [vmem:[%s558 + $0xb9] sm:$0x1]
          %v605 = vld [vmem:[%s558 + $0xd1] sm:$0x1]
          %v606 = vld [vmem:[%s558 + $0xe9] sm:$0x1]
          %v607 = vld [vmem:[%s558 + $0x101] sm:$0x1]
          %v608 = vld [vmem:[%s558 + $0x119] sm:$0x1]
          %v609 = vld [vmem:[%s558 + $0x131] sm:$0x1]
          %v610 = vld [vmem:[%s558 + $0x149] sm:$0x1]
          %v611 = vld [vmem:[%s558 + $0x161] sm:$0x1]
          %v612 = vld [vmem:[%s558 + $0x179] sm:$0x1]
          %v613 = vld [vmem:[%s558 + $0x191] sm:$0x1]
          %614 = vst [vmem:[%s558 + $0x13] sm:$0x1] %v597
          %615 = vst [vmem:[%s558 + $0x2b] sm:$0x1] %v598
          %616 = vst [vmem:[%s558 + $0x43] sm:$0x1] %v599
          %617 = vst [vmem:[%s558 + $0x5b] sm:$0x1] %v600
          %618 = vst [vmem:[%s558 + $0x73] sm:$0x1] %v601
          %619 = vst [vmem:[%s558 + $0x8b] sm:$0x1] %v602
          %620 = vst [vmem:[%s558 + $0xa3] sm:$0x1] %v603
          %621 = vst [vmem:[%s558 + $0xbb] sm:$0x1] %v604
          %622 = vst [vmem:[%s558 + $0xd3] sm:$0x1] %v605
          %623 = vst [vmem:[%s558 + $0xeb] sm:$0x1] %v606
          %624 = vst [vmem:[%s558 + $0x103] sm:$0x1] %v607
          %625 = vst [vmem:[%s558 + $0x11b] sm:$0x1] %v608
          %626 = vst [vmem:[%s558 + $0x133] sm:$0x1] %v609
          %627 = vst [vmem:[%s558 + $0x14b] sm:$0x1] %v610
          %628 = vst [vmem:[%s558 + $0x163] sm:$0x1] %v611
          %629 = vst [vmem:[%s558 + $0x17b] sm:$0x1] %v612
          %630 = vst [vmem:[%s558 + $0x193] sm:$0x1] %v613
        $region64: #{local_block_forward.1} parent=59 // pred_fallthru
          _
        %s631 = smul.u32 %s374, 24
        %s632 = scalar_lea.vmem [#allocation2], %s631
        %v633 = vld [vmem:[%s632] sm:$0xff]
        %v634 = vld [vmem:[%s632 + $0x8] sm:$0xff]
        %v635 = vld [vmem:[%s632 + $0x18] sm:$0xff]
        %v636 = vld [vmem:[%s632 + $0x20] sm:$0xff]
        %v637 = vld [vmem:[%s632 + $0x30] sm:$0xff]
        %v638 = vld [vmem:[%s632 + $0x38] sm:$0xff]
        %v639 = vld [vmem:[%s632 + $0x48] sm:$0xff]
        %v640 = vld [vmem:[%s632 + $0x50] sm:$0xff]
        %v641 = vld [vmem:[%s632 + $0x60] sm:$0xff]
        %v642 = vld [vmem:[%s632 + $0x68] sm:$0xff]
        %v643 = vld [vmem:[%s632 + $0x78] sm:$0xff]
        %v644 = vld [vmem:[%s632 + $0x80] sm:$0xff]
        %v645 = vld [vmem:[%s632 + $0x90] sm:$0xff]
        %v646 = vld [vmem:[%s632 + $0x98] sm:$0xff]
        %v647 = vld [vmem:[%s632 + $0xa8] sm:$0xff]
        %v648 = vld [vmem:[%s632 + $0xb0] sm:$0xff]
        %v649 = vld [vmem:[%s632 + $0xc0] sm:$0xff]
        %v650 = vld [vmem:[%s632 + $0xc8] sm:$0xff]
        %v651 = vld [vmem:[%s632 + $0xd8] sm:$0xff]
        %v652 = vld [vmem:[%s632 + $0xe0] sm:$0xff]
        %v653 = vld [vmem:[%s632 + $0xf0] sm:$0xff]
        %v654 = vld [vmem:[%s632 + $0xf8] sm:$0xff]
        %v655 = vld [vmem:[%s632 + $0x108] sm:$0xff]
        %v656 = vld [vmem:[%s632 + $0x110] sm:$0xff]
        %v657 = vld [vmem:[%s632 + $0x120] sm:$0xff]
        %v658 = vld [vmem:[%s632 + $0x128] sm:$0xff]
        %v659 = vld [vmem:[%s632 + $0x138] sm:$0xff]
        %v660 = vld [vmem:[%s632 + $0x140] sm:$0xff]
        %v661 = vld [vmem:[%s632 + $0x150] sm:$0xff]
        %v662 = vld [vmem:[%s632 + $0x158] sm:$0xff]
        %v663 = vld [vmem:[%s3] sm:$0xff]
        %v664 = vlaneseq
        %v665 = vshrl.u32 %v664, 7
        %v666 = vsub.s32 0, %v665
        %v667 = vrot.slane %v663, %v666
        %v668 = vmul.f32 %v633, %v667
        %v669 = vmul.f32 %v634, %v667
        %v670 = vmul.f32 %v635, %v667
        %v671 = vmul.f32 %v636, %v667
        %v672 = vmul.f32 %v637, %v667
        %v673 = vmul.f32 %v638, %v667
        %v674 = vmul.f32 %v639, %v667
        %v675 = vmul.f32 %v640, %v667
        %v676 = vmul.f32 %v641, %v667
        %v677 = vmul.f32 %v642, %v667
        %v678 = vmul.f32 %v643, %v667
        %v679 = vmul.f32 %v644, %v667
        %v680 = vmul.f32 %v645, %v667
        %v681 = vmul.f32 %v646, %v667
        %v682 = vmul.f32 %v647, %v667
        %v683 = vmul.f32 %v648, %v667
        %v684 = vadd.f32 %v668, 0.0
        %v685 = vadd.f32 %v669, 0.0
        %v686 = vadd.f32 %v670, 0.0
        %v687 = vadd.f32 %v671, 0.0
        %v688 = vadd.f32 %v672, 0.0
        %v689 = vadd.f32 %v673, 0.0
        %v690 = vadd.f32 %v674, 0.0
        %v691 = vadd.f32 %v675, 0.0
        %v692 = vadd.f32 %v676, 0.0
        %v693 = vadd.f32 %v677, 0.0
        %v694 = vadd.f32 %v678, 0.0
        %v695 = vadd.f32 %v679, 0.0
        %v696 = vadd.f32 %v680, 0.0
        %v697 = vadd.f32 %v681, 0.0
        %v698 = vadd.f32 %v682, 0.0
        %v699 = vadd.f32 %v683, 0.0
        %v700 = vlaneseq
        %v701 = vshrl.u32 %v700, 7
        %v702 = vsub.s32 1, %v701
        %v703 = vrot.slane %v663, %v702
        %v704 = vmul.f32 %v635, %v703
        %v705 = vmul.f32 %v636, %v703
        %v706 = vmul.f32 %v637, %v703
        %v707 = vmul.f32 %v638, %v703
        %v708 = vmul.f32 %v639, %v703
        %v709 = vmul.f32 %v640, %v703
        %v710 = vmul.f32 %v641, %v703
        %v711 = vmul.f32 %v642, %v703
        %v712 = vmul.f32 %v643, %v703
        %v713 = vmul.f32 %v644, %v703
        %v714 = vmul.f32 %v645, %v703
        %v715 = vmul.f32 %v646, %v703
        %v716 = vmul.f32 %v647, %v703
        %v717 = vmul.f32 %v648, %v703
        %v718 = vmul.f32 %v649, %v703
        %v719 = vmul.f32 %v650, %v703
        %v720 = vadd.f32 %v684, %v704
        %v721 = vadd.f32 %v685, %v705
        %v722 = vadd.f32 %v686, %v706
        %v723 = vadd.f32 %v687, %v707
        %v724 = vadd.f32 %v688, %v708
        %v725 = vadd.f32 %v689, %v709
        %v726 = vadd.f32 %v690, %v710
        %v727 = vadd.f32 %v691, %v711
        %v728 = vadd.f32 %v692, %v712
        %v729 = vadd.f32 %v693, %v713
        %v730 = vadd.f32 %v694, %v714
        %v731 = vadd.f32 %v695, %v715
        %v732 = vadd.f32 %v696, %v716
        %v733 = vadd.f32 %v697, %v717
        %v734 = vadd.f32 %v698, %v718
        %v735 = vadd.f32 %v699, %v719
        %v736 = vlaneseq
        %v737 = vshrl.u32 %v736, 7
        %v738 = vsub.s32 2, %v737
        %v739 = vrot.slane %v663, %v738
        %v740 = vmul.f32 %v637, %v739
        %v741 = vmul.f32 %v638, %v739
        %v742 = vmul.f32 %v639, %v739
        %v743 = vmul.f32 %v640, %v739
        %v744 = vmul.f32 %v641, %v739
        %v745 = vmul.f32 %v642, %v739
        %v746 = vmul.f32 %v643, %v739
        %v747 = vmul.f32 %v644, %v739
        %v748 = vmul.f32 %v645, %v739
        %v749 = vmul.f32 %v646, %v739
        %v750 = vmul.f32 %v647, %v739
        %v751 = vmul.f32 %v648, %v739
        %v752 = vmul.f32 %v649, %v739
        %v753 = vmul.f32 %v650, %v739
        %v754 = vmul.f32 %v651, %v739
        %v755 = vmul.f32 %v652, %v739
        %v756 = vadd.f32 %v720, %v740
        %v757 = vadd.f32 %v721, %v741
        %v758 = vadd.f32 %v722, %v742
        %v759 = vadd.f32 %v723, %v743
        %v760 = vadd.f32 %v724, %v744
        %v761 = vadd.f32 %v725, %v745
        %v762 = vadd.f32 %v726, %v746
        %v763 = vadd.f32 %v727, %v747
        %v764 = vadd.f32 %v728, %v748
        %v765 = vadd.f32 %v729, %v749
        %v766 = vadd.f32 %v730, %v750
        %v767 = vadd.f32 %v731, %v751
        %v768 = vadd.f32 %v732, %v752
        %v769 = vadd.f32 %v733, %v753
        %v770 = vadd.f32 %v734, %v754
        %v771 = vadd.f32 %v735, %v755
        %v772 = vlaneseq
        %v773 = vshrl.u32 %v772, 7
        %v774 = vsub.s32 3, %v773
        %v775 = vrot.slane %v663, %v774
        %v776 = vmul.f32 %v639, %v775
        %v777 = vmul.f32 %v640, %v775
        %v778 = vmul.f32 %v641, %v775
        %v779 = vmul.f32 %v642, %v775
        %v780 = vmul.f32 %v643, %v775
        %v781 = vmul.f32 %v644, %v775
        %v782 = vmul.f32 %v645, %v775
        %v783 = vmul.f32 %v646, %v775
        %v784 = vmul.f32 %v647, %v775
        %v785 = vmul.f32 %v648, %v775
        %v786 = vmul.f32 %v649, %v775
        %v787 = vmul.f32 %v650, %v775
        %v788 = vmul.f32 %v651, %v775
        %v789 = vmul.f32 %v652, %v775
        %v790 = vmul.f32 %v653, %v775
        %v791 = vmul.f32 %v654, %v775
        %v792 = vadd.f32 %v756, %v776
        %v793 = vadd.f32 %v757, %v777
        %v794 = vadd.f32 %v758, %v778
        %v795 = vadd.f32 %v759, %v779
        %v796 = vadd.f32 %v760, %v780
        %v797 = vadd.f32 %v761, %v781
        %v798 = vadd.f32 %v762, %v782
        %v799 = vadd.f32 %v763, %v783
        %v800 = vadd.f32 %v764, %v784
        %v801 = vadd.f32 %v765, %v785
        %v802 = vadd.f32 %v766, %v786
        %v803 = vadd.f32 %v767, %v787
        %v804 = vadd.f32 %v768, %v788
        %v805 = vadd.f32 %v769, %v789
        %v806 = vadd.f32 %v770, %v790
        %v807 = vadd.f32 %v771, %v791
        %v808 = vlaneseq
        %v809 = vshrl.u32 %v808, 7
        %v810 = vsub.s32 4, %v809
        %v811 = vrot.slane %v663, %v810
        %v812 = vmul.f32 %v641, %v811
        %v813 = vmul.f32 %v642, %v811
        %v814 = vmul.f32 %v643, %v811
        %v815 = vmul.f32 %v644, %v811
        %v816 = vmul.f32 %v645, %v811
        %v817 = vmul.f32 %v646, %v811
        %v818 = vmul.f32 %v647, %v811
        %v819 = vmul.f32 %v648, %v811
        %v820 = vmul.f32 %v649, %v811
        %v821 = vmul.f32 %v650, %v811
        %v822 = vmul.f32 %v651, %v811
        %v823 = vmul.f32 %v652, %v811
        %v824 = vmul.f32 %v653, %v811
        %v825 = vmul.f32 %v654, %v811
        %v826 = vmul.f32 %v655, %v811
        %v827 = vmul.f32 %v656, %v811
        %v828 = vadd.f32 %v792, %v812
        %v829 = vadd.f32 %v793, %v813
        %v830 = vadd.f32 %v794, %v814
        %v831 = vadd.f32 %v795, %v815
        %v832 = vadd.f32 %v796, %v816
        %v833 = vadd.f32 %v797, %v817
        %v834 = vadd.f32 %v798, %v818
        %v835 = vadd.f32 %v799, %v819
        %v836 = vadd.f32 %v800, %v820
        %v837 = vadd.f32 %v801, %v821
        %v838 = vadd.f32 %v802, %v822
        %v839 = vadd.f32 %v803, %v823
        %v840 = vadd.f32 %v804, %v824
        %v841 = vadd.f32 %v805, %v825
        %v842 = vadd.f32 %v806, %v826
        %v843 = vadd.f32 %v807, %v827
        %v844 = vlaneseq
        %v845 = vshrl.u32 %v844, 7
        %v846 = vsub.s32 5, %v845
        %v847 = vrot.slane %v663, %v846
        %v848 = vmul.f32 %v643, %v847
        %v849 = vmul.f32 %v644, %v847
        %v850 = vmul.f32 %v645, %v847
        %v851 = vmul.f32 %v646, %v847
        %v852 = vmul.f32 %v647, %v847
        %v853 = vmul.f32 %v648, %v847
        %v854 = vmul.f32 %v649, %v847
        %v855 = vmul.f32 %v650, %v847
        %v856 = vmul.f32 %v651, %v847
        %v857 = vmul.f32 %v652, %v847
        %v858 = vmul.f32 %v653, %v847
        %v859 = vmul.f32 %v654, %v847
        %v860 = vmul.f32 %v655, %v847
        %v861 = vmul.f32 %v656, %v847
        %v862 = vmul.f32 %v657, %v847
        %v863 = vmul.f32 %v658, %v847
        %v864 = vadd.f32 %v828, %v848
        %v865 = vadd.f32 %v829, %v849
        %v866 = vadd.f32 %v830, %v850
        %v867 = vadd.f32 %v831, %v851
        %v868 = vadd.f32 %v832, %v852
        %v869 = vadd.f32 %v833, %v853
        %v870 = vadd.f32 %v834, %v854
        %v871 = vadd.f32 %v835, %v855
        %v872 = vadd.f32 %v836, %v856
        %v873 = vadd.f32 %v837, %v857
        %v874 = vadd.f32 %v838, %v858
        %v875 = vadd.f32 %v839, %v859
        %v876 = vadd.f32 %v840, %v860
        %v877 = vadd.f32 %v841, %v861
        %v878 = vadd.f32 %v842, %v862
        %v879 = vadd.f32 %v843, %v863
        %v880 = vlaneseq
        %v881 = vshrl.u32 %v880, 7
        %v882 = vsub.s32 6, %v881
        %v883 = vrot.slane %v663, %v882
        %v884 = vmul.f32 %v645, %v883
        %v885 = vmul.f32 %v646, %v883
        %v886 = vmul.f32 %v647, %v883
        %v887 = vmul.f32 %v648, %v883
        %v888 = vmul.f32 %v649, %v883
        %v889 = vmul.f32 %v650, %v883
        %v890 = vmul.f32 %v651, %v883
        %v891 = vmul.f32 %v652, %v883
        %v892 = vmul.f32 %v653, %v883
        %v893 = vmul.f32 %v654, %v883
        %v894 = vmul.f32 %v655, %v883
        %v895 = vmul.f32 %v656, %v883
        %v896 = vmul.f32 %v657, %v883
        %v897 = vmul.f32 %v658, %v883
        %v898 = vmul.f32 %v659, %v883
        %v899 = vmul.f32 %v660, %v883
        %v900 = vadd.f32 %v864, %v884
        %v901 = vadd.f32 %v865, %v885
        %v902 = vadd.f32 %v866, %v886
        %v903 = vadd.f32 %v867, %v887
        %v904 = vadd.f32 %v868, %v888
        %v905 = vadd.f32 %v869, %v889
        %v906 = vadd.f32 %v870, %v890
        %v907 = vadd.f32 %v871, %v891
        %v908 = vadd.f32 %v872, %v892
        %v909 = vadd.f32 %v873, %v893
        %v910 = vadd.f32 %v874, %v894
        %v911 = vadd.f32 %v875, %v895
        %v912 = vadd.f32 %v876, %v896
        %v913 = vadd.f32 %v877, %v897
        %v914 = vadd.f32 %v878, %v898
        %v915 = vadd.f32 %v879, %v899
        %v916 = vlaneseq
        %v917 = vshrl.u32 %v916, 7
        %v918 = vsub.s32 7, %v917
        %v919 = vrot.slane %v663, %v918
        %v920 = vmul.f32 %v647, %v919
        %v921 = vmul.f32 %v648, %v919
        %v922 = vmul.f32 %v649, %v919
        %v923 = vmul.f32 %v650, %v919
        %v924 = vmul.f32 %v651, %v919
        %v925 = vmul.f32 %v652, %v919
        %v926 = vmul.f32 %v653, %v919
        %v927 = vmul.f32 %v654, %v919
        %v928 = vmul.f32 %v655, %v919
        %v929 = vmul.f32 %v656, %v919
        %v930 = vmul.f32 %v657, %v919
        %v931 = vmul.f32 %v658, %v919
        %v932 = vmul.f32 %v659, %v919
        %v933 = vmul.f32 %v660, %v919
        %v934 = vmul.f32 %v661, %v919
        %v935 = vmul.f32 %v662, %v919
        %v936 = vadd.f32 %v900, %v920
        %v937 = vadd.f32 %v901, %v921
        %v938 = vadd.f32 %v902, %v922
        %v939 = vadd.f32 %v903, %v923
        %v940 = vadd.f32 %v904, %v924
        %v941 = vadd.f32 %v905, %v925
        %v942 = vadd.f32 %v906, %v926
        %v943 = vadd.f32 %v907, %v927
        %v944 = vadd.f32 %v908, %v928
        %v945 = vadd.f32 %v909, %v929
        %v946 = vadd.f32 %v910, %v930
        %v947 = vadd.f32 %v911, %v931
        %v948 = vadd.f32 %v912, %v932
        %v949 = vadd.f32 %v913, %v933
        %v950 = vadd.f32 %v914, %v934
        %v951 = vadd.f32 %v915, %v935
        %v952 = vld [vmem:[%s632 + $0x1] sm:$0xff]
        %v953 = vld [vmem:[%s632 + $0x9] sm:$0xff]
        %v954 = vld [vmem:[%s632 + $0x19] sm:$0xff]
        %v955 = vld [vmem:[%s632 + $0x21] sm:$0xff]
        %v956 = vld [vmem:[%s632 + $0x31] sm:$0xff]
        %v957 = vld [vmem:[%s632 + $0x39] sm:$0xff]
        %v958 = vld [vmem:[%s632 + $0x49] sm:$0xff]
        %v959 = vld [vmem:[%s632 + $0x51] sm:$0xff]
        %v960 = vld [vmem:[%s632 + $0x61] sm:$0xff]
        %v961 = vld [vmem:[%s632 + $0x69] sm:$0xff]
        %v962 = vld [vmem:[%s632 + $0x79] sm:$0xff]
        %v963 = vld [vmem:[%s632 + $0x81] sm:$0xff]
        %v964 = vld [vmem:[%s632 + $0x91] sm:$0xff]
        %v965 = vld [vmem:[%s632 + $0x99] sm:$0xff]
        %v966 = vld [vmem:[%s632 + $0xa9] sm:$0xff]
        %v967 = vld [vmem:[%s632 + $0xb1] sm:$0xff]
        %v968 = vld [vmem:[%s632 + $0xc1] sm:$0xff]
        %v969 = vld [vmem:[%s632 + $0xc9] sm:$0xff]
        %v970 = vld [vmem:[%s632 + $0xd9] sm:$0xff]
        %v971 = vld [vmem:[%s632 + $0xe1] sm:$0xff]
        %v972 = vld [vmem:[%s632 + $0xf1] sm:$0xff]
        %v973 = vld [vmem:[%s632 + $0xf9] sm:$0xff]
        %v974 = vld [vmem:[%s632 + $0x109] sm:$0xff]
        %v975 = vld [vmem:[%s632 + $0x111] sm:$0xff]
        %v976 = vld [vmem:[%s632 + $0x121] sm:$0xff]
        %v977 = vld [vmem:[%s632 + $0x129] sm:$0xff]
        %v978 = vld [vmem:[%s632 + $0x139] sm:$0xff]
        %v979 = vld [vmem:[%s632 + $0x141] sm:$0xff]
        %v980 = vld [vmem:[%s632 + $0x151] sm:$0xff]
        %v981 = vld [vmem:[%s632 + $0x159] sm:$0xff]
        %s982 = scalar_lea.vmem %s3, 8
        %v983 = vld [vmem:[%s982] sm:$0xff]
        %v984 = vlaneseq
        %v985 = vshrl.u32 %v984, 7
        %v986 = vsub.s32 0, %v985
        %v987 = vrot.slane %v983, %v986
        %v988 = vmul.f32 %v952, %v987
        %v989 = vmul.f32 %v953, %v987
        %v990 = vmul.f32 %v954, %v987
        %v991 = vmul.f32 %v955, %v987
        %v992 = vmul.f32 %v956, %v987
        %v993 = vmul.f32 %v957, %v987
        %v994 = vmul.f32 %v958, %v987
        %v995 = vmul.f32 %v959, %v987
        %v996 = vmul.f32 %v960, %v987
        %v997 = vmul.f32 %v961, %v987
        %v998 = vmul.f32 %v962, %v987
        %v999 = vmul.f32 %v963, %v987
        %v1000 = vmul.f32 %v964, %v987
        %v1001 = vmul.f32 %v965, %v987
        %v1002 = vmul.f32 %v966, %v987
        %v1003 = vmul.f32 %v967, %v987
        %v1004 = vadd.f32 %v936, %v988
        %v1005 = vadd.f32 %v937, %v989
        %v1006 = vadd.f32 %v938, %v990
        %v1007 = vadd.f32 %v939, %v991
        %v1008 = vadd.f32 %v940, %v992
        %v1009 = vadd.f32 %v941, %v993
        %v1010 = vadd.f32 %v942, %v994
        %v1011 = vadd.f32 %v943, %v995
        %v1012 = vadd.f32 %v944, %v996
        %v1013 = vadd.f32 %v945, %v997
        %v1014 = vadd.f32 %v946, %v998
        %v1015 = vadd.f32 %v947, %v999
        %v1016 = vadd.f32 %v948, %v1000
        %v1017 = vadd.f32 %v949, %v1001
        %v1018 = vadd.f32 %v950, %v1002
        %v1019 = vadd.f32 %v951, %v1003
        %v1020 = vlaneseq
        %v1021 = vshrl.u32 %v1020, 7
        %v1022 = vsub.s32 1, %v1021
        %v1023 = vrot.slane %v983, %v1022
        %v1024 = vmul.f32 %v954, %v1023
        %v1025 = vmul.f32 %v955, %v1023
        %v1026 = vmul.f32 %v956, %v1023
        %v1027 = vmul.f32 %v957, %v1023
        %v1028 = vmul.f32 %v958, %v1023
        %v1029 = vmul.f32 %v959, %v1023
        %v1030 = vmul.f32 %v960, %v1023
        %v1031 = vmul.f32 %v961, %v1023
        %v1032 = vmul.f32 %v962, %v1023
        %v1033 = vmul.f32 %v963, %v1023
        %v1034 = vmul.f32 %v964, %v1023
        %v1035 = vmul.f32 %v965, %v1023
        %v1036 = vmul.f32 %v966, %v1023
        %v1037 = vmul.f32 %v967, %v1023
        %v1038 = vmul.f32 %v968, %v1023
        %v1039 = vmul.f32 %v969, %v1023
        %v1040 = vadd.f32 %v1004, %v1024
        %v1041 = vadd.f32 %v1005, %v1025
        %v1042 = vadd.f32 %v1006, %v1026
        %v1043 = vadd.f32 %v1007, %v1027
        %v1044 = vadd.f32 %v1008, %v1028
        %v1045 = vadd.f32 %v1009, %v1029
        %v1046 = vadd.f32 %v1010, %v1030
        %v1047 = vadd.f32 %v1011, %v1031
        %v1048 = vadd.f32 %v1012, %v1032
        %v1049 = vadd.f32 %v1013, %v1033
        %v1050 = vadd.f32 %v1014, %v1034
        %v1051 = vadd.f32 %v1015, %v1035
        %v1052 = vadd.f32 %v1016, %v1036
        %v1053 = vadd.f32 %v1017, %v1037
        %v1054 = vadd.f32 %v1018, %v1038
        %v1055 = vadd.f32 %v1019, %v1039
        %v1056 = vlaneseq
        %v1057 = vshrl.u32 %v1056, 7
        %v1058 = vsub.s32 2, %v1057
        %v1059 = vrot.slane %v983, %v1058
        %v1060 = vmul.f32 %v956, %v1059
        %v1061 = vmul.f32 %v957, %v1059
        %v1062 = vmul.f32 %v958, %v1059
        %v1063 = vmul.f32 %v959, %v1059
        %v1064 = vmul.f32 %v960, %v1059
        %v1065 = vmul.f32 %v961, %v1059
        %v1066 = vmul.f32 %v962, %v1059
        %v1067 = vmul.f32 %v963, %v1059
        %v1068 = vmul.f32 %v964, %v1059
        %v1069 = vmul.f32 %v965, %v1059
        %v1070 = vmul.f32 %v966, %v1059
        %v1071 = vmul.f32 %v967, %v1059
        %v1072 = vmul.f32 %v968, %v1059
        %v1073 = vmul.f32 %v969, %v1059
        %v1074 = vmul.f32 %v970, %v1059
        %v1075 = vmul.f32 %v971, %v1059
        %v1076 = vadd.f32 %v1040, %v1060
        %v1077 = vadd.f32 %v1041, %v1061
        %v1078 = vadd.f32 %v1042, %v1062
        %v1079 = vadd.f32 %v1043, %v1063
        %v1080 = vadd.f32 %v1044, %v1064
        %v1081 = vadd.f32 %v1045, %v1065
        %v1082 = vadd.f32 %v1046, %v1066
        %v1083 = vadd.f32 %v1047, %v1067
        %v1084 = vadd.f32 %v1048, %v1068
        %v1085 = vadd.f32 %v1049, %v1069
        %v1086 = vadd.f32 %v1050, %v1070
        %v1087 = vadd.f32 %v1051, %v1071
        %v1088 = vadd.f32 %v1052, %v1072
        %v1089 = vadd.f32 %v1053, %v1073
        %v1090 = vadd.f32 %v1054, %v1074
        %v1091 = vadd.f32 %v1055, %v1075
        %v1092 = vlaneseq
        %v1093 = vshrl.u32 %v1092, 7
        %v1094 = vsub.s32 3, %v1093
        %v1095 = vrot.slane %v983, %v1094
        %v1096 = vmul.f32 %v958, %v1095
        %v1097 = vmul.f32 %v959, %v1095
        %v1098 = vmul.f32 %v960, %v1095
        %v1099 = vmul.f32 %v961, %v1095
        %v1100 = vmul.f32 %v962, %v1095
        %v1101 = vmul.f32 %v963, %v1095
        %v1102 = vmul.f32 %v964, %v1095
        %v1103 = vmul.f32 %v965, %v1095
        %v1104 = vmul.f32 %v966, %v1095
        %v1105 = vmul.f32 %v967, %v1095
        %v1106 = vmul.f32 %v968, %v1095
        %v1107 = vmul.f32 %v969, %v1095
        %v1108 = vmul.f32 %v970, %v1095
        %v1109 = vmul.f32 %v971, %v1095
        %v1110 = vmul.f32 %v972, %v1095
        %v1111 = vmul.f32 %v973, %v1095
        %v1112 = vadd.f32 %v1076, %v1096
        %v1113 = vadd.f32 %v1077, %v1097
        %v1114 = vadd.f32 %v1078, %v1098
        %v1115 = vadd.f32 %v1079, %v1099
        %v1116 = vadd.f32 %v1080, %v1100
        %v1117 = vadd.f32 %v1081, %v1101
        %v1118 = vadd.f32 %v1082, %v1102
        %v1119 = vadd.f32 %v1083, %v1103
        %v1120 = vadd.f32 %v1084, %v1104
        %v1121 = vadd.f32 %v1085, %v1105
        %v1122 = vadd.f32 %v1086, %v1106
        %v1123 = vadd.f32 %v1087, %v1107
        %v1124 = vadd.f32 %v1088, %v1108
        %v1125 = vadd.f32 %v1089, %v1109
        %v1126 = vadd.f32 %v1090, %v1110
        %v1127 = vadd.f32 %v1091, %v1111
        %v1128 = vlaneseq
        %v1129 = vshrl.u32 %v1128, 7
        %v1130 = vsub.s32 4, %v1129
        %v1131 = vrot.slane %v983, %v1130
        %v1132 = vmul.f32 %v960, %v1131
        %v1133 = vmul.f32 %v961, %v1131
        %v1134 = vmul.f32 %v962, %v1131
        %v1135 = vmul.f32 %v963, %v1131
        %v1136 = vmul.f32 %v964, %v1131
        %v1137 = vmul.f32 %v965, %v1131
        %v1138 = vmul.f32 %v966, %v1131
        %v1139 = vmul.f32 %v967, %v1131
        %v1140 = vmul.f32 %v968, %v1131
        %v1141 = vmul.f32 %v969, %v1131
        %v1142 = vmul.f32 %v970, %v1131
        %v1143 = vmul.f32 %v971, %v1131
        %v1144 = vmul.f32 %v972, %v1131
        %v1145 = vmul.f32 %v973, %v1131
        %v1146 = vmul.f32 %v974, %v1131
        %v1147 = vmul.f32 %v975, %v1131
        %v1148 = vadd.f32 %v1112, %v1132
        %v1149 = vadd.f32 %v1113, %v1133
        %v1150 = vadd.f32 %v1114, %v1134
        %v1151 = vadd.f32 %v1115, %v1135
        %v1152 = vadd.f32 %v1116, %v1136
        %v1153 = vadd.f32 %v1117, %v1137
        %v1154 = vadd.f32 %v1118, %v1138
        %v1155 = vadd.f32 %v1119, %v1139
        %v1156 = vadd.f32 %v1120, %v1140
        %v1157 = vadd.f32 %v1121, %v1141
        %v1158 = vadd.f32 %v1122, %v1142
        %v1159 = vadd.f32 %v1123, %v1143
        %v1160 = vadd.f32 %v1124, %v1144
        %v1161 = vadd.f32 %v1125, %v1145
        %v1162 = vadd.f32 %v1126, %v1146
        %v1163 = vadd.f32 %v1127, %v1147
        %v1164 = vlaneseq
        %v1165 = vshrl.u32 %v1164, 7
        %v1166 = vsub.s32 5, %v1165
        %v1167 = vrot.slane %v983, %v1166
        %v1168 = vmul.f32 %v962, %v1167
        %v1169 = vmul.f32 %v963, %v1167
        %v1170 = vmul.f32 %v964, %v1167
        %v1171 = vmul.f32 %v965, %v1167
        %v1172 = vmul.f32 %v966, %v1167
        %v1173 = vmul.f32 %v967, %v1167
        %v1174 = vmul.f32 %v968, %v1167
        %v1175 = vmul.f32 %v969, %v1167
        %v1176 = vmul.f32 %v970, %v1167
        %v1177 = vmul.f32 %v971, %v1167
        %v1178 = vmul.f32 %v972, %v1167
        %v1179 = vmul.f32 %v973, %v1167
        %v1180 = vmul.f32 %v974, %v1167
        %v1181 = vmul.f32 %v975, %v1167
        %v1182 = vmul.f32 %v976, %v1167
        %v1183 = vmul.f32 %v977, %v1167
        %v1184 = vadd.f32 %v1148, %v1168
        %v1185 = vadd.f32 %v1149, %v1169
        %v1186 = vadd.f32 %v1150, %v1170
        %v1187 = vadd.f32 %v1151, %v1171
        %v1188 = vadd.f32 %v1152, %v1172
        %v1189 = vadd.f32 %v1153, %v1173
        %v1190 = vadd.f32 %v1154, %v1174
        %v1191 = vadd.f32 %v1155, %v1175
        %v1192 = vadd.f32 %v1156, %v1176
        %v1193 = vadd.f32 %v1157, %v1177
        %v1194 = vadd.f32 %v1158, %v1178
        %v1195 = vadd.f32 %v1159, %v1179
        %v1196 = vadd.f32 %v1160, %v1180
        %v1197 = vadd.f32 %v1161, %v1181
        %v1198 = vadd.f32 %v1162, %v1182
        %v1199 = vadd.f32 %v1163, %v1183
        %v1200 = vlaneseq
        %v1201 = vshrl.u32 %v1200, 7
        %v1202 = vsub.s32 6, %v1201
        %v1203 = vrot.slane %v983, %v1202
        %v1204 = vmul.f32 %v964, %v1203
        %v1205 = vmul.f32 %v965, %v1203
        %v1206 = vmul.f32 %v966, %v1203
        %v1207 = vmul.f32 %v967, %v1203
        %v1208 = vmul.f32 %v968, %v1203
        %v1209 = vmul.f32 %v969, %v1203
        %v1210 = vmul.f32 %v970, %v1203
        %v1211 = vmul.f32 %v971, %v1203
        %v1212 = vmul.f32 %v972, %v1203
        %v1213 = vmul.f32 %v973, %v1203
        %v1214 = vmul.f32 %v974, %v1203
        %v1215 = vmul.f32 %v975, %v1203
        %v1216 = vmul.f32 %v976, %v1203
        %v1217 = vmul.f32 %v977, %v1203
        %v1218 = vmul.f32 %v978, %v1203
        %v1219 = vmul.f32 %v979, %v1203
        %v1220 = vadd.f32 %v1184, %v1204
        %v1221 = vadd.f32 %v1185, %v1205
        %v1222 = vadd.f32 %v1186, %v1206
        %v1223 = vadd.f32 %v1187, %v1207
        %v1224 = vadd.f32 %v1188, %v1208
        %v1225 = vadd.f32 %v1189, %v1209
        %v1226 = vadd.f32 %v1190, %v1210
        %v1227 = vadd.f32 %v1191, %v1211
        %v1228 = vadd.f32 %v1192, %v1212
        %v1229 = vadd.f32 %v1193, %v1213
        %v1230 = vadd.f32 %v1194, %v1214
        %v1231 = vadd.f32 %v1195, %v1215
        %v1232 = vadd.f32 %v1196, %v1216
        %v1233 = vadd.f32 %v1197, %v1217
        %v1234 = vadd.f32 %v1198, %v1218
        %v1235 = vadd.f32 %v1199, %v1219
        %v1236 = vlaneseq
        %v1237 = vshrl.u32 %v1236, 7
        %v1238 = vsub.s32 7, %v1237
        %v1239 = vrot.slane %v983, %v1238
        %v1240 = vmul.f32 %v966, %v1239
        %v1241 = vmul.f32 %v967, %v1239
        %v1242 = vmul.f32 %v968, %v1239
        %v1243 = vmul.f32 %v969, %v1239
        %v1244 = vmul.f32 %v970, %v1239
        %v1245 = vmul.f32 %v971, %v1239
        %v1246 = vmul.f32 %v972, %v1239
        %v1247 = vmul.f32 %v973, %v1239
        %v1248 = vmul.f32 %v974, %v1239
        %v1249 = vmul.f32 %v975, %v1239
        %v1250 = vmul.f32 %v976, %v1239
        %v1251 = vmul.f32 %v977, %v1239
        %v1252 = vmul.f32 %v978, %v1239
        %v1253 = vmul.f32 %v979, %v1239
        %v1254 = vmul.f32 %v980, %v1239
        %v1255 = vmul.f32 %v981, %v1239
        %v1256 = vadd.f32 %v1220, %v1240
        %v1257 = vadd.f32 %v1221, %v1241
        %v1258 = vadd.f32 %v1222, %v1242
        %v1259 = vadd.f32 %v1223, %v1243
        %v1260 = vadd.f32 %v1224, %v1244
        %v1261 = vadd.f32 %v1225, %v1245
        %v1262 = vadd.f32 %v1226, %v1246
        %v1263 = vadd.f32 %v1227, %v1247
        %v1264 = vadd.f32 %v1228, %v1248
        %v1265 = vadd.f32 %v1229, %v1249
        %v1266 = vadd.f32 %v1230, %v1250
        %v1267 = vadd.f32 %v1231, %v1251
        %v1268 = vadd.f32 %v1232, %v1252
        %v1269 = vadd.f32 %v1233, %v1253
        %v1270 = vadd.f32 %v1234, %v1254
        %v1271 = vadd.f32 %v1235, %v1255
        %v1272 = vld [vmem:[%s632 + $0x2] sm:$0xff]
        %v1273 = vld [vmem:[%s632 + $0xa] sm:$0xff]
        %v1274 = vld [vmem:[%s632 + $0x1a] sm:$0xff]
        %v1275 = vld [vmem:[%s632 + $0x22] sm:$0xff]
        %v1276 = vld [vmem:[%s632 + $0x32] sm:$0xff]
        %v1277 = vld [vmem:[%s632 + $0x3a] sm:$0xff]
        %v1278 = vld [vmem:[%s632 + $0x4a] sm:$0xff]
        %v1279 = vld [vmem:[%s632 + $0x52] sm:$0xff]
        %v1280 = vld [vmem:[%s632 + $0x62] sm:$0xff]
        %v1281 = vld [vmem:[%s632 + $0x6a] sm:$0xff]
        %v1282 = vld [vmem:[%s632 + $0x7a] sm:$0xff]
        %v1283 = vld [vmem:[%s632 + $0x82] sm:$0xff]
        %v1284 = vld [vmem:[%s632 + $0x92] sm:$0xff]
        %v1285 = vld [vmem:[%s632 + $0x9a] sm:$0xff]
        %v1286 = vld [vmem:[%s632 + $0xaa] sm:$0xff]
        %v1287 = vld [vmem:[%s632 + $0xb2] sm:$0xff]
        %v1288 = vld [vmem:[%s632 + $0xc2] sm:$0xff]
        %v1289 = vld [vmem:[%s632 + $0xca] sm:$0xff]
        %v1290 = vld [vmem:[%s632 + $0xda] sm:$0xff]
        %v1291 = vld [vmem:[%s632 + $0xe2] sm:$0xff]
        %v1292 = vld [vmem:[%s632 + $0xf2] sm:$0xff]
        %v1293 = vld [vmem:[%s632 + $0xfa] sm:$0xff]
        %v1294 = vld [vmem:[%s632 + $0x10a] sm:$0xff]
        %v1295 = vld [vmem:[%s632 + $0x112] sm:$0xff]
        %v1296 = vld [vmem:[%s632 + $0x122] sm:$0xff]
        %v1297 = vld [vmem:[%s632 + $0x12a] sm:$0xff]
        %v1298 = vld [vmem:[%s632 + $0x13a] sm:$0xff]
        %v1299 = vld [vmem:[%s632 + $0x142] sm:$0xff]
        %v1300 = vld [vmem:[%s632 + $0x152] sm:$0xff]
        %v1301 = vld [vmem:[%s632 + $0x15a] sm:$0xff]
        %s1302 = scalar_lea.vmem %s3, 16
        %v1303 = vld [vmem:[%s1302] sm:$0xff]
        %v1304 = vlaneseq
        %v1305 = vshrl.u32 %v1304, 7
        %v1306 = vsub.s32 0, %v1305
        %v1307 = vrot.slane %v1303, %v1306
        %v1308 = vmul.f32 %v1272, %v1307
        %v1309 = vmul.f32 %v1273, %v1307
        %v1310 = vmul.f32 %v1274, %v1307
        %v1311 = vmul.f32 %v1275, %v1307
        %v1312 = vmul.f32 %v1276, %v1307
        %v1313 = vmul.f32 %v1277, %v1307
        %v1314 = vmul.f32 %v1278, %v1307
        %v1315 = vmul.f32 %v1279, %v1307
        %v1316 = vmul.f32 %v1280, %v1307
        %v1317 = vmul.f32 %v1281, %v1307
        %v1318 = vmul.f32 %v1282, %v1307
        %v1319 = vmul.f32 %v1283, %v1307
        %v1320 = vmul.f32 %v1284, %v1307
        %v1321 = vmul.f32 %v1285, %v1307
        %v1322 = vmul.f32 %v1286, %v1307
        %v1323 = vmul.f32 %v1287, %v1307
        %v1324 = vadd.f32 %v1256, %v1308
        %v1325 = vadd.f32 %v1257, %v1309
        %v1326 = vadd.f32 %v1258, %v1310
        %v1327 = vadd.f32 %v1259, %v1311
        %v1328 = vadd.f32 %v1260, %v1312
        %v1329 = vadd.f32 %v1261, %v1313
        %v1330 = vadd.f32 %v1262, %v1314
        %v1331 = vadd.f32 %v1263, %v1315
        %v1332 = vadd.f32 %v1264, %v1316
        %v1333 = vadd.f32 %v1265, %v1317
        %v1334 = vadd.f32 %v1266, %v1318
        %v1335 = vadd.f32 %v1267, %v1319
        %v1336 = vadd.f32 %v1268, %v1320
        %v1337 = vadd.f32 %v1269, %v1321
        %v1338 = vadd.f32 %v1270, %v1322
        %v1339 = vadd.f32 %v1271, %v1323
        %v1340 = vlaneseq
        %v1341 = vshrl.u32 %v1340, 7
        %v1342 = vsub.s32 1, %v1341
        %v1343 = vrot.slane %v1303, %v1342
        %v1344 = vmul.f32 %v1274, %v1343
        %v1345 = vmul.f32 %v1275, %v1343
        %v1346 = vmul.f32 %v1276, %v1343
        %v1347 = vmul.f32 %v1277, %v1343
        %v1348 = vmul.f32 %v1278, %v1343
        %v1349 = vmul.f32 %v1279, %v1343
        %v1350 = vmul.f32 %v1280, %v1343
        %v1351 = vmul.f32 %v1281, %v1343
        %v1352 = vmul.f32 %v1282, %v1343
        %v1353 = vmul.f32 %v1283, %v1343
        %v1354 = vmul.f32 %v1284, %v1343
        %v1355 = vmul.f32 %v1285, %v1343
        %v1356 = vmul.f32 %v1286, %v1343
        %v1357 = vmul.f32 %v1287, %v1343
        %v1358 = vmul.f32 %v1288, %v1343
        %v1359 = vmul.f32 %v1289, %v1343
        %v1360 = vadd.f32 %v1324, %v1344
        %v1361 = vadd.f32 %v1325, %v1345
        %v1362 = vadd.f32 %v1326, %v1346
        %v1363 = vadd.f32 %v1327, %v1347
        %v1364 = vadd.f32 %v1328, %v1348
        %v1365 = vadd.f32 %v1329, %v1349
        %v1366 = vadd.f32 %v1330, %v1350
        %v1367 = vadd.f32 %v1331, %v1351
        %v1368 = vadd.f32 %v1332, %v1352
        %v1369 = vadd.f32 %v1333, %v1353
        %v1370 = vadd.f32 %v1334, %v1354
        %v1371 = vadd.f32 %v1335, %v1355
        %v1372 = vadd.f32 %v1336, %v1356
        %v1373 = vadd.f32 %v1337, %v1357
        %v1374 = vadd.f32 %v1338, %v1358
        %v1375 = vadd.f32 %v1339, %v1359
        %v1376 = vlaneseq
        %v1377 = vshrl.u32 %v1376, 7
        %v1378 = vsub.s32 2, %v1377
        %v1379 = vrot.slane %v1303, %v1378
        %v1380 = vmul.f32 %v1276, %v1379
        %v1381 = vmul.f32 %v1277, %v1379
        %v1382 = vmul.f32 %v1278, %v1379
        %v1383 = vmul.f32 %v1279, %v1379
        %v1384 = vmul.f32 %v1280, %v1379
        %v1385 = vmul.f32 %v1281, %v1379
        %v1386 = vmul.f32 %v1282, %v1379
        %v1387 = vmul.f32 %v1283, %v1379
        %v1388 = vmul.f32 %v1284, %v1379
        %v1389 = vmul.f32 %v1285, %v1379
        %v1390 = vmul.f32 %v1286, %v1379
        %v1391 = vmul.f32 %v1287, %v1379
        %v1392 = vmul.f32 %v1288, %v1379
        %v1393 = vmul.f32 %v1289, %v1379
        %v1394 = vmul.f32 %v1290, %v1379
        %v1395 = vmul.f32 %v1291, %v1379
        %v1396 = vadd.f32 %v1360, %v1380
        %v1397 = vadd.f32 %v1361, %v1381
        %v1398 = vadd.f32 %v1362, %v1382
        %v1399 = vadd.f32 %v1363, %v1383
        %v1400 = vadd.f32 %v1364, %v1384
        %v1401 = vadd.f32 %v1365, %v1385
        %v1402 = vadd.f32 %v1366, %v1386
        %v1403 = vadd.f32 %v1367, %v1387
        %v1404 = vadd.f32 %v1368, %v1388
        %v1405 = vadd.f32 %v1369, %v1389
        %v1406 = vadd.f32 %v1370, %v1390
        %v1407 = vadd.f32 %v1371, %v1391
        %v1408 = vadd.f32 %v1372, %v1392
        %v1409 = vadd.f32 %v1373, %v1393
        %v1410 = vadd.f32 %v1374, %v1394
        %v1411 = vadd.f32 %v1375, %v1395
        %v1412 = vlaneseq
        %v1413 = vshrl.u32 %v1412, 7
        %v1414 = vsub.s32 3, %v1413
        %v1415 = vrot.slane %v1303, %v1414
        %v1416 = vmul.f32 %v1278, %v1415
        %v1417 = vmul.f32 %v1279, %v1415
        %v1418 = vmul.f32 %v1280, %v1415
        %v1419 = vmul.f32 %v1281, %v1415
        %v1420 = vmul.f32 %v1282, %v1415
        %v1421 = vmul.f32 %v1283, %v1415
        %v1422 = vmul.f32 %v1284, %v1415
        %v1423 = vmul.f32 %v1285, %v1415
        %v1424 = vmul.f32 %v1286, %v1415
        %v1425 = vmul.f32 %v1287, %v1415
        %v1426 = vmul.f32 %v1288, %v1415
        %v1427 = vmul.f32 %v1289, %v1415
        %v1428 = vmul.f32 %v1290, %v1415
        %v1429 = vmul.f32 %v1291, %v1415
        %v1430 = vmul.f32 %v1292, %v1415
        %v1431 = vmul.f32 %v1293, %v1415
        %v1432 = vadd.f32 %v1396, %v1416
        %v1433 = vadd.f32 %v1397, %v1417
        %v1434 = vadd.f32 %v1398, %v1418
        %v1435 = vadd.f32 %v1399, %v1419
        %v1436 = vadd.f32 %v1400, %v1420
        %v1437 = vadd.f32 %v1401, %v1421
        %v1438 = vadd.f32 %v1402, %v1422
        %v1439 = vadd.f32 %v1403, %v1423
        %v1440 = vadd.f32 %v1404, %v1424
        %v1441 = vadd.f32 %v1405, %v1425
        %v1442 = vadd.f32 %v1406, %v1426
        %v1443 = vadd.f32 %v1407, %v1427
        %v1444 = vadd.f32 %v1408, %v1428
        %v1445 = vadd.f32 %v1409, %v1429
        %v1446 = vadd.f32 %v1410, %v1430
        %v1447 = vadd.f32 %v1411, %v1431
        %v1448 = vlaneseq
        %v1449 = vshrl.u32 %v1448, 7
        %v1450 = vsub.s32 4, %v1449
        %v1451 = vrot.slane %v1303, %v1450
        %v1452 = vmul.f32 %v1280, %v1451
        %v1453 = vmul.f32 %v1281, %v1451
        %v1454 = vmul.f32 %v1282, %v1451
        %v1455 = vmul.f32 %v1283, %v1451
        %v1456 = vmul.f32 %v1284, %v1451
        %v1457 = vmul.f32 %v1285, %v1451
        %v1458 = vmul.f32 %v1286, %v1451
        %v1459 = vmul.f32 %v1287, %v1451
        %v1460 = vmul.f32 %v1288, %v1451
        %v1461 = vmul.f32 %v1289, %v1451
        %v1462 = vmul.f32 %v1290, %v1451
        %v1463 = vmul.f32 %v1291, %v1451
        %v1464 = vmul.f32 %v1292, %v1451
        %v1465 = vmul.f32 %v1293, %v1451
        %v1466 = vmul.f32 %v1294, %v1451
        %v1467 = vmul.f32 %v1295, %v1451
        %v1468 = vadd.f32 %v1432, %v1452
        %v1469 = vadd.f32 %v1433, %v1453
        %v1470 = vadd.f32 %v1434, %v1454
        %v1471 = vadd.f32 %v1435, %v1455
        %v1472 = vadd.f32 %v1436, %v1456
        %v1473 = vadd.f32 %v1437, %v1457
        %v1474 = vadd.f32 %v1438, %v1458
        %v1475 = vadd.f32 %v1439, %v1459
        %v1476 = vadd.f32 %v1440, %v1460
        %v1477 = vadd.f32 %v1441, %v1461
        %v1478 = vadd.f32 %v1442, %v1462
        %v1479 = vadd.f32 %v1443, %v1463
        %v1480 = vadd.f32 %v1444, %v1464
        %v1481 = vadd.f32 %v1445, %v1465
        %v1482 = vadd.f32 %v1446, %v1466
        %v1483 = vadd.f32 %v1447, %v1467
        %v1484 = vlaneseq
        %v1485 = vshrl.u32 %v1484, 7
        %v1486 = vsub.s32 5, %v1485
        %v1487 = vrot.slane %v1303, %v1486
        %v1488 = vmul.f32 %v1282, %v1487
        %v1489 = vmul.f32 %v1283, %v1487
        %v1490 = vmul.f32 %v1284, %v1487
        %v1491 = vmul.f32 %v1285, %v1487
        %v1492 = vmul.f32 %v1286, %v1487
        %v1493 = vmul.f32 %v1287, %v1487
        %v1494 = vmul.f32 %v1288, %v1487
        %v1495 = vmul.f32 %v1289, %v1487
        %v1496 = vmul.f32 %v1290, %v1487
        %v1497 = vmul.f32 %v1291, %v1487
        %v1498 = vmul.f32 %v1292, %v1487
        %v1499 = vmul.f32 %v1293, %v1487
        %v1500 = vmul.f32 %v1294, %v1487
        %v1501 = vmul.f32 %v1295, %v1487
        %v1502 = vmul.f32 %v1296, %v1487
        %v1503 = vmul.f32 %v1297, %v1487
        %v1504 = vadd.f32 %v1468, %v1488
        %v1505 = vadd.f32 %v1469, %v1489
        %v1506 = vadd.f32 %v1470, %v1490
        %v1507 = vadd.f32 %v1471, %v1491
        %v1508 = vadd.f32 %v1472, %v1492
        %v1509 = vadd.f32 %v1473, %v1493
        %v1510 = vadd.f32 %v1474, %v1494
        %v1511 = vadd.f32 %v1475, %v1495
        %v1512 = vadd.f32 %v1476, %v1496
        %v1513 = vadd.f32 %v1477, %v1497
        %v1514 = vadd.f32 %v1478, %v1498
        %v1515 = vadd.f32 %v1479, %v1499
        %v1516 = vadd.f32 %v1480, %v1500
        %v1517 = vadd.f32 %v1481, %v1501
        %v1518 = vadd.f32 %v1482, %v1502
        %v1519 = vadd.f32 %v1483, %v1503
        %v1520 = vlaneseq
        %v1521 = vshrl.u32 %v1520, 7
        %v1522 = vsub.s32 6, %v1521
        %v1523 = vrot.slane %v1303, %v1522
        %v1524 = vmul.f32 %v1284, %v1523
        %v1525 = vmul.f32 %v1285, %v1523
        %v1526 = vmul.f32 %v1286, %v1523
        %v1527 = vmul.f32 %v1287, %v1523
        %v1528 = vmul.f32 %v1288, %v1523
        %v1529 = vmul.f32 %v1289, %v1523
        %v1530 = vmul.f32 %v1290, %v1523
        %v1531 = vmul.f32 %v1291, %v1523
        %v1532 = vmul.f32 %v1292, %v1523
        %v1533 = vmul.f32 %v1293, %v1523
        %v1534 = vmul.f32 %v1294, %v1523
        %v1535 = vmul.f32 %v1295, %v1523
        %v1536 = vmul.f32 %v1296, %v1523
        %v1537 = vmul.f32 %v1297, %v1523
        %v1538 = vmul.f32 %v1298, %v1523
        %v1539 = vmul.f32 %v1299, %v1523
        %v1540 = vadd.f32 %v1504, %v1524
        %v1541 = vadd.f32 %v1505, %v1525
        %v1542 = vadd.f32 %v1506, %v1526
        %v1543 = vadd.f32 %v1507, %v1527
        %v1544 = vadd.f32 %v1508, %v1528
        %v1545 = vadd.f32 %v1509, %v1529
        %v1546 = vadd.f32 %v1510, %v1530
        %v1547 = vadd.f32 %v1511, %v1531
        %v1548 = vadd.f32 %v1512, %v1532
        %v1549 = vadd.f32 %v1513, %v1533
        %v1550 = vadd.f32 %v1514, %v1534
        %v1551 = vadd.f32 %v1515, %v1535
        %v1552 = vadd.f32 %v1516, %v1536
        %v1553 = vadd.f32 %v1517, %v1537
        %v1554 = vadd.f32 %v1518, %v1538
        %v1555 = vadd.f32 %v1519, %v1539
        %v1556 = vlaneseq
        %v1557 = vshrl.u32 %v1556, 7
        %v1558 = vsub.s32 7, %v1557
        %v1559 = vrot.slane %v1303, %v1558
        %v1560 = vmul.f32 %v1286, %v1559
        %v1561 = vmul.f32 %v1287, %v1559
        %v1562 = vmul.f32 %v1288, %v1559
        %v1563 = vmul.f32 %v1289, %v1559
        %v1564 = vmul.f32 %v1290, %v1559
        %v1565 = vmul.f32 %v1291, %v1559
        %v1566 = vmul.f32 %v1292, %v1559
        %v1567 = vmul.f32 %v1293, %v1559
        %v1568 = vmul.f32 %v1294, %v1559
        %v1569 = vmul.f32 %v1295, %v1559
        %v1570 = vmul.f32 %v1296, %v1559
        %v1571 = vmul.f32 %v1297, %v1559
        %v1572 = vmul.f32 %v1298, %v1559
        %v1573 = vmul.f32 %v1299, %v1559
        %v1574 = vmul.f32 %v1300, %v1559
        %v1575 = vmul.f32 %v1301, %v1559
        %v1576 = vadd.f32 %v1540, %v1560
        %v1577 = vadd.f32 %v1541, %v1561
        %v1578 = vadd.f32 %v1542, %v1562
        %v1579 = vadd.f32 %v1543, %v1563
        %v1580 = vadd.f32 %v1544, %v1564
        %v1581 = vadd.f32 %v1545, %v1565
        %v1582 = vadd.f32 %v1546, %v1566
        %v1583 = vadd.f32 %v1547, %v1567
        %v1584 = vadd.f32 %v1548, %v1568
        %v1585 = vadd.f32 %v1549, %v1569
        %v1586 = vadd.f32 %v1550, %v1570
        %v1587 = vadd.f32 %v1551, %v1571
        %v1588 = vadd.f32 %v1552, %v1572
        %v1589 = vadd.f32 %v1553, %v1573
        %v1590 = vadd.f32 %v1554, %v1574
        %v1591 = vadd.f32 %v1555, %v1575
        %v1592 = vld [vmem:[%s632 + $0x3] sm:$0xff]
        %v1593 = vld [vmem:[%s632 + $0xb] sm:$0xff]
        %v1594 = vld [vmem:[%s632 + $0x1b] sm:$0xff]
        %v1595 = vld [vmem:[%s632 + $0x23] sm:$0xff]
        %v1596 = vld [vmem:[%s632 + $0x33] sm:$0xff]
        %v1597 = vld [vmem:[%s632 + $0x3b] sm:$0xff]
        %v1598 = vld [vmem:[%s632 + $0x4b] sm:$0xff]
        %v1599 = vld [vmem:[%s632 + $0x53] sm:$0xff]
        %v1600 = vld [vmem:[%s632 + $0x63] sm:$0xff]
        %v1601 = vld [vmem:[%s632 + $0x6b] sm:$0xff]
        %v1602 = vld [vmem:[%s632 + $0x7b] sm:$0xff]
        %v1603 = vld [vmem:[%s632 + $0x83] sm:$0xff]
        %v1604 = vld [vmem:[%s632 + $0x93] sm:$0xff]
        %v1605 = vld [vmem:[%s632 + $0x9b] sm:$0xff]
        %v1606 = vld [vmem:[%s632 + $0xab] sm:$0xff]
        %v1607 = vld [vmem:[%s632 + $0xb3] sm:$0xff]
        %v1608 = vld [vmem:[%s632 + $0xc3] sm:$0xff]
        %v1609 = vld [vmem:[%s632 + $0xcb] sm:$0xff]
        %v1610 = vld [vmem:[%s632 + $0xdb] sm:$0xff]
        %v1611 = vld [vmem:[%s632 + $0xe3] sm:$0xff]
        %v1612 = vld [vmem:[%s632 + $0xf3] sm:$0xff]
        %v1613 = vld [vmem:[%s632 + $0xfb] sm:$0xff]
        %v1614 = vld [vmem:[%s632 + $0x10b] sm:$0xff]
        %v1615 = vld [vmem:[%s632 + $0x113] sm:$0xff]
        %v1616 = vld [vmem:[%s632 + $0x123] sm:$0xff]
        %v1617 = vld [vmem:[%s632 + $0x12b] sm:$0xff]
        %v1618 = vld [vmem:[%s632 + $0x13b] sm:$0xff]
        %v1619 = vld [vmem:[%s632 + $0x143] sm:$0xff]
        %v1620 = vld [vmem:[%s632 + $0x153] sm:$0xff]
        %v1621 = vld [vmem:[%s632 + $0x15b] sm:$0xff]
        %s1622 = scalar_lea.vmem %s3, 24
        %v1623 = vld [vmem:[%s1622] sm:$0xff]
        %v1624 = vlaneseq
        %v1625 = vshrl.u32 %v1624, 7
        %v1626 = vsub.s32 0, %v1625
        %v1627 = vrot.slane %v1623, %v1626
        %v1628 = vmul.f32 %v1592, %v1627
        %v1629 = vmul.f32 %v1593, %v1627
        %v1630 = vmul.f32 %v1594, %v1627
        %v1631 = vmul.f32 %v1595, %v1627
        %v1632 = vmul.f32 %v1596, %v1627
        %v1633 = vmul.f32 %v1597, %v1627
        %v1634 = vmul.f32 %v1598, %v1627
        %v1635 = vmul.f32 %v1599, %v1627
        %v1636 = vmul.f32 %v1600, %v1627
        %v1637 = vmul.f32 %v1601, %v1627
        %v1638 = vmul.f32 %v1602, %v1627
        %v1639 = vmul.f32 %v1603, %v1627
        %v1640 = vmul.f32 %v1604, %v1627
        %v1641 = vmul.f32 %v1605, %v1627
        %v1642 = vmul.f32 %v1606, %v1627
        %v1643 = vmul.f32 %v1607, %v1627
        %v1644 = vadd.f32 %v1576, %v1628
        %v1645 = vadd.f32 %v1577, %v1629
        %v1646 = vadd.f32 %v1578, %v1630
        %v1647 = vadd.f32 %v1579, %v1631
        %v1648 = vadd.f32 %v1580, %v1632
        %v1649 = vadd.f32 %v1581, %v1633
        %v1650 = vadd.f32 %v1582, %v1634
        %v1651 = vadd.f32 %v1583, %v1635
        %v1652 = vadd.f32 %v1584, %v1636
        %v1653 = vadd.f32 %v1585, %v1637
        %v1654 = vadd.f32 %v1586, %v1638
        %v1655 = vadd.f32 %v1587, %v1639
        %v1656 = vadd.f32 %v1588, %v1640
        %v1657 = vadd.f32 %v1589, %v1641
        %v1658 = vadd.f32 %v1590, %v1642
        %v1659 = vadd.f32 %v1591, %v1643
        %v1660 = vlaneseq
        %v1661 = vshrl.u32 %v1660, 7
        %v1662 = vsub.s32 1, %v1661
        %v1663 = vrot.slane %v1623, %v1662
        %v1664 = vmul.f32 %v1594, %v1663
        %v1665 = vmul.f32 %v1595, %v1663
        %v1666 = vmul.f32 %v1596, %v1663
        %v1667 = vmul.f32 %v1597, %v1663
        %v1668 = vmul.f32 %v1598, %v1663
        %v1669 = vmul.f32 %v1599, %v1663
        %v1670 = vmul.f32 %v1600, %v1663
        %v1671 = vmul.f32 %v1601, %v1663
        %v1672 = vmul.f32 %v1602, %v1663
        %v1673 = vmul.f32 %v1603, %v1663
        %v1674 = vmul.f32 %v1604, %v1663
        %v1675 = vmul.f32 %v1605, %v1663
        %v1676 = vmul.f32 %v1606, %v1663
        %v1677 = vmul.f32 %v1607, %v1663
        %v1678 = vmul.f32 %v1608, %v1663
        %v1679 = vmul.f32 %v1609, %v1663
        %v1680 = vadd.f32 %v1644, %v1664
        %v1681 = vadd.f32 %v1645, %v1665
        %v1682 = vadd.f32 %v1646, %v1666
        %v1683 = vadd.f32 %v1647, %v1667
        %v1684 = vadd.f32 %v1648, %v1668
        %v1685 = vadd.f32 %v1649, %v1669
        %v1686 = vadd.f32 %v1650, %v1670
        %v1687 = vadd.f32 %v1651, %v1671
        %v1688 = vadd.f32 %v1652, %v1672
        %v1689 = vadd.f32 %v1653, %v1673
        %v1690 = vadd.f32 %v1654, %v1674
        %v1691 = vadd.f32 %v1655, %v1675
        %v1692 = vadd.f32 %v1656, %v1676
        %v1693 = vadd.f32 %v1657, %v1677
        %v1694 = vadd.f32 %v1658, %v1678
        %v1695 = vadd.f32 %v1659, %v1679
        %v1696 = vlaneseq
        %v1697 = vshrl.u32 %v1696, 7
        %v1698 = vsub.s32 2, %v1697
        %v1699 = vrot.slane %v1623, %v1698
        %v1700 = vmul.f32 %v1596, %v1699
        %v1701 = vmul.f32 %v1597, %v1699
        %v1702 = vmul.f32 %v1598, %v1699
        %v1703 = vmul.f32 %v1599, %v1699
        %v1704 = vmul.f32 %v1600, %v1699
        %v1705 = vmul.f32 %v1601, %v1699
        %v1706 = vmul.f32 %v1602, %v1699
        %v1707 = vmul.f32 %v1603, %v1699
        %v1708 = vmul.f32 %v1604, %v1699
        %v1709 = vmul.f32 %v1605, %v1699
        %v1710 = vmul.f32 %v1606, %v1699
        %v1711 = vmul.f32 %v1607, %v1699
        %v1712 = vmul.f32 %v1608, %v1699
        %v1713 = vmul.f32 %v1609, %v1699
        %v1714 = vmul.f32 %v1610, %v1699
        %v1715 = vmul.f32 %v1611, %v1699
        %v1716 = vadd.f32 %v1680, %v1700
        %v1717 = vadd.f32 %v1681, %v1701
        %v1718 = vadd.f32 %v1682, %v1702
        %v1719 = vadd.f32 %v1683, %v1703
        %v1720 = vadd.f32 %v1684, %v1704
        %v1721 = vadd.f32 %v1685, %v1705
        %v1722 = vadd.f32 %v1686, %v1706
        %v1723 = vadd.f32 %v1687, %v1707
        %v1724 = vadd.f32 %v1688, %v1708
        %v1725 = vadd.f32 %v1689, %v1709
        %v1726 = vadd.f32 %v1690, %v1710
        %v1727 = vadd.f32 %v1691, %v1711
        %v1728 = vadd.f32 %v1692, %v1712
        %v1729 = vadd.f32 %v1693, %v1713
        %v1730 = vadd.f32 %v1694, %v1714
        %v1731 = vadd.f32 %v1695, %v1715
        %v1732 = vlaneseq
        %v1733 = vshrl.u32 %v1732, 7
        %v1734 = vsub.s32 3, %v1733
        %v1735 = vrot.slane %v1623, %v1734
        %v1736 = vmul.f32 %v1598, %v1735
        %v1737 = vmul.f32 %v1599, %v1735
        %v1738 = vmul.f32 %v1600, %v1735
        %v1739 = vmul.f32 %v1601, %v1735
        %v1740 = vmul.f32 %v1602, %v1735
        %v1741 = vmul.f32 %v1603, %v1735
        %v1742 = vmul.f32 %v1604, %v1735
        %v1743 = vmul.f32 %v1605, %v1735
        %v1744 = vmul.f32 %v1606, %v1735
        %v1745 = vmul.f32 %v1607, %v1735
        %v1746 = vmul.f32 %v1608, %v1735
        %v1747 = vmul.f32 %v1609, %v1735
        %v1748 = vmul.f32 %v1610, %v1735
        %v1749 = vmul.f32 %v1611, %v1735
        %v1750 = vmul.f32 %v1612, %v1735
        %v1751 = vmul.f32 %v1613, %v1735
        %v1752 = vadd.f32 %v1716, %v1736
        %v1753 = vadd.f32 %v1717, %v1737
        %v1754 = vadd.f32 %v1718, %v1738
        %v1755 = vadd.f32 %v1719, %v1739
        %v1756 = vadd.f32 %v1720, %v1740
        %v1757 = vadd.f32 %v1721, %v1741
        %v1758 = vadd.f32 %v1722, %v1742
        %v1759 = vadd.f32 %v1723, %v1743
        %v1760 = vadd.f32 %v1724, %v1744
        %v1761 = vadd.f32 %v1725, %v1745
        %v1762 = vadd.f32 %v1726, %v1746
        %v1763 = vadd.f32 %v1727, %v1747
        %v1764 = vadd.f32 %v1728, %v1748
        %v1765 = vadd.f32 %v1729, %v1749
        %v1766 = vadd.f32 %v1730, %v1750
        %v1767 = vadd.f32 %v1731, %v1751
        %v1768 = vlaneseq
        %v1769 = vshrl.u32 %v1768, 7
        %v1770 = vsub.s32 4, %v1769
        %v1771 = vrot.slane %v1623, %v1770
        %v1772 = vmul.f32 %v1600, %v1771
        %v1773 = vmul.f32 %v1601, %v1771
        %v1774 = vmul.f32 %v1602, %v1771
        %v1775 = vmul.f32 %v1603, %v1771
        %v1776 = vmul.f32 %v1604, %v1771
        %v1777 = vmul.f32 %v1605, %v1771
        %v1778 = vmul.f32 %v1606, %v1771
        %v1779 = vmul.f32 %v1607, %v1771
        %v1780 = vmul.f32 %v1608, %v1771
        %v1781 = vmul.f32 %v1609, %v1771
        %v1782 = vmul.f32 %v1610, %v1771
        %v1783 = vmul.f32 %v1611, %v1771
        %v1784 = vmul.f32 %v1612, %v1771
        %v1785 = vmul.f32 %v1613, %v1771
        %v1786 = vmul.f32 %v1614, %v1771
        %v1787 = vmul.f32 %v1615, %v1771
        %v1788 = vadd.f32 %v1752, %v1772
        %v1789 = vadd.f32 %v1753, %v1773
        %v1790 = vadd.f32 %v1754, %v1774
        %v1791 = vadd.f32 %v1755, %v1775
        %v1792 = vadd.f32 %v1756, %v1776
        %v1793 = vadd.f32 %v1757, %v1777
        %v1794 = vadd.f32 %v1758, %v1778
        %v1795 = vadd.f32 %v1759, %v1779
        %v1796 = vadd.f32 %v1760, %v1780
        %v1797 = vadd.f32 %v1761, %v1781
        %v1798 = vadd.f32 %v1762, %v1782
        %v1799 = vadd.f32 %v1763, %v1783
        %v1800 = vadd.f32 %v1764, %v1784
        %v1801 = vadd.f32 %v1765, %v1785
        %v1802 = vadd.f32 %v1766, %v1786
        %v1803 = vadd.f32 %v1767, %v1787
        %v1804 = vlaneseq
        %v1805 = vshrl.u32 %v1804, 7
        %v1806 = vsub.s32 5, %v1805
        %v1807 = vrot.slane %v1623, %v1806
        %v1808 = vmul.f32 %v1602, %v1807
        %v1809 = vmul.f32 %v1603, %v1807
        %v1810 = vmul.f32 %v1604, %v1807
        %v1811 = vmul.f32 %v1605, %v1807
        %v1812 = vmul.f32 %v1606, %v1807
        %v1813 = vmul.f32 %v1607, %v1807
        %v1814 = vmul.f32 %v1608, %v1807
        %v1815 = vmul.f32 %v1609, %v1807
        %v1816 = vmul.f32 %v1610, %v1807
        %v1817 = vmul.f32 %v1611, %v1807
        %v1818 = vmul.f32 %v1612, %v1807
        %v1819 = vmul.f32 %v1613, %v1807
        %v1820 = vmul.f32 %v1614, %v1807
        %v1821 = vmul.f32 %v1615, %v1807
        %v1822 = vmul.f32 %v1616, %v1807
        %v1823 = vmul.f32 %v1617, %v1807
        %v1824 = vadd.f32 %v1788, %v1808
        %v1825 = vadd.f32 %v1789, %v1809
        %v1826 = vadd.f32 %v1790, %v1810
        %v1827 = vadd.f32 %v1791, %v1811
        %v1828 = vadd.f32 %v1792, %v1812
        %v1829 = vadd.f32 %v1793, %v1813
        %v1830 = vadd.f32 %v1794, %v1814
        %v1831 = vadd.f32 %v1795, %v1815
        %v1832 = vadd.f32 %v1796, %v1816
        %v1833 = vadd.f32 %v1797, %v1817
        %v1834 = vadd.f32 %v1798, %v1818
        %v1835 = vadd.f32 %v1799, %v1819
        %v1836 = vadd.f32 %v1800, %v1820
        %v1837 = vadd.f32 %v1801, %v1821
        %v1838 = vadd.f32 %v1802, %v1822
        %v1839 = vadd.f32 %v1803, %v1823
        %v1840 = vlaneseq
        %v1841 = vshrl.u32 %v1840, 7
        %v1842 = vsub.s32 6, %v1841
        %v1843 = vrot.slane %v1623, %v1842
        %v1844 = vmul.f32 %v1604, %v1843
        %v1845 = vmul.f32 %v1605, %v1843
        %v1846 = vmul.f32 %v1606, %v1843
        %v1847 = vmul.f32 %v1607, %v1843
        %v1848 = vmul.f32 %v1608, %v1843
        %v1849 = vmul.f32 %v1609, %v1843
        %v1850 = vmul.f32 %v1610, %v1843
        %v1851 = vmul.f32 %v1611, %v1843
        %v1852 = vmul.f32 %v1612, %v1843
        %v1853 = vmul.f32 %v1613, %v1843
        %v1854 = vmul.f32 %v1614, %v1843
        %v1855 = vmul.f32 %v1615, %v1843
        %v1856 = vmul.f32 %v1616, %v1843
        %v1857 = vmul.f32 %v1617, %v1843
        %v1858 = vmul.f32 %v1618, %v1843
        %v1859 = vmul.f32 %v1619, %v1843
        %v1860 = vadd.f32 %v1824, %v1844
        %v1861 = vadd.f32 %v1825, %v1845
        %v1862 = vadd.f32 %v1826, %v1846
        %v1863 = vadd.f32 %v1827, %v1847
        %v1864 = vadd.f32 %v1828, %v1848
        %v1865 = vadd.f32 %v1829, %v1849
        %v1866 = vadd.f32 %v1830, %v1850
        %v1867 = vadd.f32 %v1831, %v1851
        %v1868 = vadd.f32 %v1832, %v1852
        %v1869 = vadd.f32 %v1833, %v1853
        %v1870 = vadd.f32 %v1834, %v1854
        %v1871 = vadd.f32 %v1835, %v1855
        %v1872 = vadd.f32 %v1836, %v1856
        %v1873 = vadd.f32 %v1837, %v1857
        %v1874 = vadd.f32 %v1838, %v1858
        %v1875 = vadd.f32 %v1839, %v1859
        %v1876 = vlaneseq
        %v1877 = vshrl.u32 %v1876, 7
        %v1878 = vsub.s32 7, %v1877
        %v1879 = vrot.slane %v1623, %v1878
        %v1880 = vmul.f32 %v1606, %v1879
        %v1881 = vmul.f32 %v1607, %v1879
        %v1882 = vmul.f32 %v1608, %v1879
        %v1883 = vmul.f32 %v1609, %v1879
        %v1884 = vmul.f32 %v1610, %v1879
        %v1885 = vmul.f32 %v1611, %v1879
        %v1886 = vmul.f32 %v1612, %v1879
        %v1887 = vmul.f32 %v1613, %v1879
        %v1888 = vmul.f32 %v1614, %v1879
        %v1889 = vmul.f32 %v1615, %v1879
        %v1890 = vmul.f32 %v1616, %v1879
        %v1891 = vmul.f32 %v1617, %v1879
        %v1892 = vmul.f32 %v1618, %v1879
        %v1893 = vmul.f32 %v1619, %v1879
        %v1894 = vmul.f32 %v1620, %v1879
        %v1895 = vmul.f32 %v1621, %v1879
        %v1896 = vadd.f32 %v1860, %v1880
        %v1897 = vadd.f32 %v1861, %v1881
        %v1898 = vadd.f32 %v1862, %v1882
        %v1899 = vadd.f32 %v1863, %v1883
        %v1900 = vadd.f32 %v1864, %v1884
        %v1901 = vadd.f32 %v1865, %v1885
        %v1902 = vadd.f32 %v1866, %v1886
        %v1903 = vadd.f32 %v1867, %v1887
        %v1904 = vadd.f32 %v1868, %v1888
        %v1905 = vadd.f32 %v1869, %v1889
        %v1906 = vadd.f32 %v1870, %v1890
        %v1907 = vadd.f32 %v1871, %v1891
        %v1908 = vadd.f32 %v1872, %v1892
        %v1909 = vadd.f32 %v1873, %v1893
        %v1910 = vadd.f32 %v1874, %v1894
        %v1911 = vadd.f32 %v1875, %v1895
        %v1912 = vld [vmem:[%s632 + $0x4] sm:$0xff]
        %v1913 = vld [vmem:[%s632 + $0xc] sm:$0xff]
        %v1914 = vld [vmem:[%s632 + $0x1c] sm:$0xff]
        %v1915 = vld [vmem:[%s632 + $0x24] sm:$0xff]
        %v1916 = vld [vmem:[%s632 + $0x34] sm:$0xff]
        %v1917 = vld [vmem:[%s632 + $0x3c] sm:$0xff]
        %v1918 = vld [vmem:[%s632 + $0x4c] sm:$0xff]
        %v1919 = vld [vmem:[%s632 + $0x54] sm:$0xff]
        %v1920 = vld [vmem:[%s632 + $0x64] sm:$0xff]
        %v1921 = vld [vmem:[%s632 + $0x6c] sm:$0xff]
        %v1922 = vld [vmem:[%s632 + $0x7c] sm:$0xff]
        %v1923 = vld [vmem:[%s632 + $0x84] sm:$0xff]
        %v1924 = vld [vmem:[%s632 + $0x94] sm:$0xff]
        %v1925 = vld [vmem:[%s632 + $0x9c] sm:$0xff]
        %v1926 = vld [vmem:[%s632 + $0xac] sm:$0xff]
        %v1927 = vld [vmem:[%s632 + $0xb4] sm:$0xff]
        %v1928 = vld [vmem:[%s632 + $0xc4] sm:$0xff]
        %v1929 = vld [vmem:[%s632 + $0xcc] sm:$0xff]
        %v1930 = vld [vmem:[%s632 + $0xdc] sm:$0xff]
        %v1931 = vld [vmem:[%s632 + $0xe4] sm:$0xff]
        %v1932 = vld [vmem:[%s632 + $0xf4] sm:$0xff]
        %v1933 = vld [vmem:[%s632 + $0xfc] sm:$0xff]
        %v1934 = vld [vmem:[%s632 + $0x10c] sm:$0xff]
        %v1935 = vld [vmem:[%s632 + $0x114] sm:$0xff]
        %v1936 = vld [vmem:[%s632 + $0x124] sm:$0xff]
        %v1937 = vld [vmem:[%s632 + $0x12c] sm:$0xff]
        %v1938 = vld [vmem:[%s632 + $0x13c] sm:$0xff]
        %v1939 = vld [vmem:[%s632 + $0x144] sm:$0xff]
        %v1940 = vld [vmem:[%s632 + $0x154] sm:$0xff]
        %v1941 = vld [vmem:[%s632 + $0x15c] sm:$0xff]
        %s1942 = scalar_lea.vmem %s3, 32
        %v1943 = vld [vmem:[%s1942] sm:$0xff]
        %v1944 = vlaneseq
        %v1945 = vshrl.u32 %v1944, 7
        %v1946 = vsub.s32 0, %v1945
        %v1947 = vrot.slane %v1943, %v1946
        %v1948 = vmul.f32 %v1912, %v1947
        %v1949 = vmul.f32 %v1913, %v1947
        %v1950 = vmul.f32 %v1914, %v1947
        %v1951 = vmul.f32 %v1915, %v1947
        %v1952 = vmul.f32 %v1916, %v1947
        %v1953 = vmul.f32 %v1917, %v1947
        %v1954 = vmul.f32 %v1918, %v1947
        %v1955 = vmul.f32 %v1919, %v1947
        %v1956 = vmul.f32 %v1920, %v1947
        %v1957 = vmul.f32 %v1921, %v1947
        %v1958 = vmul.f32 %v1922, %v1947
        %v1959 = vmul.f32 %v1923, %v1947
        %v1960 = vmul.f32 %v1924, %v1947
        %v1961 = vmul.f32 %v1925, %v1947
        %v1962 = vmul.f32 %v1926, %v1947
        %v1963 = vmul.f32 %v1927, %v1947
        %v1964 = vadd.f32 %v1896, %v1948
        %v1965 = vadd.f32 %v1897, %v1949
        %v1966 = vadd.f32 %v1898, %v1950
        %v1967 = vadd.f32 %v1899, %v1951
        %v1968 = vadd.f32 %v1900, %v1952
        %v1969 = vadd.f32 %v1901, %v1953
        %v1970 = vadd.f32 %v1902, %v1954
        %v1971 = vadd.f32 %v1903, %v1955
        %v1972 = vadd.f32 %v1904, %v1956
        %v1973 = vadd.f32 %v1905, %v1957
        %v1974 = vadd.f32 %v1906, %v1958
        %v1975 = vadd.f32 %v1907, %v1959
        %v1976 = vadd.f32 %v1908, %v1960
        %v1977 = vadd.f32 %v1909, %v1961
        %v1978 = vadd.f32 %v1910, %v1962
        %v1979 = vadd.f32 %v1911, %v1963
        %v1980 = vlaneseq
        %v1981 = vshrl.u32 %v1980, 7
        %v1982 = vsub.s32 1, %v1981
        %v1983 = vrot.slane %v1943, %v1982
        %v1984 = vmul.f32 %v1914, %v1983
        %v1985 = vmul.f32 %v1915, %v1983
        %v1986 = vmul.f32 %v1916, %v1983
        %v1987 = vmul.f32 %v1917, %v1983
        %v1988 = vmul.f32 %v1918, %v1983
        %v1989 = vmul.f32 %v1919, %v1983
        %v1990 = vmul.f32 %v1920, %v1983
        %v1991 = vmul.f32 %v1921, %v1983
        %v1992 = vmul.f32 %v1922, %v1983
        %v1993 = vmul.f32 %v1923, %v1983
        %v1994 = vmul.f32 %v1924, %v1983
        %v1995 = vmul.f32 %v1925, %v1983
        %v1996 = vmul.f32 %v1926, %v1983
        %v1997 = vmul.f32 %v1927, %v1983
        %v1998 = vmul.f32 %v1928, %v1983
        %v1999 = vmul.f32 %v1929, %v1983
        %v2000 = vadd.f32 %v1964, %v1984
        %v2001 = vadd.f32 %v1965, %v1985
        %v2002 = vadd.f32 %v1966, %v1986
        %v2003 = vadd.f32 %v1967, %v1987
        %v2004 = vadd.f32 %v1968, %v1988
        %v2005 = vadd.f32 %v1969, %v1989
        %v2006 = vadd.f32 %v1970, %v1990
        %v2007 = vadd.f32 %v1971, %v1991
        %v2008 = vadd.f32 %v1972, %v1992
        %v2009 = vadd.f32 %v1973, %v1993
        %v2010 = vadd.f32 %v1974, %v1994
        %v2011 = vadd.f32 %v1975, %v1995
        %v2012 = vadd.f32 %v1976, %v1996
        %v2013 = vadd.f32 %v1977, %v1997
        %v2014 = vadd.f32 %v1978, %v1998
        %v2015 = vadd.f32 %v1979, %v1999
        %v2016 = vlaneseq
        %v2017 = vshrl.u32 %v2016, 7
        %v2018 = vsub.s32 2, %v2017
        %v2019 = vrot.slane %v1943, %v2018
        %v2020 = vmul.f32 %v1916, %v2019
        %v2021 = vmul.f32 %v1917, %v2019
        %v2022 = vmul.f32 %v1918, %v2019
        %v2023 = vmul.f32 %v1919, %v2019
        %v2024 = vmul.f32 %v1920, %v2019
        %v2025 = vmul.f32 %v1921, %v2019
        %v2026 = vmul.f32 %v1922, %v2019
        %v2027 = vmul.f32 %v1923, %v2019
        %v2028 = vmul.f32 %v1924, %v2019
        %v2029 = vmul.f32 %v1925, %v2019
        %v2030 = vmul.f32 %v1926, %v2019
        %v2031 = vmul.f32 %v1927, %v2019
        %v2032 = vmul.f32 %v1928, %v2019
        %v2033 = vmul.f32 %v1929, %v2019
        %v2034 = vmul.f32 %v1930, %v2019
        %v2035 = vmul.f32 %v1931, %v2019
        %v2036 = vadd.f32 %v2000, %v2020
        %v2037 = vadd.f32 %v2001, %v2021
        %v2038 = vadd.f32 %v2002, %v2022
        %v2039 = vadd.f32 %v2003, %v2023
        %v2040 = vadd.f32 %v2004, %v2024
        %v2041 = vadd.f32 %v2005, %v2025
        %v2042 = vadd.f32 %v2006, %v2026
        %v2043 = vadd.f32 %v2007, %v2027
        %v2044 = vadd.f32 %v2008, %v2028
        %v2045 = vadd.f32 %v2009, %v2029
        %v2046 = vadd.f32 %v2010, %v2030
        %v2047 = vadd.f32 %v2011, %v2031
        %v2048 = vadd.f32 %v2012, %v2032
        %v2049 = vadd.f32 %v2013, %v2033
        %v2050 = vadd.f32 %v2014, %v2034
        %v2051 = vadd.f32 %v2015, %v2035
        %v2052 = vlaneseq
        %v2053 = vshrl.u32 %v2052, 7
        %v2054 = vsub.s32 3, %v2053
        %v2055 = vrot.slane %v1943, %v2054
        %v2056 = vmul.f32 %v1918, %v2055
        %v2057 = vmul.f32 %v1919, %v2055
        %v2058 = vmul.f32 %v1920, %v2055
        %v2059 = vmul.f32 %v1921, %v2055
        %v2060 = vmul.f32 %v1922, %v2055
        %v2061 = vmul.f32 %v1923, %v2055
        %v2062 = vmul.f32 %v1924, %v2055
        %v2063 = vmul.f32 %v1925, %v2055
        %v2064 = vmul.f32 %v1926, %v2055
        %v2065 = vmul.f32 %v1927, %v2055
        %v2066 = vmul.f32 %v1928, %v2055
        %v2067 = vmul.f32 %v1929, %v2055
        %v2068 = vmul.f32 %v1930, %v2055
        %v2069 = vmul.f32 %v1931, %v2055
        %v2070 = vmul.f32 %v1932, %v2055
        %v2071 = vmul.f32 %v1933, %v2055
        %v2072 = vadd.f32 %v2036, %v2056
        %v2073 = vadd.f32 %v2037, %v2057
        %v2074 = vadd.f32 %v2038, %v2058
        %v2075 = vadd.f32 %v2039, %v2059
        %v2076 = vadd.f32 %v2040, %v2060
        %v2077 = vadd.f32 %v2041, %v2061
        %v2078 = vadd.f32 %v2042, %v2062
        %v2079 = vadd.f32 %v2043, %v2063
        %v2080 = vadd.f32 %v2044, %v2064
        %v2081 = vadd.f32 %v2045, %v2065
        %v2082 = vadd.f32 %v2046, %v2066
        %v2083 = vadd.f32 %v2047, %v2067
        %v2084 = vadd.f32 %v2048, %v2068
        %v2085 = vadd.f32 %v2049, %v2069
        %v2086 = vadd.f32 %v2050, %v2070
        %v2087 = vadd.f32 %v2051, %v2071
        %v2088 = vlaneseq
        %v2089 = vshrl.u32 %v2088, 7
        %v2090 = vsub.s32 4, %v2089
        %v2091 = vrot.slane %v1943, %v2090
        %v2092 = vmul.f32 %v1920, %v2091
        %v2093 = vmul.f32 %v1921, %v2091
        %v2094 = vmul.f32 %v1922, %v2091
        %v2095 = vmul.f32 %v1923, %v2091
        %v2096 = vmul.f32 %v1924, %v2091
        %v2097 = vmul.f32 %v1925, %v2091
        %v2098 = vmul.f32 %v1926, %v2091
        %v2099 = vmul.f32 %v1927, %v2091
        %v2100 = vmul.f32 %v1928, %v2091
        %v2101 = vmul.f32 %v1929, %v2091
        %v2102 = vmul.f32 %v1930, %v2091
        %v2103 = vmul.f32 %v1931, %v2091
        %v2104 = vmul.f32 %v1932, %v2091
        %v2105 = vmul.f32 %v1933, %v2091
        %v2106 = vmul.f32 %v1934, %v2091
        %v2107 = vmul.f32 %v1935, %v2091
        %v2108 = vadd.f32 %v2072, %v2092
        %v2109 = vadd.f32 %v2073, %v2093
        %v2110 = vadd.f32 %v2074, %v2094
        %v2111 = vadd.f32 %v2075, %v2095
        %v2112 = vadd.f32 %v2076, %v2096
        %v2113 = vadd.f32 %v2077, %v2097
        %v2114 = vadd.f32 %v2078, %v2098
        %v2115 = vadd.f32 %v2079, %v2099
        %v2116 = vadd.f32 %v2080, %v2100
        %v2117 = vadd.f32 %v2081, %v2101
        %v2118 = vadd.f32 %v2082, %v2102
        %v2119 = vadd.f32 %v2083, %v2103
        %v2120 = vadd.f32 %v2084, %v2104
        %v2121 = vadd.f32 %v2085, %v2105
        %v2122 = vadd.f32 %v2086, %v2106
        %v2123 = vadd.f32 %v2087, %v2107
        %v2124 = vlaneseq
        %v2125 = vshrl.u32 %v2124, 7
        %v2126 = vsub.s32 5, %v2125
        %v2127 = vrot.slane %v1943, %v2126
        %v2128 = vmul.f32 %v1922, %v2127
        %v2129 = vmul.f32 %v1923, %v2127
        %v2130 = vmul.f32 %v1924, %v2127
        %v2131 = vmul.f32 %v1925, %v2127
        %v2132 = vmul.f32 %v1926, %v2127
        %v2133 = vmul.f32 %v1927, %v2127
        %v2134 = vmul.f32 %v1928, %v2127
        %v2135 = vmul.f32 %v1929, %v2127
        %v2136 = vmul.f32 %v1930, %v2127
        %v2137 = vmul.f32 %v1931, %v2127
        %v2138 = vmul.f32 %v1932, %v2127
        %v2139 = vmul.f32 %v1933, %v2127
        %v2140 = vmul.f32 %v1934, %v2127
        %v2141 = vmul.f32 %v1935, %v2127
        %v2142 = vmul.f32 %v1936, %v2127
        %v2143 = vmul.f32 %v1937, %v2127
        %v2144 = vadd.f32 %v2108, %v2128
        %v2145 = vadd.f32 %v2109, %v2129
        %v2146 = vadd.f32 %v2110, %v2130
        %v2147 = vadd.f32 %v2111, %v2131
        %v2148 = vadd.f32 %v2112, %v2132
        %v2149 = vadd.f32 %v2113, %v2133
        %v2150 = vadd.f32 %v2114, %v2134
        %v2151 = vadd.f32 %v2115, %v2135
        %v2152 = vadd.f32 %v2116, %v2136
        %v2153 = vadd.f32 %v2117, %v2137
        %v2154 = vadd.f32 %v2118, %v2138
        %v2155 = vadd.f32 %v2119, %v2139
        %v2156 = vadd.f32 %v2120, %v2140
        %v2157 = vadd.f32 %v2121, %v2141
        %v2158 = vadd.f32 %v2122, %v2142
        %v2159 = vadd.f32 %v2123, %v2143
        %v2160 = vlaneseq
        %v2161 = vshrl.u32 %v2160, 7
        %v2162 = vsub.s32 6, %v2161
        %v2163 = vrot.slane %v1943, %v2162
        %v2164 = vmul.f32 %v1924, %v2163
        %v2165 = vmul.f32 %v1925, %v2163
        %v2166 = vmul.f32 %v1926, %v2163
        %v2167 = vmul.f32 %v1927, %v2163
        %v2168 = vmul.f32 %v1928, %v2163
        %v2169 = vmul.f32 %v1929, %v2163
        %v2170 = vmul.f32 %v1930, %v2163
        %v2171 = vmul.f32 %v1931, %v2163
        %v2172 = vmul.f32 %v1932, %v2163
        %v2173 = vmul.f32 %v1933, %v2163
        %v2174 = vmul.f32 %v1934, %v2163
        %v2175 = vmul.f32 %v1935, %v2163
        %v2176 = vmul.f32 %v1936, %v2163
        %v2177 = vmul.f32 %v1937, %v2163
        %v2178 = vmul.f32 %v1938, %v2163
        %v2179 = vmul.f32 %v1939, %v2163
        %v2180 = vadd.f32 %v2144, %v2164
        %v2181 = vadd.f32 %v2145, %v2165
        %v2182 = vadd.f32 %v2146, %v2166
        %v2183 = vadd.f32 %v2147, %v2167
        %v2184 = vadd.f32 %v2148, %v2168
        %v2185 = vadd.f32 %v2149, %v2169
        %v2186 = vadd.f32 %v2150, %v2170
        %v2187 = vadd.f32 %v2151, %v2171
        %v2188 = vadd.f32 %v2152, %v2172
        %v2189 = vadd.f32 %v2153, %v2173
        %v2190 = vadd.f32 %v2154, %v2174
        %v2191 = vadd.f32 %v2155, %v2175
        %v2192 = vadd.f32 %v2156, %v2176
        %v2193 = vadd.f32 %v2157, %v2177
        %v2194 = vadd.f32 %v2158, %v2178
        %v2195 = vadd.f32 %v2159, %v2179
        %v2196 = vlaneseq
        %v2197 = vshrl.u32 %v2196, 7
        %v2198 = vsub.s32 7, %v2197
        %v2199 = vrot.slane %v1943, %v2198
        %v2200 = vmul.f32 %v1926, %v2199
        %v2201 = vmul.f32 %v1927, %v2199
        %v2202 = vmul.f32 %v1928, %v2199
        %v2203 = vmul.f32 %v1929, %v2199
        %v2204 = vmul.f32 %v1930, %v2199
        %v2205 = vmul.f32 %v1931, %v2199
        %v2206 = vmul.f32 %v1932, %v2199
        %v2207 = vmul.f32 %v1933, %v2199
        %v2208 = vmul.f32 %v1934, %v2199
        %v2209 = vmul.f32 %v1935, %v2199
        %v2210 = vmul.f32 %v1936, %v2199
        %v2211 = vmul.f32 %v1937, %v2199
        %v2212 = vmul.f32 %v1938, %v2199
        %v2213 = vmul.f32 %v1939, %v2199
        %v2214 = vmul.f32 %v1940, %v2199
        %v2215 = vmul.f32 %v1941, %v2199
        %v2216 = vadd.f32 %v2180, %v2200
        %v2217 = vadd.f32 %v2181, %v2201
        %v2218 = vadd.f32 %v2182, %v2202
        %v2219 = vadd.f32 %v2183, %v2203
        %v2220 = vadd.f32 %v2184, %v2204
        %v2221 = vadd.f32 %v2185, %v2205
        %v2222 = vadd.f32 %v2186, %v2206
        %v2223 = vadd.f32 %v2187, %v2207
        %v2224 = vadd.f32 %v2188, %v2208
        %v2225 = vadd.f32 %v2189, %v2209
        %v2226 = vadd.f32 %v2190, %v2210
        %v2227 = vadd.f32 %v2191, %v2211
        %v2228 = vadd.f32 %v2192, %v2212
        %v2229 = vadd.f32 %v2193, %v2213
        %v2230 = vadd.f32 %v2194, %v2214
        %v2231 = vadd.f32 %v2195, %v2215
        %v2232 = vld [vmem:[%s632 + $0x5] sm:$0xff]
        %v2233 = vld [vmem:[%s632 + $0xd] sm:$0xff]
        %v2234 = vld [vmem:[%s632 + $0x1d] sm:$0xff]
        %v2235 = vld [vmem:[%s632 + $0x25] sm:$0xff]
        %v2236 = vld [vmem:[%s632 + $0x35] sm:$0xff]
        %v2237 = vld [vmem:[%s632 + $0x3d] sm:$0xff]
        %v2238 = vld [vmem:[%s632 + $0x4d] sm:$0xff]
        %v2239 = vld [vmem:[%s632 + $0x55] sm:$0xff]
        %v2240 = vld [vmem:[%s632 + $0x65] sm:$0xff]
        %v2241 = vld [vmem:[%s632 + $0x6d] sm:$0xff]
        %v2242 = vld [vmem:[%s632 + $0x7d] sm:$0xff]
        %v2243 = vld [vmem:[%s632 + $0x85] sm:$0xff]
        %v2244 = vld [vmem:[%s632 + $0x95] sm:$0xff]
        %v2245 = vld [vmem:[%s632 + $0x9d] sm:$0xff]
        %v2246 = vld [vmem:[%s632 + $0xad] sm:$0xff]
        %v2247 = vld [vmem:[%s632 + $0xb5] sm:$0xff]
        %v2248 = vld [vmem:[%s632 + $0xc5] sm:$0xff]
        %v2249 = vld [vmem:[%s632 + $0xcd] sm:$0xff]
        %v2250 = vld [vmem:[%s632 + $0xdd] sm:$0xff]
        %v2251 = vld [vmem:[%s632 + $0xe5] sm:$0xff]
        %v2252 = vld [vmem:[%s632 + $0xf5] sm:$0xff]
        %v2253 = vld [vmem:[%s632 + $0xfd] sm:$0xff]
        %v2254 = vld [vmem:[%s632 + $0x10d] sm:$0xff]
        %v2255 = vld [vmem:[%s632 + $0x115] sm:$0xff]
        %v2256 = vld [vmem:[%s632 + $0x125] sm:$0xff]
        %v2257 = vld [vmem:[%s632 + $0x12d] sm:$0xff]
        %v2258 = vld [vmem:[%s632 + $0x13d] sm:$0xff]
        %v2259 = vld [vmem:[%s632 + $0x145] sm:$0xff]
        %v2260 = vld [vmem:[%s632 + $0x155] sm:$0xff]
        %v2261 = vld [vmem:[%s632 + $0x15d] sm:$0xff]
        %s2262 = scalar_lea.vmem %s3, 40
        %v2263 = vld [vmem:[%s2262] sm:$0xff]
        %v2264 = vlaneseq
        %v2265 = vshrl.u32 %v2264, 7
        %v2266 = vsub.s32 0, %v2265
        %v2267 = vrot.slane %v2263, %v2266
        %v2268 = vmul.f32 %v2232, %v2267
        %v2269 = vmul.f32 %v2233, %v2267
        %v2270 = vmul.f32 %v2234, %v2267
        %v2271 = vmul.f32 %v2235, %v2267
        %v2272 = vmul.f32 %v2236, %v2267
        %v2273 = vmul.f32 %v2237, %v2267
        %v2274 = vmul.f32 %v2238, %v2267
        %v2275 = vmul.f32 %v2239, %v2267
        %v2276 = vmul.f32 %v2240, %v2267
        %v2277 = vmul.f32 %v2241, %v2267
        %v2278 = vmul.f32 %v2242, %v2267
        %v2279 = vmul.f32 %v2243, %v2267
        %v2280 = vmul.f32 %v2244, %v2267
        %v2281 = vmul.f32 %v2245, %v2267
        %v2282 = vmul.f32 %v2246, %v2267
        %v2283 = vmul.f32 %v2247, %v2267
        %v2284 = vadd.f32 %v2216, %v2268
        %v2285 = vadd.f32 %v2217, %v2269
        %v2286 = vadd.f32 %v2218, %v2270
        %v2287 = vadd.f32 %v2219, %v2271
        %v2288 = vadd.f32 %v2220, %v2272
        %v2289 = vadd.f32 %v2221, %v2273
        %v2290 = vadd.f32 %v2222, %v2274
        %v2291 = vadd.f32 %v2223, %v2275
        %v2292 = vadd.f32 %v2224, %v2276
        %v2293 = vadd.f32 %v2225, %v2277
        %v2294 = vadd.f32 %v2226, %v2278
        %v2295 = vadd.f32 %v2227, %v2279
        %v2296 = vadd.f32 %v2228, %v2280
        %v2297 = vadd.f32 %v2229, %v2281
        %v2298 = vadd.f32 %v2230, %v2282
        %v2299 = vadd.f32 %v2231, %v2283
        %v2300 = vlaneseq
        %v2301 = vshrl.u32 %v2300, 7
        %v2302 = vsub.s32 1, %v2301
        %v2303 = vrot.slane %v2263, %v2302
        %v2304 = vmul.f32 %v2234, %v2303
        %v2305 = vmul.f32 %v2235, %v2303
        %v2306 = vmul.f32 %v2236, %v2303
        %v2307 = vmul.f32 %v2237, %v2303
        %v2308 = vmul.f32 %v2238, %v2303
        %v2309 = vmul.f32 %v2239, %v2303
        %v2310 = vmul.f32 %v2240, %v2303
        %v2311 = vmul.f32 %v2241, %v2303
        %v2312 = vmul.f32 %v2242, %v2303
        %v2313 = vmul.f32 %v2243, %v2303
        %v2314 = vmul.f32 %v2244, %v2303
        %v2315 = vmul.f32 %v2245, %v2303
        %v2316 = vmul.f32 %v2246, %v2303
        %v2317 = vmul.f32 %v2247, %v2303
        %v2318 = vmul.f32 %v2248, %v2303
        %v2319 = vmul.f32 %v2249, %v2303
        %v2320 = vadd.f32 %v2284, %v2304
        %v2321 = vadd.f32 %v2285, %v2305
        %v2322 = vadd.f32 %v2286, %v2306
        %v2323 = vadd.f32 %v2287, %v2307
        %v2324 = vadd.f32 %v2288, %v2308
        %v2325 = vadd.f32 %v2289, %v2309
        %v2326 = vadd.f32 %v2290, %v2310
        %v2327 = vadd.f32 %v2291, %v2311
        %v2328 = vadd.f32 %v2292, %v2312
        %v2329 = vadd.f32 %v2293, %v2313
        %v2330 = vadd.f32 %v2294, %v2314
        %v2331 = vadd.f32 %v2295, %v2315
        %v2332 = vadd.f32 %v2296, %v2316
        %v2333 = vadd.f32 %v2297, %v2317
        %v2334 = vadd.f32 %v2298, %v2318
        %v2335 = vadd.f32 %v2299, %v2319
        %v2336 = vlaneseq
        %v2337 = vshrl.u32 %v2336, 7
        %v2338 = vsub.s32 2, %v2337
        %v2339 = vrot.slane %v2263, %v2338
        %v2340 = vmul.f32 %v2236, %v2339
        %v2341 = vmul.f32 %v2237, %v2339
        %v2342 = vmul.f32 %v2238, %v2339
        %v2343 = vmul.f32 %v2239, %v2339
        %v2344 = vmul.f32 %v2240, %v2339
        %v2345 = vmul.f32 %v2241, %v2339
        %v2346 = vmul.f32 %v2242, %v2339
        %v2347 = vmul.f32 %v2243, %v2339
        %v2348 = vmul.f32 %v2244, %v2339
        %v2349 = vmul.f32 %v2245, %v2339
        %v2350 = vmul.f32 %v2246, %v2339
        %v2351 = vmul.f32 %v2247, %v2339
        %v2352 = vmul.f32 %v2248, %v2339
        %v2353 = vmul.f32 %v2249, %v2339
        %v2354 = vmul.f32 %v2250, %v2339
        %v2355 = vmul.f32 %v2251, %v2339
        %v2356 = vadd.f32 %v2320, %v2340
        %v2357 = vadd.f32 %v2321, %v2341
        %v2358 = vadd.f32 %v2322, %v2342
        %v2359 = vadd.f32 %v2323, %v2343
        %v2360 = vadd.f32 %v2324, %v2344
        %v2361 = vadd.f32 %v2325, %v2345
        %v2362 = vadd.f32 %v2326, %v2346
        %v2363 = vadd.f32 %v2327, %v2347
        %v2364 = vadd.f32 %v2328, %v2348
        %v2365 = vadd.f32 %v2329, %v2349
        %v2366 = vadd.f32 %v2330, %v2350
        %v2367 = vadd.f32 %v2331, %v2351
        %v2368 = vadd.f32 %v2332, %v2352
        %v2369 = vadd.f32 %v2333, %v2353
        %v2370 = vadd.f32 %v2334, %v2354
        %v2371 = vadd.f32 %v2335, %v2355
        %v2372 = vlaneseq
        %v2373 = vshrl.u32 %v2372, 7
        %v2374 = vsub.s32 3, %v2373
        %v2375 = vrot.slane %v2263, %v2374
        %v2376 = vmul.f32 %v2238, %v2375
        %v2377 = vmul.f32 %v2239, %v2375
        %v2378 = vmul.f32 %v2240, %v2375
        %v2379 = vmul.f32 %v2241, %v2375
        %v2380 = vmul.f32 %v2242, %v2375
        %v2381 = vmul.f32 %v2243, %v2375
        %v2382 = vmul.f32 %v2244, %v2375
        %v2383 = vmul.f32 %v2245, %v2375
        %v2384 = vmul.f32 %v2246, %v2375
        %v2385 = vmul.f32 %v2247, %v2375
        %v2386 = vmul.f32 %v2248, %v2375
        %v2387 = vmul.f32 %v2249, %v2375
        %v2388 = vmul.f32 %v2250, %v2375
        %v2389 = vmul.f32 %v2251, %v2375
        %v2390 = vmul.f32 %v2252, %v2375
        %v2391 = vmul.f32 %v2253, %v2375
        %v2392 = vadd.f32 %v2356, %v2376
        %v2393 = vadd.f32 %v2357, %v2377
        %v2394 = vadd.f32 %v2358, %v2378
        %v2395 = vadd.f32 %v2359, %v2379
        %v2396 = vadd.f32 %v2360, %v2380
        %v2397 = vadd.f32 %v2361, %v2381
        %v2398 = vadd.f32 %v2362, %v2382
        %v2399 = vadd.f32 %v2363, %v2383
        %v2400 = vadd.f32 %v2364, %v2384
        %v2401 = vadd.f32 %v2365, %v2385
        %v2402 = vadd.f32 %v2366, %v2386
        %v2403 = vadd.f32 %v2367, %v2387
        %v2404 = vadd.f32 %v2368, %v2388
        %v2405 = vadd.f32 %v2369, %v2389
        %v2406 = vadd.f32 %v2370, %v2390
        %v2407 = vadd.f32 %v2371, %v2391
        %v2408 = vlaneseq
        %v2409 = vshrl.u32 %v2408, 7
        %v2410 = vsub.s32 4, %v2409
        %v2411 = vrot.slane %v2263, %v2410
        %v2412 = vmul.f32 %v2240, %v2411
        %v2413 = vmul.f32 %v2241, %v2411
        %v2414 = vmul.f32 %v2242, %v2411
        %v2415 = vmul.f32 %v2243, %v2411
        %v2416 = vmul.f32 %v2244, %v2411
        %v2417 = vmul.f32 %v2245, %v2411
        %v2418 = vmul.f32 %v2246, %v2411
        %v2419 = vmul.f32 %v2247, %v2411
        %v2420 = vmul.f32 %v2248, %v2411
        %v2421 = vmul.f32 %v2249, %v2411
        %v2422 = vmul.f32 %v2250, %v2411
        %v2423 = vmul.f32 %v2251, %v2411
        %v2424 = vmul.f32 %v2252, %v2411
        %v2425 = vmul.f32 %v2253, %v2411
        %v2426 = vmul.f32 %v2254, %v2411
        %v2427 = vmul.f32 %v2255, %v2411
        %v2428 = vadd.f32 %v2392, %v2412
        %v2429 = vadd.f32 %v2393, %v2413
        %v2430 = vadd.f32 %v2394, %v2414
        %v2431 = vadd.f32 %v2395, %v2415
        %v2432 = vadd.f32 %v2396, %v2416
        %v2433 = vadd.f32 %v2397, %v2417
        %v2434 = vadd.f32 %v2398, %v2418
        %v2435 = vadd.f32 %v2399, %v2419
        %v2436 = vadd.f32 %v2400, %v2420
        %v2437 = vadd.f32 %v2401, %v2421
        %v2438 = vadd.f32 %v2402, %v2422
        %v2439 = vadd.f32 %v2403, %v2423
        %v2440 = vadd.f32 %v2404, %v2424
        %v2441 = vadd.f32 %v2405, %v2425
        %v2442 = vadd.f32 %v2406, %v2426
        %v2443 = vadd.f32 %v2407, %v2427
        %v2444 = vlaneseq
        %v2445 = vshrl.u32 %v2444, 7
        %v2446 = vsub.s32 5, %v2445
        %v2447 = vrot.slane %v2263, %v2446
        %v2448 = vmul.f32 %v2242, %v2447
        %v2449 = vmul.f32 %v2243, %v2447
        %v2450 = vmul.f32 %v2244, %v2447
        %v2451 = vmul.f32 %v2245, %v2447
        %v2452 = vmul.f32 %v2246, %v2447
        %v2453 = vmul.f32 %v2247, %v2447
        %v2454 = vmul.f32 %v2248, %v2447
        %v2455 = vmul.f32 %v2249, %v2447
        %v2456 = vmul.f32 %v2250, %v2447
        %v2457 = vmul.f32 %v2251, %v2447
        %v2458 = vmul.f32 %v2252, %v2447
        %v2459 = vmul.f32 %v2253, %v2447
        %v2460 = vmul.f32 %v2254, %v2447
        %v2461 = vmul.f32 %v2255, %v2447
        %v2462 = vmul.f32 %v2256, %v2447
        %v2463 = vmul.f32 %v2257, %v2447
        %v2464 = vadd.f32 %v2428, %v2448
        %v2465 = vadd.f32 %v2429, %v2449
        %v2466 = vadd.f32 %v2430, %v2450
        %v2467 = vadd.f32 %v2431, %v2451
        %v2468 = vadd.f32 %v2432, %v2452
        %v2469 = vadd.f32 %v2433, %v2453
        %v2470 = vadd.f32 %v2434, %v2454
        %v2471 = vadd.f32 %v2435, %v2455
        %v2472 = vadd.f32 %v2436, %v2456
        %v2473 = vadd.f32 %v2437, %v2457
        %v2474 = vadd.f32 %v2438, %v2458
        %v2475 = vadd.f32 %v2439, %v2459
        %v2476 = vadd.f32 %v2440, %v2460
        %v2477 = vadd.f32 %v2441, %v2461
        %v2478 = vadd.f32 %v2442, %v2462
        %v2479 = vadd.f32 %v2443, %v2463
        %v2480 = vlaneseq
        %v2481 = vshrl.u32 %v2480, 7
        %v2482 = vsub.s32 6, %v2481
        %v2483 = vrot.slane %v2263, %v2482
        %v2484 = vmul.f32 %v2244, %v2483
        %v2485 = vmul.f32 %v2245, %v2483
        %v2486 = vmul.f32 %v2246, %v2483
        %v2487 = vmul.f32 %v2247, %v2483
        %v2488 = vmul.f32 %v2248, %v2483
        %v2489 = vmul.f32 %v2249, %v2483
        %v2490 = vmul.f32 %v2250, %v2483
        %v2491 = vmul.f32 %v2251, %v2483
        %v2492 = vmul.f32 %v2252, %v2483
        %v2493 = vmul.f32 %v2253, %v2483
        %v2494 = vmul.f32 %v2254, %v2483
        %v2495 = vmul.f32 %v2255, %v2483
        %v2496 = vmul.f32 %v2256, %v2483
        %v2497 = vmul.f32 %v2257, %v2483
        %v2498 = vmul.f32 %v2258, %v2483
        %v2499 = vmul.f32 %v2259, %v2483
        %v2500 = vadd.f32 %v2464, %v2484
        %v2501 = vadd.f32 %v2465, %v2485
        %v2502 = vadd.f32 %v2466, %v2486
        %v2503 = vadd.f32 %v2467, %v2487
        %v2504 = vadd.f32 %v2468, %v2488
        %v2505 = vadd.f32 %v2469, %v2489
        %v2506 = vadd.f32 %v2470, %v2490
        %v2507 = vadd.f32 %v2471, %v2491
        %v2508 = vadd.f32 %v2472, %v2492
        %v2509 = vadd.f32 %v2473, %v2493
        %v2510 = vadd.f32 %v2474, %v2494
        %v2511 = vadd.f32 %v2475, %v2495
        %v2512 = vadd.f32 %v2476, %v2496
        %v2513 = vadd.f32 %v2477, %v2497
        %v2514 = vadd.f32 %v2478, %v2498
        %v2515 = vadd.f32 %v2479, %v2499
        %v2516 = vlaneseq
        %v2517 = vshrl.u32 %v2516, 7
        %v2518 = vsub.s32 7, %v2517
        %v2519 = vrot.slane %v2263, %v2518
        %v2520 = vmul.f32 %v2246, %v2519
        %v2521 = vmul.f32 %v2247, %v2519
        %v2522 = vmul.f32 %v2248, %v2519
        %v2523 = vmul.f32 %v2249, %v2519
        %v2524 = vmul.f32 %v2250, %v2519
        %v2525 = vmul.f32 %v2251, %v2519
        %v2526 = vmul.f32 %v2252, %v2519
        %v2527 = vmul.f32 %v2253, %v2519
        %v2528 = vmul.f32 %v2254, %v2519
        %v2529 = vmul.f32 %v2255, %v2519
        %v2530 = vmul.f32 %v2256, %v2519
        %v2531 = vmul.f32 %v2257, %v2519
        %v2532 = vmul.f32 %v2258, %v2519
        %v2533 = vmul.f32 %v2259, %v2519
        %v2534 = vmul.f32 %v2260, %v2519
        %v2535 = vmul.f32 %v2261, %v2519
        %v2536 = vadd.f32 %v2500, %v2520
        %v2537 = vadd.f32 %v2501, %v2521
        %v2538 = vadd.f32 %v2502, %v2522
        %v2539 = vadd.f32 %v2503, %v2523
        %v2540 = vadd.f32 %v2504, %v2524
        %v2541 = vadd.f32 %v2505, %v2525
        %v2542 = vadd.f32 %v2506, %v2526
        %v2543 = vadd.f32 %v2507, %v2527
        %v2544 = vadd.f32 %v2508, %v2528
        %v2545 = vadd.f32 %v2509, %v2529
        %v2546 = vadd.f32 %v2510, %v2530
        %v2547 = vadd.f32 %v2511, %v2531
        %v2548 = vadd.f32 %v2512, %v2532
        %v2549 = vadd.f32 %v2513, %v2533
        %v2550 = vadd.f32 %v2514, %v2534
        %v2551 = vadd.f32 %v2515, %v2535
        %v2552 = vld [vmem:[%s632 + $0x6] sm:$0xff]
        %v2553 = vld [vmem:[%s632 + $0xe] sm:$0xff]
        %v2554 = vld [vmem:[%s632 + $0x1e] sm:$0xff]
        %v2555 = vld [vmem:[%s632 + $0x26] sm:$0xff]
        %v2556 = vld [vmem:[%s632 + $0x36] sm:$0xff]
        %v2557 = vld [vmem:[%s632 + $0x3e] sm:$0xff]
        %v2558 = vld [vmem:[%s632 + $0x4e] sm:$0xff]
        %v2559 = vld [vmem:[%s632 + $0x56] sm:$0xff]
        %v2560 = vld [vmem:[%s632 + $0x66] sm:$0xff]
        %v2561 = vld [vmem:[%s632 + $0x6e] sm:$0xff]
        %v2562 = vld [vmem:[%s632 + $0x7e] sm:$0xff]
        %v2563 = vld [vmem:[%s632 + $0x86] sm:$0xff]
        %v2564 = vld [vmem:[%s632 + $0x96] sm:$0xff]
        %v2565 = vld [vmem:[%s632 + $0x9e] sm:$0xff]
        %v2566 = vld [vmem:[%s632 + $0xae] sm:$0xff]
        %v2567 = vld [vmem:[%s632 + $0xb6] sm:$0xff]
        %v2568 = vld [vmem:[%s632 + $0xc6] sm:$0xff]
        %v2569 = vld [vmem:[%s632 + $0xce] sm:$0xff]
        %v2570 = vld [vmem:[%s632 + $0xde] sm:$0xff]
        %v2571 = vld [vmem:[%s632 + $0xe6] sm:$0xff]
        %v2572 = vld [vmem:[%s632 + $0xf6] sm:$0xff]
        %v2573 = vld [vmem:[%s632 + $0xfe] sm:$0xff]
        %v2574 = vld [vmem:[%s632 + $0x10e] sm:$0xff]
        %v2575 = vld [vmem:[%s632 + $0x116] sm:$0xff]
        %v2576 = vld [vmem:[%s632 + $0x126] sm:$0xff]
        %v2577 = vld [vmem:[%s632 + $0x12e] sm:$0xff]
        %v2578 = vld [vmem:[%s632 + $0x13e] sm:$0xff]
        %v2579 = vld [vmem:[%s632 + $0x146] sm:$0xff]
        %v2580 = vld [vmem:[%s632 + $0x156] sm:$0xff]
        %v2581 = vld [vmem:[%s632 + $0x15e] sm:$0xff]
        %s2582 = scalar_lea.vmem %s3, 48
        %v2583 = vld [vmem:[%s2582] sm:$0xff]
        %v2584 = vlaneseq
        %v2585 = vshrl.u32 %v2584, 7
        %v2586 = vsub.s32 0, %v2585
        %v2587 = vrot.slane %v2583, %v2586
        %v2588 = vmul.f32 %v2552, %v2587
        %v2589 = vmul.f32 %v2553, %v2587
        %v2590 = vmul.f32 %v2554, %v2587
        %v2591 = vmul.f32 %v2555, %v2587
        %v2592 = vmul.f32 %v2556, %v2587
        %v2593 = vmul.f32 %v2557, %v2587
        %v2594 = vmul.f32 %v2558, %v2587
        %v2595 = vmul.f32 %v2559, %v2587
        %v2596 = vmul.f32 %v2560, %v2587
        %v2597 = vmul.f32 %v2561, %v2587
        %v2598 = vmul.f32 %v2562, %v2587
        %v2599 = vmul.f32 %v2563, %v2587
        %v2600 = vmul.f32 %v2564, %v2587
        %v2601 = vmul.f32 %v2565, %v2587
        %v2602 = vmul.f32 %v2566, %v2587
        %v2603 = vmul.f32 %v2567, %v2587
        %v2604 = vadd.f32 %v2536, %v2588
        %v2605 = vadd.f32 %v2537, %v2589
        %v2606 = vadd.f32 %v2538, %v2590
        %v2607 = vadd.f32 %v2539, %v2591
        %v2608 = vadd.f32 %v2540, %v2592
        %v2609 = vadd.f32 %v2541, %v2593
        %v2610 = vadd.f32 %v2542, %v2594
        %v2611 = vadd.f32 %v2543, %v2595
        %v2612 = vadd.f32 %v2544, %v2596
        %v2613 = vadd.f32 %v2545, %v2597
        %v2614 = vadd.f32 %v2546, %v2598
        %v2615 = vadd.f32 %v2547, %v2599
        %v2616 = vadd.f32 %v2548, %v2600
        %v2617 = vadd.f32 %v2549, %v2601
        %v2618 = vadd.f32 %v2550, %v2602
        %v2619 = vadd.f32 %v2551, %v2603
        %v2620 = vlaneseq
        %v2621 = vshrl.u32 %v2620, 7
        %v2622 = vsub.s32 1, %v2621
        %v2623 = vrot.slane %v2583, %v2622
        %v2624 = vmul.f32 %v2554, %v2623
        %v2625 = vmul.f32 %v2555, %v2623
        %v2626 = vmul.f32 %v2556, %v2623
        %v2627 = vmul.f32 %v2557, %v2623
        %v2628 = vmul.f32 %v2558, %v2623
        %v2629 = vmul.f32 %v2559, %v2623
        %v2630 = vmul.f32 %v2560, %v2623
        %v2631 = vmul.f32 %v2561, %v2623
        %v2632 = vmul.f32 %v2562, %v2623
        %v2633 = vmul.f32 %v2563, %v2623
        %v2634 = vmul.f32 %v2564, %v2623
        %v2635 = vmul.f32 %v2565, %v2623
        %v2636 = vmul.f32 %v2566, %v2623
        %v2637 = vmul.f32 %v2567, %v2623
        %v2638 = vmul.f32 %v2568, %v2623
        %v2639 = vmul.f32 %v2569, %v2623
        %v2640 = vadd.f32 %v2604, %v2624
        %v2641 = vadd.f32 %v2605, %v2625
        %v2642 = vadd.f32 %v2606, %v2626
        %v2643 = vadd.f32 %v2607, %v2627
        %v2644 = vadd.f32 %v2608, %v2628
        %v2645 = vadd.f32 %v2609, %v2629
        %v2646 = vadd.f32 %v2610, %v2630
        %v2647 = vadd.f32 %v2611, %v2631
        %v2648 = vadd.f32 %v2612, %v2632
        %v2649 = vadd.f32 %v2613, %v2633
        %v2650 = vadd.f32 %v2614, %v2634
        %v2651 = vadd.f32 %v2615, %v2635
        %v2652 = vadd.f32 %v2616, %v2636
        %v2653 = vadd.f32 %v2617, %v2637
        %v2654 = vadd.f32 %v2618, %v2638
        %v2655 = vadd.f32 %v2619, %v2639
        %v2656 = vlaneseq
        %v2657 = vshrl.u32 %v2656, 7
        %v2658 = vsub.s32 2, %v2657
        %v2659 = vrot.slane %v2583, %v2658
        %v2660 = vmul.f32 %v2556, %v2659
        %v2661 = vmul.f32 %v2557, %v2659
        %v2662 = vmul.f32 %v2558, %v2659
        %v2663 = vmul.f32 %v2559, %v2659
        %v2664 = vmul.f32 %v2560, %v2659
        %v2665 = vmul.f32 %v2561, %v2659
        %v2666 = vmul.f32 %v2562, %v2659
        %v2667 = vmul.f32 %v2563, %v2659
        %v2668 = vmul.f32 %v2564, %v2659
        %v2669 = vmul.f32 %v2565, %v2659
        %v2670 = vmul.f32 %v2566, %v2659
        %v2671 = vmul.f32 %v2567, %v2659
        %v2672 = vmul.f32 %v2568, %v2659
        %v2673 = vmul.f32 %v2569, %v2659
        %v2674 = vmul.f32 %v2570, %v2659
        %v2675 = vmul.f32 %v2571, %v2659
        %v2676 = vadd.f32 %v2640, %v2660
        %v2677 = vadd.f32 %v2641, %v2661
        %v2678 = vadd.f32 %v2642, %v2662
        %v2679 = vadd.f32 %v2643, %v2663
        %v2680 = vadd.f32 %v2644, %v2664
        %v2681 = vadd.f32 %v2645, %v2665
        %v2682 = vadd.f32 %v2646, %v2666
        %v2683 = vadd.f32 %v2647, %v2667
        %v2684 = vadd.f32 %v2648, %v2668
        %v2685 = vadd.f32 %v2649, %v2669
        %v2686 = vadd.f32 %v2650, %v2670
        %v2687 = vadd.f32 %v2651, %v2671
        %v2688 = vadd.f32 %v2652, %v2672
        %v2689 = vadd.f32 %v2653, %v2673
        %v2690 = vadd.f32 %v2654, %v2674
        %v2691 = vadd.f32 %v2655, %v2675
        %v2692 = vlaneseq
        %v2693 = vshrl.u32 %v2692, 7
        %v2694 = vsub.s32 3, %v2693
        %v2695 = vrot.slane %v2583, %v2694
        %v2696 = vmul.f32 %v2558, %v2695
        %v2697 = vmul.f32 %v2559, %v2695
        %v2698 = vmul.f32 %v2560, %v2695
        %v2699 = vmul.f32 %v2561, %v2695
        %v2700 = vmul.f32 %v2562, %v2695
        %v2701 = vmul.f32 %v2563, %v2695
        %v2702 = vmul.f32 %v2564, %v2695
        %v2703 = vmul.f32 %v2565, %v2695
        %v2704 = vmul.f32 %v2566, %v2695
        %v2705 = vmul.f32 %v2567, %v2695
        %v2706 = vmul.f32 %v2568, %v2695
        %v2707 = vmul.f32 %v2569, %v2695
        %v2708 = vmul.f32 %v2570, %v2695
        %v2709 = vmul.f32 %v2571, %v2695
        %v2710 = vmul.f32 %v2572, %v2695
        %v2711 = vmul.f32 %v2573, %v2695
        %v2712 = vadd.f32 %v2676, %v2696
        %v2713 = vadd.f32 %v2677, %v2697
        %v2714 = vadd.f32 %v2678, %v2698
        %v2715 = vadd.f32 %v2679, %v2699
        %v2716 = vadd.f32 %v2680, %v2700
        %v2717 = vadd.f32 %v2681, %v2701
        %v2718 = vadd.f32 %v2682, %v2702
        %v2719 = vadd.f32 %v2683, %v2703
        %v2720 = vadd.f32 %v2684, %v2704
        %v2721 = vadd.f32 %v2685, %v2705
        %v2722 = vadd.f32 %v2686, %v2706
        %v2723 = vadd.f32 %v2687, %v2707
        %v2724 = vadd.f32 %v2688, %v2708
        %v2725 = vadd.f32 %v2689, %v2709
        %v2726 = vadd.f32 %v2690, %v2710
        %v2727 = vadd.f32 %v2691, %v2711
        %v2728 = vlaneseq
        %v2729 = vshrl.u32 %v2728, 7
        %v2730 = vsub.s32 4, %v2729
        %v2731 = vrot.slane %v2583, %v2730
        %v2732 = vmul.f32 %v2560, %v2731
        %v2733 = vmul.f32 %v2561, %v2731
        %v2734 = vmul.f32 %v2562, %v2731
        %v2735 = vmul.f32 %v2563, %v2731
        %v2736 = vmul.f32 %v2564, %v2731
        %v2737 = vmul.f32 %v2565, %v2731
        %v2738 = vmul.f32 %v2566, %v2731
        %v2739 = vmul.f32 %v2567, %v2731
        %v2740 = vmul.f32 %v2568, %v2731
        %v2741 = vmul.f32 %v2569, %v2731
        %v2742 = vmul.f32 %v2570, %v2731
        %v2743 = vmul.f32 %v2571, %v2731
        %v2744 = vmul.f32 %v2572, %v2731
        %v2745 = vmul.f32 %v2573, %v2731
        %v2746 = vmul.f32 %v2574, %v2731
        %v2747 = vmul.f32 %v2575, %v2731
        %v2748 = vadd.f32 %v2712, %v2732
        %v2749 = vadd.f32 %v2713, %v2733
        %v2750 = vadd.f32 %v2714, %v2734
        %v2751 = vadd.f32 %v2715, %v2735
        %v2752 = vadd.f32 %v2716, %v2736
        %v2753 = vadd.f32 %v2717, %v2737
        %v2754 = vadd.f32 %v2718, %v2738
        %v2755 = vadd.f32 %v2719, %v2739
        %v2756 = vadd.f32 %v2720, %v2740
        %v2757 = vadd.f32 %v2721, %v2741
        %v2758 = vadd.f32 %v2722, %v2742
        %v2759 = vadd.f32 %v2723, %v2743
        %v2760 = vadd.f32 %v2724, %v2744
        %v2761 = vadd.f32 %v2725, %v2745
        %v2762 = vadd.f32 %v2726, %v2746
        %v2763 = vadd.f32 %v2727, %v2747
        %v2764 = vlaneseq
        %v2765 = vshrl.u32 %v2764, 7
        %v2766 = vsub.s32 5, %v2765
        %v2767 = vrot.slane %v2583, %v2766
        %v2768 = vmul.f32 %v2562, %v2767
        %v2769 = vmul.f32 %v2563, %v2767
        %v2770 = vmul.f32 %v2564, %v2767
        %v2771 = vmul.f32 %v2565, %v2767
        %v2772 = vmul.f32 %v2566, %v2767
        %v2773 = vmul.f32 %v2567, %v2767
        %v2774 = vmul.f32 %v2568, %v2767
        %v2775 = vmul.f32 %v2569, %v2767
        %v2776 = vmul.f32 %v2570, %v2767
        %v2777 = vmul.f32 %v2571, %v2767
        %v2778 = vmul.f32 %v2572, %v2767
        %v2779 = vmul.f32 %v2573, %v2767
        %v2780 = vmul.f32 %v2574, %v2767
        %v2781 = vmul.f32 %v2575, %v2767
        %v2782 = vmul.f32 %v2576, %v2767
        %v2783 = vmul.f32 %v2577, %v2767
        %v2784 = vadd.f32 %v2748, %v2768
        %v2785 = vadd.f32 %v2749, %v2769
        %v2786 = vadd.f32 %v2750, %v2770
        %v2787 = vadd.f32 %v2751, %v2771
        %v2788 = vadd.f32 %v2752, %v2772
        %v2789 = vadd.f32 %v2753, %v2773
        %v2790 = vadd.f32 %v2754, %v2774
        %v2791 = vadd.f32 %v2755, %v2775
        %v2792 = vadd.f32 %v2756, %v2776
        %v2793 = vadd.f32 %v2757, %v2777
        %v2794 = vadd.f32 %v2758, %v2778
        %v2795 = vadd.f32 %v2759, %v2779
        %v2796 = vadd.f32 %v2760, %v2780
        %v2797 = vadd.f32 %v2761, %v2781
        %v2798 = vadd.f32 %v2762, %v2782
        %v2799 = vadd.f32 %v2763, %v2783
        %v2800 = vlaneseq
        %v2801 = vshrl.u32 %v2800, 7
        %v2802 = vsub.s32 6, %v2801
        %v2803 = vrot.slane %v2583, %v2802
        %v2804 = vmul.f32 %v2564, %v2803
        %v2805 = vmul.f32 %v2565, %v2803
        %v2806 = vmul.f32 %v2566, %v2803
        %v2807 = vmul.f32 %v2567, %v2803
        %v2808 = vmul.f32 %v2568, %v2803
        %v2809 = vmul.f32 %v2569, %v2803
        %v2810 = vmul.f32 %v2570, %v2803
        %v2811 = vmul.f32 %v2571, %v2803
        %v2812 = vmul.f32 %v2572, %v2803
        %v2813 = vmul.f32 %v2573, %v2803
        %v2814 = vmul.f32 %v2574, %v2803
        %v2815 = vmul.f32 %v2575, %v2803
        %v2816 = vmul.f32 %v2576, %v2803
        %v2817 = vmul.f32 %v2577, %v2803
        %v2818 = vmul.f32 %v2578, %v2803
        %v2819 = vmul.f32 %v2579, %v2803
        %v2820 = vadd.f32 %v2784, %v2804
        %v2821 = vadd.f32 %v2785, %v2805
        %v2822 = vadd.f32 %v2786, %v2806
        %v2823 = vadd.f32 %v2787, %v2807
        %v2824 = vadd.f32 %v2788, %v2808
        %v2825 = vadd.f32 %v2789, %v2809
        %v2826 = vadd.f32 %v2790, %v2810
        %v2827 = vadd.f32 %v2791, %v2811
        %v2828 = vadd.f32 %v2792, %v2812
        %v2829 = vadd.f32 %v2793, %v2813
        %v2830 = vadd.f32 %v2794, %v2814
        %v2831 = vadd.f32 %v2795, %v2815
        %v2832 = vadd.f32 %v2796, %v2816
        %v2833 = vadd.f32 %v2797, %v2817
        %v2834 = vadd.f32 %v2798, %v2818
        %v2835 = vadd.f32 %v2799, %v2819
        %v2836 = vlaneseq
        %v2837 = vshrl.u32 %v2836, 7
        %v2838 = vsub.s32 7, %v2837
        %v2839 = vrot.slane %v2583, %v2838
        %v2840 = vmul.f32 %v2566, %v2839
        %v2841 = vmul.f32 %v2567, %v2839
        %v2842 = vmul.f32 %v2568, %v2839
        %v2843 = vmul.f32 %v2569, %v2839
        %v2844 = vmul.f32 %v2570, %v2839
        %v2845 = vmul.f32 %v2571, %v2839
        %v2846 = vmul.f32 %v2572, %v2839
        %v2847 = vmul.f32 %v2573, %v2839
        %v2848 = vmul.f32 %v2574, %v2839
        %v2849 = vmul.f32 %v2575, %v2839
        %v2850 = vmul.f32 %v2576, %v2839
        %v2851 = vmul.f32 %v2577, %v2839
        %v2852 = vmul.f32 %v2578, %v2839
        %v2853 = vmul.f32 %v2579, %v2839
        %v2854 = vmul.f32 %v2580, %v2839
        %v2855 = vmul.f32 %v2581, %v2839
        %v2856 = vadd.f32 %v2820, %v2840
        %v2857 = vadd.f32 %v2821, %v2841
        %v2858 = vadd.f32 %v2822, %v2842
        %v2859 = vadd.f32 %v2823, %v2843
        %v2860 = vadd.f32 %v2824, %v2844
        %v2861 = vadd.f32 %v2825, %v2845
        %v2862 = vadd.f32 %v2826, %v2846
        %v2863 = vadd.f32 %v2827, %v2847
        %v2864 = vadd.f32 %v2828, %v2848
        %v2865 = vadd.f32 %v2829, %v2849
        %v2866 = vadd.f32 %v2830, %v2850
        %v2867 = vadd.f32 %v2831, %v2851
        %v2868 = vadd.f32 %v2832, %v2852
        %v2869 = vadd.f32 %v2833, %v2853
        %v2870 = vadd.f32 %v2834, %v2854
        %v2871 = vadd.f32 %v2835, %v2855
        %v2872 = vld [vmem:[%s632 + $0x7] sm:$0xff]
        %v2873 = vld [vmem:[%s632 + $0xf] sm:$0xff]
        %v2874 = vld [vmem:[%s632 + $0x1f] sm:$0xff]
        %v2875 = vld [vmem:[%s632 + $0x27] sm:$0xff]
        %v2876 = vld [vmem:[%s632 + $0x37] sm:$0xff]
        %v2877 = vld [vmem:[%s632 + $0x3f] sm:$0xff]
        %v2878 = vld [vmem:[%s632 + $0x4f] sm:$0xff]
        %v2879 = vld [vmem:[%s632 + $0x57] sm:$0xff]
        %v2880 = vld [vmem:[%s632 + $0x67] sm:$0xff]
        %v2881 = vld [vmem:[%s632 + $0x6f] sm:$0xff]
        %v2882 = vld [vmem:[%s632 + $0x7f] sm:$0xff]
        %v2883 = vld [vmem:[%s632 + $0x87] sm:$0xff]
        %v2884 = vld [vmem:[%s632 + $0x97] sm:$0xff]
        %v2885 = vld [vmem:[%s632 + $0x9f] sm:$0xff]
        %v2886 = vld [vmem:[%s632 + $0xaf] sm:$0xff]
        %v2887 = vld [vmem:[%s632 + $0xb7] sm:$0xff]
        %v2888 = vld [vmem:[%s632 + $0xc7] sm:$0xff]
        %v2889 = vld [vmem:[%s632 + $0xcf] sm:$0xff]
        %v2890 = vld [vmem:[%s632 + $0xdf] sm:$0xff]
        %v2891 = vld [vmem:[%s632 + $0xe7] sm:$0xff]
        %v2892 = vld [vmem:[%s632 + $0xf7] sm:$0xff]
        %v2893 = vld [vmem:[%s632 + $0xff] sm:$0xff]
        %v2894 = vld [vmem:[%s632 + $0x10f] sm:$0xff]
        %v2895 = vld [vmem:[%s632 + $0x117] sm:$0xff]
        %v2896 = vld [vmem:[%s632 + $0x127] sm:$0xff]
        %v2897 = vld [vmem:[%s632 + $0x12f] sm:$0xff]
        %v2898 = vld [vmem:[%s632 + $0x13f] sm:$0xff]
        %v2899 = vld [vmem:[%s632 + $0x147] sm:$0xff]
        %v2900 = vld [vmem:[%s632 + $0x157] sm:$0xff]
        %v2901 = vld [vmem:[%s632 + $0x15f] sm:$0xff]
        %s2902 = scalar_lea.vmem %s3, 56
        %v2903 = vld [vmem:[%s2902] sm:$0xff]
        %v2904 = vlaneseq
        %v2905 = vshrl.u32 %v2904, 7
        %v2906 = vsub.s32 0, %v2905
        %v2907 = vrot.slane %v2903, %v2906
        %v2908 = vmul.f32 %v2872, %v2907
        %v2909 = vmul.f32 %v2873, %v2907
        %v2910 = vmul.f32 %v2874, %v2907
        %v2911 = vmul.f32 %v2875, %v2907
        %v2912 = vmul.f32 %v2876, %v2907
        %v2913 = vmul.f32 %v2877, %v2907
        %v2914 = vmul.f32 %v2878, %v2907
        %v2915 = vmul.f32 %v2879, %v2907
        %v2916 = vmul.f32 %v2880, %v2907
        %v2917 = vmul.f32 %v2881, %v2907
        %v2918 = vmul.f32 %v2882, %v2907
        %v2919 = vmul.f32 %v2883, %v2907
        %v2920 = vmul.f32 %v2884, %v2907
        %v2921 = vmul.f32 %v2885, %v2907
        %v2922 = vmul.f32 %v2886, %v2907
        %v2923 = vmul.f32 %v2887, %v2907
        %v2924 = vadd.f32 %v2856, %v2908
        %v2925 = vadd.f32 %v2857, %v2909
        %v2926 = vadd.f32 %v2858, %v2910
        %v2927 = vadd.f32 %v2859, %v2911
        %v2928 = vadd.f32 %v2860, %v2912
        %v2929 = vadd.f32 %v2861, %v2913
        %v2930 = vadd.f32 %v2862, %v2914
        %v2931 = vadd.f32 %v2863, %v2915
        %v2932 = vadd.f32 %v2864, %v2916
        %v2933 = vadd.f32 %v2865, %v2917
        %v2934 = vadd.f32 %v2866, %v2918
        %v2935 = vadd.f32 %v2867, %v2919
        %v2936 = vadd.f32 %v2868, %v2920
        %v2937 = vadd.f32 %v2869, %v2921
        %v2938 = vadd.f32 %v2870, %v2922
        %v2939 = vadd.f32 %v2871, %v2923
        %v2940 = vlaneseq
        %v2941 = vshrl.u32 %v2940, 7
        %v2942 = vsub.s32 1, %v2941
        %v2943 = vrot.slane %v2903, %v2942
        %v2944 = vmul.f32 %v2874, %v2943
        %v2945 = vmul.f32 %v2875, %v2943
        %v2946 = vmul.f32 %v2876, %v2943
        %v2947 = vmul.f32 %v2877, %v2943
        %v2948 = vmul.f32 %v2878, %v2943
        %v2949 = vmul.f32 %v2879, %v2943
        %v2950 = vmul.f32 %v2880, %v2943
        %v2951 = vmul.f32 %v2881, %v2943
        %v2952 = vmul.f32 %v2882, %v2943
        %v2953 = vmul.f32 %v2883, %v2943
        %v2954 = vmul.f32 %v2884, %v2943
        %v2955 = vmul.f32 %v2885, %v2943
        %v2956 = vmul.f32 %v2886, %v2943
        %v2957 = vmul.f32 %v2887, %v2943
        %v2958 = vmul.f32 %v2888, %v2943
        %v2959 = vmul.f32 %v2889, %v2943
        %v2960 = vadd.f32 %v2924, %v2944
        %v2961 = vadd.f32 %v2925, %v2945
        %v2962 = vadd.f32 %v2926, %v2946
        %v2963 = vadd.f32 %v2927, %v2947
        %v2964 = vadd.f32 %v2928, %v2948
        %v2965 = vadd.f32 %v2929, %v2949
        %v2966 = vadd.f32 %v2930, %v2950
        %v2967 = vadd.f32 %v2931, %v2951
        %v2968 = vadd.f32 %v2932, %v2952
        %v2969 = vadd.f32 %v2933, %v2953
        %v2970 = vadd.f32 %v2934, %v2954
        %v2971 = vadd.f32 %v2935, %v2955
        %v2972 = vadd.f32 %v2936, %v2956
        %v2973 = vadd.f32 %v2937, %v2957
        %v2974 = vadd.f32 %v2938, %v2958
        %v2975 = vadd.f32 %v2939, %v2959
        %v2976 = vlaneseq
        %v2977 = vshrl.u32 %v2976, 7
        %v2978 = vsub.s32 2, %v2977
        %v2979 = vrot.slane %v2903, %v2978
        %v2980 = vmul.f32 %v2876, %v2979
        %v2981 = vmul.f32 %v2877, %v2979
        %v2982 = vmul.f32 %v2878, %v2979
        %v2983 = vmul.f32 %v2879, %v2979
        %v2984 = vmul.f32 %v2880, %v2979
        %v2985 = vmul.f32 %v2881, %v2979
        %v2986 = vmul.f32 %v2882, %v2979
        %v2987 = vmul.f32 %v2883, %v2979
        %v2988 = vmul.f32 %v2884, %v2979
        %v2989 = vmul.f32 %v2885, %v2979
        %v2990 = vmul.f32 %v2886, %v2979
        %v2991 = vmul.f32 %v2887, %v2979
        %v2992 = vmul.f32 %v2888, %v2979
        %v2993 = vmul.f32 %v2889, %v2979
        %v2994 = vmul.f32 %v2890, %v2979
        %v2995 = vmul.f32 %v2891, %v2979
        %v2996 = vadd.f32 %v2960, %v2980
        %v2997 = vadd.f32 %v2961, %v2981
        %v2998 = vadd.f32 %v2962, %v2982
        %v2999 = vadd.f32 %v2963, %v2983
        %v3000 = vadd.f32 %v2964, %v2984
        %v3001 = vadd.f32 %v2965, %v2985
        %v3002 = vadd.f32 %v2966, %v2986
        %v3003 = vadd.f32 %v2967, %v2987
        %v3004 = vadd.f32 %v2968, %v2988
        %v3005 = vadd.f32 %v2969, %v2989
        %v3006 = vadd.f32 %v2970, %v2990
        %v3007 = vadd.f32 %v2971, %v2991
        %v3008 = vadd.f32 %v2972, %v2992
        %v3009 = vadd.f32 %v2973, %v2993
        %v3010 = vadd.f32 %v2974, %v2994
        %v3011 = vadd.f32 %v2975, %v2995
        %v3012 = vlaneseq
        %v3013 = vshrl.u32 %v3012, 7
        %v3014 = vsub.s32 3, %v3013
        %v3015 = vrot.slane %v2903, %v3014
        %v3016 = vmul.f32 %v2878, %v3015
        %v3017 = vmul.f32 %v2879, %v3015
        %v3018 = vmul.f32 %v2880, %v3015
        %v3019 = vmul.f32 %v2881, %v3015
        %v3020 = vmul.f32 %v2882, %v3015
        %v3021 = vmul.f32 %v2883, %v3015
        %v3022 = vmul.f32 %v2884, %v3015
        %v3023 = vmul.f32 %v2885, %v3015
        %v3024 = vmul.f32 %v2886, %v3015
        %v3025 = vmul.f32 %v2887, %v3015
        %v3026 = vmul.f32 %v2888, %v3015
        %v3027 = vmul.f32 %v2889, %v3015
        %v3028 = vmul.f32 %v2890, %v3015
        %v3029 = vmul.f32 %v2891, %v3015
        %v3030 = vmul.f32 %v2892, %v3015
        %v3031 = vmul.f32 %v2893, %v3015
        %v3032 = vadd.f32 %v2996, %v3016
        %v3033 = vadd.f32 %v2997, %v3017
        %v3034 = vadd.f32 %v2998, %v3018
        %v3035 = vadd.f32 %v2999, %v3019
        %v3036 = vadd.f32 %v3000, %v3020
        %v3037 = vadd.f32 %v3001, %v3021
        %v3038 = vadd.f32 %v3002, %v3022
        %v3039 = vadd.f32 %v3003, %v3023
        %v3040 = vadd.f32 %v3004, %v3024
        %v3041 = vadd.f32 %v3005, %v3025
        %v3042 = vadd.f32 %v3006, %v3026
        %v3043 = vadd.f32 %v3007, %v3027
        %v3044 = vadd.f32 %v3008, %v3028
        %v3045 = vadd.f32 %v3009, %v3029
        %v3046 = vadd.f32 %v3010, %v3030
        %v3047 = vadd.f32 %v3011, %v3031
        %v3048 = vlaneseq
        %v3049 = vshrl.u32 %v3048, 7
        %v3050 = vsub.s32 4, %v3049
        %v3051 = vrot.slane %v2903, %v3050
        %v3052 = vmul.f32 %v2880, %v3051
        %v3053 = vmul.f32 %v2881, %v3051
        %v3054 = vmul.f32 %v2882, %v3051
        %v3055 = vmul.f32 %v2883, %v3051
        %v3056 = vmul.f32 %v2884, %v3051
        %v3057 = vmul.f32 %v2885, %v3051
        %v3058 = vmul.f32 %v2886, %v3051
        %v3059 = vmul.f32 %v2887, %v3051
        %v3060 = vmul.f32 %v2888, %v3051
        %v3061 = vmul.f32 %v2889, %v3051
        %v3062 = vmul.f32 %v2890, %v3051
        %v3063 = vmul.f32 %v2891, %v3051
        %v3064 = vmul.f32 %v2892, %v3051
        %v3065 = vmul.f32 %v2893, %v3051
        %v3066 = vmul.f32 %v2894, %v3051
        %v3067 = vmul.f32 %v2895, %v3051
        %v3068 = vadd.f32 %v3032, %v3052
        %v3069 = vadd.f32 %v3033, %v3053
        %v3070 = vadd.f32 %v3034, %v3054
        %v3071 = vadd.f32 %v3035, %v3055
        %v3072 = vadd.f32 %v3036, %v3056
        %v3073 = vadd.f32 %v3037, %v3057
        %v3074 = vadd.f32 %v3038, %v3058
        %v3075 = vadd.f32 %v3039, %v3059
        %v3076 = vadd.f32 %v3040, %v3060
        %v3077 = vadd.f32 %v3041, %v3061
        %v3078 = vadd.f32 %v3042, %v3062
        %v3079 = vadd.f32 %v3043, %v3063
        %v3080 = vadd.f32 %v3044, %v3064
        %v3081 = vadd.f32 %v3045, %v3065
        %v3082 = vadd.f32 %v3046, %v3066
        %v3083 = vadd.f32 %v3047, %v3067
        %v3084 = vlaneseq
        %v3085 = vshrl.u32 %v3084, 7
        %v3086 = vsub.s32 5, %v3085
        %v3087 = vrot.slane %v2903, %v3086
        %v3088 = vmul.f32 %v2882, %v3087
        %v3089 = vmul.f32 %v2883, %v3087
        %v3090 = vmul.f32 %v2884, %v3087
        %v3091 = vmul.f32 %v2885, %v3087
        %v3092 = vmul.f32 %v2886, %v3087
        %v3093 = vmul.f32 %v2887, %v3087
        %v3094 = vmul.f32 %v2888, %v3087
        %v3095 = vmul.f32 %v2889, %v3087
        %v3096 = vmul.f32 %v2890, %v3087
        %v3097 = vmul.f32 %v2891, %v3087
        %v3098 = vmul.f32 %v2892, %v3087
        %v3099 = vmul.f32 %v2893, %v3087
        %v3100 = vmul.f32 %v2894, %v3087
        %v3101 = vmul.f32 %v2895, %v3087
        %v3102 = vmul.f32 %v2896, %v3087
        %v3103 = vmul.f32 %v2897, %v3087
        %v3104 = vadd.f32 %v3068, %v3088
        %v3105 = vadd.f32 %v3069, %v3089
        %v3106 = vadd.f32 %v3070, %v3090
        %v3107 = vadd.f32 %v3071, %v3091
        %v3108 = vadd.f32 %v3072, %v3092
        %v3109 = vadd.f32 %v3073, %v3093
        %v3110 = vadd.f32 %v3074, %v3094
        %v3111 = vadd.f32 %v3075, %v3095
        %v3112 = vadd.f32 %v3076, %v3096
        %v3113 = vadd.f32 %v3077, %v3097
        %v3114 = vadd.f32 %v3078, %v3098
        %v3115 = vadd.f32 %v3079, %v3099
        %v3116 = vadd.f32 %v3080, %v3100
        %v3117 = vadd.f32 %v3081, %v3101
        %v3118 = vadd.f32 %v3082, %v3102
        %v3119 = vadd.f32 %v3083, %v3103
        %v3120 = vlaneseq
        %v3121 = vshrl.u32 %v3120, 7
        %v3122 = vsub.s32 6, %v3121
        %v3123 = vrot.slane %v2903, %v3122
        %v3124 = vmul.f32 %v2884, %v3123
        %v3125 = vmul.f32 %v2885, %v3123
        %v3126 = vmul.f32 %v2886, %v3123
        %v3127 = vmul.f32 %v2887, %v3123
        %v3128 = vmul.f32 %v2888, %v3123
        %v3129 = vmul.f32 %v2889, %v3123
        %v3130 = vmul.f32 %v2890, %v3123
        %v3131 = vmul.f32 %v2891, %v3123
        %v3132 = vmul.f32 %v2892, %v3123
        %v3133 = vmul.f32 %v2893, %v3123
        %v3134 = vmul.f32 %v2894, %v3123
        %v3135 = vmul.f32 %v2895, %v3123
        %v3136 = vmul.f32 %v2896, %v3123
        %v3137 = vmul.f32 %v2897, %v3123
        %v3138 = vmul.f32 %v2898, %v3123
        %v3139 = vmul.f32 %v2899, %v3123
        %v3140 = vadd.f32 %v3104, %v3124
        %v3141 = vadd.f32 %v3105, %v3125
        %v3142 = vadd.f32 %v3106, %v3126
        %v3143 = vadd.f32 %v3107, %v3127
        %v3144 = vadd.f32 %v3108, %v3128
        %v3145 = vadd.f32 %v3109, %v3129
        %v3146 = vadd.f32 %v3110, %v3130
        %v3147 = vadd.f32 %v3111, %v3131
        %v3148 = vadd.f32 %v3112, %v3132
        %v3149 = vadd.f32 %v3113, %v3133
        %v3150 = vadd.f32 %v3114, %v3134
        %v3151 = vadd.f32 %v3115, %v3135
        %v3152 = vadd.f32 %v3116, %v3136
        %v3153 = vadd.f32 %v3117, %v3137
        %v3154 = vadd.f32 %v3118, %v3138
        %v3155 = vadd.f32 %v3119, %v3139
        %v3156 = vlaneseq
        %v3157 = vshrl.u32 %v3156, 7
        %v3158 = vsub.s32 7, %v3157
        %v3159 = vrot.slane %v2903, %v3158
        %v3160 = vmul.f32 %v2886, %v3159
        %v3161 = vmul.f32 %v2887, %v3159
        %v3162 = vmul.f32 %v2888, %v3159
        %v3163 = vmul.f32 %v2889, %v3159
        %v3164 = vmul.f32 %v2890, %v3159
        %v3165 = vmul.f32 %v2891, %v3159
        %v3166 = vmul.f32 %v2892, %v3159
        %v3167 = vmul.f32 %v2893, %v3159
        %v3168 = vmul.f32 %v2894, %v3159
        %v3169 = vmul.f32 %v2895, %v3159
        %v3170 = vmul.f32 %v2896, %v3159
        %v3171 = vmul.f32 %v2897, %v3159
        %v3172 = vmul.f32 %v2898, %v3159
        %v3173 = vmul.f32 %v2899, %v3159
        %v3174 = vmul.f32 %v2900, %v3159
        %v3175 = vmul.f32 %v2901, %v3159
        %v3176 = vadd.f32 %v3140, %v3160
        %v3177 = vadd.f32 %v3141, %v3161
        %v3178 = vadd.f32 %v3142, %v3162
        %v3179 = vadd.f32 %v3143, %v3163
        %v3180 = vadd.f32 %v3144, %v3164
        %v3181 = vadd.f32 %v3145, %v3165
        %v3182 = vadd.f32 %v3146, %v3166
        %v3183 = vadd.f32 %v3147, %v3167
        %v3184 = vadd.f32 %v3148, %v3168
        %v3185 = vadd.f32 %v3149, %v3169
        %v3186 = vadd.f32 %v3150, %v3170
        %v3187 = vadd.f32 %v3151, %v3171
        %v3188 = vadd.f32 %v3152, %v3172
        %v3189 = vadd.f32 %v3153, %v3173
        %v3190 = vadd.f32 %v3154, %v3174
        %v3191 = vadd.f32 %v3155, %v3175
        %s3192 = smul.u32 %s374, 16
        %s3193 = scalar_lea.vmem %s371, %s3192
        %v3194 = vld [vmem:[%s3193] sm:$0xff]
        %v3195 = vld [vmem:[%s3193 + $0x8] sm:$0xff]
        %v3196 = vld [vmem:[%s3193 + $0x10] sm:$0xff]
        %v3197 = vld [vmem:[%s3193 + $0x18] sm:$0xff]
        %v3198 = vld [vmem:[%s3193 + $0x20] sm:$0xff]
        %v3199 = vld [vmem:[%s3193 + $0x28] sm:$0xff]
        %v3200 = vld [vmem:[%s3193 + $0x30] sm:$0xff]
        %v3201 = vld [vmem:[%s3193 + $0x38] sm:$0xff]
        %v3202 = vld [vmem:[%s3193 + $0x40] sm:$0xff]
        %v3203 = vld [vmem:[%s3193 + $0x48] sm:$0xff]
        %v3204 = vld [vmem:[%s3193 + $0x50] sm:$0xff]
        %v3205 = vld [vmem:[%s3193 + $0x58] sm:$0xff]
        %v3206 = vld [vmem:[%s3193 + $0x60] sm:$0xff]
        %v3207 = vld [vmem:[%s3193 + $0x68] sm:$0xff]
        %v3208 = vld [vmem:[%s3193 + $0x70] sm:$0xff]
        %v3209 = vld [vmem:[%s3193 + $0x78] sm:$0xff]
        %v3210 = vpack.c.bf16 %v3177, %v3176
        %v3211 = vpack.c.bf16 %v3179, %v3178
        %v3212 = vpack.c.bf16 %v3181, %v3180
        %v3213 = vpack.c.bf16 %v3183, %v3182
        %v3214 = vpack.c.bf16 %v3185, %v3184
        %v3215 = vpack.c.bf16 %v3187, %v3186
        %v3216 = vpack.c.bf16 %v3189, %v3188
        %v3217 = vpack.c.bf16 %v3191, %v3190
        %v3218 = vld [vmem:[%s4] sm:$0xf]
        %v3219 = vld [vmem:[%s4 + $0x4] sm:$0xf]
        %v3220 = vld [vmem:[%s4 + $0x8] sm:$0xf]
        %v3221 = vld [vmem:[%s4 + $0xc] sm:$0xf]
        %v3222 = vld [vmem:[%s4 + $0x10] sm:$0xf]
        %v3223 = vld [vmem:[%s4 + $0x14] sm:$0xf]
        %v3224 = vld [vmem:[%s4 + $0x18] sm:$0xf]
        %v3225 = vld [vmem:[%s4 + $0x1c] sm:$0xf]
        %v3226 = vld [vmem:[%s4 + $0x20] sm:$0xf]
        %v3227 = vld [vmem:[%s4 + $0x24] sm:$0xf]
        %v3228 = vld [vmem:[%s4 + $0x28] sm:$0xf]
        %v3229 = vld [vmem:[%s4 + $0x2c] sm:$0xf]
        %v3230 = vld [vmem:[%s4 + $0x30] sm:$0xf]
        %v3231 = vld [vmem:[%s4 + $0x34] sm:$0xf]
        %v3232 = vld [vmem:[%s4 + $0x38] sm:$0xf]
        %v3233 = vld [vmem:[%s4 + $0x3c] sm:$0xf]
        %v3234 = vld [vmem:[%s5] sm:$0x1]
        %v3236 = vlaneseq
        %v3237 = vshrl.u32 %v3236, 7
        %v3238 = vsub.s32 0, %v3237
        %v3239 = vrot.slane %v3234, %v3238
        %v3257 = vunpack.c.l.b16 %v3218
        %v3258 = vunpack.c.l.b16 %v3219
        %v3259 = vunpack.c.l.b16 %v3220
        %v3260 = vunpack.c.l.b16 %v3221
        %v3261 = vunpack.c.l.b16 %v3222
        %v3262 = vunpack.c.l.b16 %v3223
        %v3263 = vunpack.c.l.b16 %v3224
        %v3264 = vunpack.c.l.b16 %v3225
        %v3265 = vunpack.c.l.b16 %v3226
        %v3266 = vunpack.c.l.b16 %v3227
        %v3267 = vunpack.c.l.b16 %v3228
        %v3268 = vunpack.c.l.b16 %v3229
        %v3269 = vunpack.c.l.b16 %v3230
        %v3270 = vunpack.c.l.b16 %v3231
        %v3271 = vunpack.c.l.b16 %v3232
        %v3272 = vunpack.c.l.b16 %v3233
        %v3273 = vpack.c.b16 %v3258, %v3257
        %v3274 = vpack.c.b16 %v3260, %v3259
        %v3275 = vpack.c.b16 %v3262, %v3261
        %v3276 = vpack.c.b16 %v3264, %v3263
        %v3277 = vpack.c.b16 %v3266, %v3265
        %v3278 = vpack.c.b16 %v3268, %v3267
        %v3279 = vpack.c.b16 %v3270, %v3269
        %v3280 = vpack.c.b16 %v3272, %v3271
        %3289 = vmatprep.subr.bf16.mxu0 0
        %3290 = vmatpush1.bf16.msra.mxu0 %v3280
        %3291 = vmatprep.subr.bf16.mxu0 0
        %3292 = vmatpush1.bf16.msra.mxu0 %v3279
        %3293 = vmatprep.subr.bf16.mxu0 0
        %3294 = vmatpush1.bf16.msra.mxu0 %v3278
        %3295 = vmatprep.subr.bf16.mxu0 0
        %3296 = vmatpush1.bf16.msra.mxu0 %v3277
        %3297 = vmatprep.subr.bf16.mxu0 0
        %3298 = vmatpush1.bf16.msra.mxu0 %v3276
        %3299 = vmatprep.subr.bf16.mxu0 0
        %3300 = vmatpush1.bf16.msra.mxu0 %v3275
        %3301 = vmatprep.subr.bf16.mxu0 0
        %3302 = vmatpush1.bf16.msra.mxu0 %v3274
        %3303 = vmatprep.subr.bf16.mxu0 0
        %3304 = vmatpush1.bf16.msra.mxu0 %v3273
        %3305 = vmatprep.subr.bf16.mxu0 0
        %3306 = vmatpush2.bf16.msra.mxu0 0
        %3307 = vmatprep.subr.bf16.mxu0 0
        %3308 = vmatpush2.bf16.msra.mxu0 0
        %3309 = vmatprep.subr.bf16.mxu0 0
        %3310 = vmatpush2.bf16.msra.mxu0 0
        %3311 = vmatprep.subr.bf16.mxu0 0
        %3312 = vmatpush2.bf16.msra.mxu0 0
        %3313 = vmatprep.subr.bf16.mxu0 0
        %3314 = vmatpush2.bf16.msra.mxu0 0
        %3315 = vmatprep.subr.bf16.mxu0 0
        %3316 = vmatpush2.bf16.msra.mxu0 0
        %3317 = vmatprep.subr.bf16.mxu0 0
        %3318 = vmatpush2.bf16.msra.mxu0 0
        %3319 = vmatprep.subr.bf16.mxu0 0
        %3320 = vmatpush2.bf16.msra.mxu0 0
        %3321 = vmatprep.mubr.bf16.mxu0 0
        %3322 = vmatmul.mubr.bf16.gmra.mxu0 %v3210
        %v3323 = vpop.f32.mrf.mxu0
        %v3324 = vadd.f32 %v3239, %v3323
        %v3325 = vpop.f32.mrf.mxu0
        %v3326 = vpop.f32.mrf.mxu0
        %v3327 = vadd.f32 %v3239, %v3326
        %v3328 = vpop.f32.mrf.mxu0
        %3329 = vmatprep.mubr.bf16.mxu0 0
        %3330 = vmatmul.mubr.bf16.gmra.mxu0 %v3211
        %v3331 = vpop.f32.mrf.mxu0
        %v3332 = vadd.f32 %v3239, %v3331
        %v3333 = vpop.f32.mrf.mxu0
        %v3334 = vpop.f32.mrf.mxu0
        %v3335 = vadd.f32 %v3239, %v3334
        %v3336 = vpop.f32.mrf.mxu0
        %3337 = vmatprep.mubr.bf16.mxu0 0
        %3338 = vmatmul.mubr.bf16.gmra.mxu0 %v3212
        %v3339 = vpop.f32.mrf.mxu0
        %v3340 = vadd.f32 %v3239, %v3339
        %v3341 = vpop.f32.mrf.mxu0
        %v3342 = vpop.f32.mrf.mxu0
        %v3343 = vadd.f32 %v3239, %v3342
        %v3344 = vpop.f32.mrf.mxu0
        %3345 = vmatprep.mubr.bf16.mxu0 0
        %3346 = vmatmul.mubr.bf16.gmra.mxu0 %v3213
        %v3347 = vpop.f32.mrf.mxu0
        %v3348 = vadd.f32 %v3239, %v3347
        %v3349 = vpop.f32.mrf.mxu0
        %v3350 = vpop.f32.mrf.mxu0
        %v3351 = vadd.f32 %v3239, %v3350
        %v3352 = vpop.f32.mrf.mxu0
        %3353 = vmatprep.mubr.bf16.mxu0 0
        %3354 = vmatmul.mubr.bf16.gmra.mxu0 %v3214
        %v3355 = vpop.f32.mrf.mxu0
        %v3356 = vadd.f32 %v3239, %v3355
        %v3357 = vpop.f32.mrf.mxu0
        %v3358 = vpop.f32.mrf.mxu0
        %v3359 = vadd.f32 %v3239, %v3358
        %v3360 = vpop.f32.mrf.mxu0
        %3361 = vmatprep.mubr.bf16.mxu0 0
        %3362 = vmatmul.mubr.bf16.gmra.mxu0 %v3215
        %v3363 = vpop.f32.mrf.mxu0
        %v3364 = vadd.f32 %v3239, %v3363
        %v3365 = vpop.f32.mrf.mxu0
        %v3366 = vpop.f32.mrf.mxu0
        %v3367 = vadd.f32 %v3239, %v3366
        %v3368 = vpop.f32.mrf.mxu0
        %3369 = vmatprep.mubr.bf16.mxu0 0
        %3370 = vmatmul.mubr.bf16.gmra.mxu0 %v3216
        %v3371 = vpop.f32.mrf.mxu0
        %v3372 = vadd.f32 %v3239, %v3371
        %v3373 = vpop.f32.mrf.mxu0
        %v3374 = vpop.f32.mrf.mxu0
        %v3375 = vadd.f32 %v3239, %v3374
        %v3376 = vpop.f32.mrf.mxu0
        %3377 = vmatprep.mubr.bf16.mxu0 0
        %3378 = vmatmul.mubr.bf16.gmra.mxu0 %v3217
        %v3379 = vpop.f32.mrf.mxu0
        %v3380 = vadd.f32 %v3239, %v3379
        %v3381 = vpop.f32.mrf.mxu0
        %v3382 = vpop.f32.mrf.mxu0
        %v3383 = vadd.f32 %v3239, %v3382
        %v3384 = vpop.f32.mrf.mxu0
        %3385 = vdwg.mxu0
        %v3386 = vadd.f32 %v3324, %v3194
        %v3387 = vadd.f32 %v3327, %v3195
        %v3388 = vadd.f32 %v3332, %v3196
        %v3389 = vadd.f32 %v3335, %v3197
        %v3390 = vadd.f32 %v3340, %v3198
        %v3391 = vadd.f32 %v3343, %v3199
        %v3392 = vadd.f32 %v3348, %v3200
        %v3393 = vadd.f32 %v3351, %v3201
        %v3394 = vadd.f32 %v3356, %v3202
        %v3395 = vadd.f32 %v3359, %v3203
        %v3396 = vadd.f32 %v3364, %v3204
        %v3397 = vadd.f32 %v3367, %v3205
        %v3398 = vadd.f32 %v3372, %v3206
        %v3399 = vadd.f32 %v3375, %v3207
        %v3400 = vadd.f32 %v3380, %v3208
        %v3401 = vadd.f32 %v3383, %v3209
        %v3402 = vpack.c.bf16 %v3387, %v3386
        %v3403 = vpack.c.bf16 %v3389, %v3388
        %v3404 = vpack.c.bf16 %v3391, %v3390
        %v3405 = vpack.c.bf16 %v3393, %v3392
        %v3406 = vpack.c.bf16 %v3395, %v3394
        %v3407 = vpack.c.bf16 %v3397, %v3396
        %v3408 = vpack.c.bf16 %v3399, %v3398
        %v3409 = vpack.c.bf16 %v3401, %v3400
        %v3410 = vld [vmem:[%s6] sm:$0xff]
        %v3411 = vld [vmem:[%s6 + $0x8] sm:$0xff]
        %v3412 = vld [vmem:[%s6 + $0x10] sm:$0xff]
        %v3413 = vld [vmem:[%s6 + $0x18] sm:$0xff]
        %v3414 = vld [vmem:[%s6 + $0x20] sm:$0xff]
        %v3415 = vld [vmem:[%s6 + $0x28] sm:$0xff]
        %v3416 = vld [vmem:[%s6 + $0x30] sm:$0xff]
        %v3417 = vld [vmem:[%s6 + $0x38] sm:$0xff]
        %v3418 = vld [vmem:[%s6 + $0x40] sm:$0xff]
        %v3419 = vld [vmem:[%s6 + $0x48] sm:$0xff]
        %v3420 = vld [vmem:[%s6 + $0x50] sm:$0xff]
        %v3421 = vld [vmem:[%s6 + $0x58] sm:$0xff]
        %v3422 = vld [vmem:[%s6 + $0x60] sm:$0xff]
        %v3423 = vld [vmem:[%s6 + $0x68] sm:$0xff]
        %v3424 = vld [vmem:[%s6 + $0x70] sm:$0xff]
        %v3425 = vld [vmem:[%s6 + $0x78] sm:$0xff]
        %v3426 = vld [vmem:[%s6 + $0x80] sm:$0xff]
        %v3427 = vld [vmem:[%s6 + $0x88] sm:$0xff]
        %v3428 = vld [vmem:[%s6 + $0x90] sm:$0xff]
        %v3429 = vld [vmem:[%s6 + $0x98] sm:$0xff]
        %v3430 = vld [vmem:[%s6 + $0xa0] sm:$0xff]
        %v3431 = vld [vmem:[%s6 + $0xa8] sm:$0xff]
        %v3432 = vld [vmem:[%s6 + $0xb0] sm:$0xff]
        %v3433 = vld [vmem:[%s6 + $0xb8] sm:$0xff]
        %v3434 = vld [vmem:[%s6 + $0xc0] sm:$0xff]
        %v3435 = vld [vmem:[%s6 + $0xc8] sm:$0xff]
        %v3436 = vld [vmem:[%s6 + $0xd0] sm:$0xff]
        %v3437 = vld [vmem:[%s6 + $0xd8] sm:$0xff]
        %v3438 = vld [vmem:[%s6 + $0xe0] sm:$0xff]
        %v3439 = vld [vmem:[%s6 + $0xe8] sm:$0xff]
        %v3440 = vld [vmem:[%s6 + $0xf0] sm:$0xff]
        %v3441 = vld [vmem:[%s6 + $0xf8] sm:$0xff]
        %v3442 = vld [vmem:[%s7] sm:$0xf]
        %v3444 = vlaneseq
        %v3445 = vshrl.u32 %v3444, 7
        %v3446 = vsub.s32 0, %v3445
        %v3447 = vrot.slane %v3442, %v3446
        %v3448 = vlaneseq
        %v3449 = vshrl.u32 %v3448, 7
        %v3450 = vsub.s32 1, %v3449
        %v3451 = vrot.slane %v3442, %v3450
        %v3452 = vlaneseq
        %v3453 = vshrl.u32 %v3452, 7
        %v3454 = vsub.s32 2, %v3453
        %v3455 = vrot.slane %v3442, %v3454
        %v3456 = vlaneseq
        %v3457 = vshrl.u32 %v3456, 7
        %v3458 = vsub.s32 3, %v3457
        %v3459 = vrot.slane %v3442, %v3458
        %v3496 = vunpack.c.l.b16 %v3410
        %v3497 = vunpack.c.h.b16 %v3410
        %v3498 = vunpack.c.l.b16 %v3411
        %v3499 = vunpack.c.h.b16 %v3411
        %v3500 = vunpack.c.l.b16 %v3412
        %v3501 = vunpack.c.h.b16 %v3412
        %v3502 = vunpack.c.l.b16 %v3413
        %v3503 = vunpack.c.h.b16 %v3413
        %v3504 = vunpack.c.l.b16 %v3414
        %v3505 = vunpack.c.h.b16 %v3414
        %v3506 = vunpack.c.l.b16 %v3415
        %v3507 = vunpack.c.h.b16 %v3415
        %v3508 = vunpack.c.l.b16 %v3416
        %v3509 = vunpack.c.h.b16 %v3416
        %v3510 = vunpack.c.l.b16 %v3417
        %v3511 = vunpack.c.h.b16 %v3417
        %v3512 = vunpack.c.l.b16 %v3418
        %v3513 = vunpack.c.h.b16 %v3418
        %v3514 = vunpack.c.l.b16 %v3419
        %v3515 = vunpack.c.h.b16 %v3419
        %v3516 = vunpack.c.l.b16 %v3420
        %v3517 = vunpack.c.h.b16 %v3420
        %v3518 = vunpack.c.l.b16 %v3421
        %v3519 = vunpack.c.h.b16 %v3421
        %v3520 = vunpack.c.l.b16 %v3422
        %v3521 = vunpack.c.h.b16 %v3422
        %v3522 = vunpack.c.l.b16 %v3423
        %v3523 = vunpack.c.h.b16 %v3423
        %v3524 = vunpack.c.l.b16 %v3424
        %v3525 = vunpack.c.h.b16 %v3424
        %v3526 = vunpack.c.l.b16 %v3425
        %v3527 = vunpack.c.h.b16 %v3425
        %v3528 = vunpack.c.l.b16 %v3426
        %v3529 = vunpack.c.h.b16 %v3426
        %v3530 = vunpack.c.l.b16 %v3427
        %v3531 = vunpack.c.h.b16 %v3427
        %v3532 = vunpack.c.l.b16 %v3428
        %v3533 = vunpack.c.h.b16 %v3428
        %v3534 = vunpack.c.l.b16 %v3429
        %v3535 = vunpack.c.h.b16 %v3429
        %v3536 = vunpack.c.l.b16 %v3430
        %v3537 = vunpack.c.h.b16 %v3430
        %v3538 = vunpack.c.l.b16 %v3431
        %v3539 = vunpack.c.h.b16 %v3431
        %v3540 = vunpack.c.l.b16 %v3432
        %v3541 = vunpack.c.h.b16 %v3432
        %v3542 = vunpack.c.l.b16 %v3433
        %v3543 = vunpack.c.h.b16 %v3433
        %v3544 = vunpack.c.l.b16 %v3434
        %v3545 = vunpack.c.h.b16 %v3434
        %v3546 = vunpack.c.l.b16 %v3435
        %v3547 = vunpack.c.h.b16 %v3435
        %v3548 = vunpack.c.l.b16 %v3436
        %v3549 = vunpack.c.h.b16 %v3436
        %v3550 = vunpack.c.l.b16 %v3437
        %v3551 = vunpack.c.h.b16 %v3437
        %v3552 = vunpack.c.l.b16 %v3438
        %v3553 = vunpack.c.h.b16 %v3438
        %v3554 = vunpack.c.l.b16 %v3439
        %v3555 = vunpack.c.h.b16 %v3439
        %v3556 = vunpack.c.l.b16 %v3440
        %v3557 = vunpack.c.h.b16 %v3440
        %v3558 = vunpack.c.l.b16 %v3441
        %v3559 = vunpack.c.h.b16 %v3441
        %v3560 = vpack.c.b16 %v3500, %v3496
        %v3561 = vpack.c.b16 %v3501, %v3497
        %v3562 = vpack.c.b16 %v3502, %v3498
        %v3563 = vpack.c.b16 %v3503, %v3499
        %v3564 = vpack.c.b16 %v3508, %v3504
        %v3565 = vpack.c.b16 %v3509, %v3505
        %v3566 = vpack.c.b16 %v3510, %v3506
        %v3567 = vpack.c.b16 %v3511, %v3507
        %v3568 = vpack.c.b16 %v3516, %v3512
        %v3569 = vpack.c.b16 %v3517, %v3513
        %v3570 = vpack.c.b16 %v3518, %v3514
        %v3571 = vpack.c.b16 %v3519, %v3515
        %v3572 = vpack.c.b16 %v3524, %v3520
        %v3573 = vpack.c.b16 %v3525, %v3521
        %v3574 = vpack.c.b16 %v3526, %v3522
        %v3575 = vpack.c.b16 %v3527, %v3523
        %v3576 = vpack.c.b16 %v3532, %v3528
        %v3577 = vpack.c.b16 %v3533, %v3529
        %v3578 = vpack.c.b16 %v3534, %v3530
        %v3579 = vpack.c.b16 %v3535, %v3531
        %v3580 = vpack.c.b16 %v3540, %v3536
        %v3581 = vpack.c.b16 %v3541, %v3537
        %v3582 = vpack.c.b16 %v3542, %v3538
        %v3583 = vpack.c.b16 %v3543, %v3539
        %v3584 = vpack.c.b16 %v3548, %v3544
        %v3585 = vpack.c.b16 %v3549, %v3545
        %v3586 = vpack.c.b16 %v3550, %v3546
        %v3587 = vpack.c.b16 %v3551, %v3547
        %v3588 = vpack.c.b16 %v3556, %v3552
        %v3589 = vpack.c.b16 %v3557, %v3553
        %v3590 = vpack.c.b16 %v3558, %v3554
        %v3591 = vpack.c.b16 %v3559, %v3555
        %3624 = vmatprep.subr.bf16.mxu0 %v3589
        %3625 = vmatpush1.bf16.msra.mxu0 %v3588
        %3626 = vmatprep.subr.bf16.mxu0 %v3585
        %3627 = vmatpush1.bf16.msra.mxu0 %v3584
        %3628 = vmatprep.subr.bf16.mxu0 %v3581
        %3629 = vmatpush1.bf16.msra.mxu0 %v3580
        %3630 = vmatprep.subr.bf16.mxu0 %v3577
        %3631 = vmatpush1.bf16.msra.mxu0 %v3576
        %3632 = vmatprep.subr.bf16.mxu0 %v3573
        %3633 = vmatpush1.bf16.msra.mxu0 %v3572
        %3634 = vmatprep.subr.bf16.mxu0 %v3569
        %3635 = vmatpush1.bf16.msra.mxu0 %v3568
        %3636 = vmatprep.subr.bf16.mxu0 %v3565
        %3637 = vmatpush1.bf16.msra.mxu0 %v3564
        %3638 = vmatprep.subr.bf16.mxu0 %v3561
        %3639 = vmatpush1.bf16.msra.mxu0 %v3560
        %3640 = vmatprep.subr.bf16.mxu0 0
        %3641 = vmatpush2.bf16.msra.mxu0 0
        %3642 = vmatprep.subr.bf16.mxu0 0
        %3643 = vmatpush2.bf16.msra.mxu0 0
        %3644 = vmatprep.subr.bf16.mxu0 0
        %3645 = vmatpush2.bf16.msra.mxu0 0
        %3646 = vmatprep.subr.bf16.mxu0 0
        %3647 = vmatpush2.bf16.msra.mxu0 0
        %3648 = vmatprep.subr.bf16.mxu0 0
        %3649 = vmatpush2.bf16.msra.mxu0 0
        %3650 = vmatprep.subr.bf16.mxu0 0
        %3651 = vmatpush2.bf16.msra.mxu0 0
        %3652 = vmatprep.subr.bf16.mxu0 0
        %3653 = vmatpush2.bf16.msra.mxu0 0
        %3654 = vmatprep.subr.bf16.mxu0 0
        %3655 = vmatpush2.bf16.msra.mxu0 0
        %3656 = vmatprep.mubr.bf16.mxu0 0
        %3657 = vmatmul.mubr.bf16.gmra.mxu0 %v3402
        %v3658 = vpop.f32.mrf.mxu0
        %v3659 = vadd.f32 %v3447, %v3658
        %v3660 = vpop.f32.mrf.mxu0
        %v3661 = vadd.f32 %v3451, %v3660
        %v3662 = vpop.f32.mrf.mxu0
        %v3663 = vadd.f32 %v3447, %v3662
        %v3664 = vpop.f32.mrf.mxu0
        %v3665 = vadd.f32 %v3451, %v3664
        %3666 = vmatprep.mubr.bf16.mxu0 0
        %3667 = vmatmul.mubr.bf16.gmra.mxu0 %v3403
        %v3668 = vpop.f32.mrf.mxu0
        %v3669 = vadd.f32 %v3447, %v3668
        %v3670 = vpop.f32.mrf.mxu0
        %v3671 = vadd.f32 %v3451, %v3670
        %v3672 = vpop.f32.mrf.mxu0
        %v3673 = vadd.f32 %v3447, %v3672
        %v3674 = vpop.f32.mrf.mxu0
        %v3675 = vadd.f32 %v3451, %v3674
        %3676 = vmatprep.mubr.bf16.mxu0 0
        %3677 = vmatmul.mubr.bf16.gmra.mxu0 %v3404
        %v3678 = vpop.f32.mrf.mxu0
        %v3679 = vadd.f32 %v3447, %v3678
        %v3680 = vpop.f32.mrf.mxu0
        %v3681 = vadd.f32 %v3451, %v3680
        %v3682 = vpop.f32.mrf.mxu0
        %v3683 = vadd.f32 %v3447, %v3682
        %v3684 = vpop.f32.mrf.mxu0
        %v3685 = vadd.f32 %v3451, %v3684
        %3686 = vmatprep.mubr.bf16.mxu0 0
        %3687 = vmatmul.mubr.bf16.gmra.mxu0 %v3405
        %v3688 = vpop.f32.mrf.mxu0
        %v3689 = vadd.f32 %v3447, %v3688
        %v3690 = vpop.f32.mrf.mxu0
        %v3691 = vadd.f32 %v3451, %v3690
        %v3692 = vpop.f32.mrf.mxu0
        %v3693 = vadd.f32 %v3447, %v3692
        %v3694 = vpop.f32.mrf.mxu0
        %v3695 = vadd.f32 %v3451, %v3694
        %3696 = vmatprep.mubr.bf16.mxu0 0
        %3697 = vmatmul.mubr.bf16.gmra.mxu0 %v3406
        %v3698 = vpop.f32.mrf.mxu0
        %v3699 = vadd.f32 %v3447, %v3698
        %v3700 = vpop.f32.mrf.mxu0
        %v3701 = vadd.f32 %v3451, %v3700
        %v3702 = vpop.f32.mrf.mxu0
        %v3703 = vadd.f32 %v3447, %v3702
        %v3704 = vpop.f32.mrf.mxu0
        %v3705 = vadd.f32 %v3451, %v3704
        %3706 = vmatprep.mubr.bf16.mxu0 0
        %3707 = vmatmul.mubr.bf16.gmra.mxu0 %v3407
        %v3708 = vpop.f32.mrf.mxu0
        %v3709 = vadd.f32 %v3447, %v3708
        %v3710 = vpop.f32.mrf.mxu0
        %v3711 = vadd.f32 %v3451, %v3710
        %v3712 = vpop.f32.mrf.mxu0
        %v3713 = vadd.f32 %v3447, %v3712
        %v3714 = vpop.f32.mrf.mxu0
        %v3715 = vadd.f32 %v3451, %v3714
        %3716 = vmatprep.mubr.bf16.mxu0 0
        %3717 = vmatmul.mubr.bf16.gmra.mxu0 %v3408
        %v3718 = vpop.f32.mrf.mxu0
        %v3719 = vadd.f32 %v3447, %v3718
        %v3720 = vpop.f32.mrf.mxu0
        %v3721 = vadd.f32 %v3451, %v3720
        %v3722 = vpop.f32.mrf.mxu0
        %v3723 = vadd.f32 %v3447, %v3722
        %v3724 = vpop.f32.mrf.mxu0
        %v3725 = vadd.f32 %v3451, %v3724
        %3726 = vmatprep.mubr.bf16.mxu0 0
        %3727 = vmatmul.mubr.bf16.gmra.mxu0 %v3409
        %v3728 = vpop.f32.mrf.mxu0
        %v3729 = vadd.f32 %v3447, %v3728
        %v3730 = vpop.f32.mrf.mxu0
        %v3731 = vadd.f32 %v3451, %v3730
        %v3732 = vpop.f32.mrf.mxu0
        %v3733 = vadd.f32 %v3447, %v3732
        %v3734 = vpop.f32.mrf.mxu0
        %v3735 = vadd.f32 %v3451, %v3734
        %3736 = vdwg.mxu0
        %3737 = vmatprep.subr.bf16.mxu0 %v3591
        %3738 = vmatpush1.bf16.msra.mxu0 %v3590
        %3739 = vmatprep.subr.bf16.mxu0 %v3587
        %3740 = vmatpush1.bf16.msra.mxu0 %v3586
        %3741 = vmatprep.subr.bf16.mxu0 %v3583
        %3742 = vmatpush1.bf16.msra.mxu0 %v3582
        %3743 = vmatprep.subr.bf16.mxu0 %v3579
        %3744 = vmatpush1.bf16.msra.mxu0 %v3578
        %3745 = vmatprep.subr.bf16.mxu0 %v3575
        %3746 = vmatpush1.bf16.msra.mxu0 %v3574
        %3747 = vmatprep.subr.bf16.mxu0 %v3571
        %3748 = vmatpush1.bf16.msra.mxu0 %v3570
        %3749 = vmatprep.subr.bf16.mxu0 %v3567
        %3750 = vmatpush1.bf16.msra.mxu0 %v3566
        %3751 = vmatprep.subr.bf16.mxu0 %v3563
        %3752 = vmatpush1.bf16.msra.mxu0 %v3562
        %3753 = vmatprep.subr.bf16.mxu0 0
        %3754 = vmatpush2.bf16.msra.mxu0 0
        %3755 = vmatprep.subr.bf16.mxu0 0
        %3756 = vmatpush2.bf16.msra.mxu0 0
        %3757 = vmatprep.subr.bf16.mxu0 0
        %3758 = vmatpush2.bf16.msra.mxu0 0
        %3759 = vmatprep.subr.bf16.mxu0 0
        %3760 = vmatpush2.bf16.msra.mxu0 0
        %3761 = vmatprep.subr.bf16.mxu0 0
        %3762 = vmatpush2.bf16.msra.mxu0 0
        %3763 = vmatprep.subr.bf16.mxu0 0
        %3764 = vmatpush2.bf16.msra.mxu0 0
        %3765 = vmatprep.subr.bf16.mxu0 0
        %3766 = vmatpush2.bf16.msra.mxu0 0
        %3767 = vmatprep.subr.bf16.mxu0 0
        %3768 = vmatpush2.bf16.msra.mxu0 0
        %3769 = vmatprep.mubr.bf16.mxu0 0
        %3770 = vmatmul.mubr.bf16.gmra.mxu0 %v3402
        %v3771 = vpop.f32.mrf.mxu0
        %v3772 = vadd.f32 %v3455, %v3771
        %v3773 = vpop.f32.mrf.mxu0
        %v3774 = vadd.f32 %v3459, %v3773
        %v3775 = vpop.f32.mrf.mxu0
        %v3776 = vadd.f32 %v3455, %v3775
        %v3777 = vpop.f32.mrf.mxu0
        %v3778 = vadd.f32 %v3459, %v3777
        %3779 = vmatprep.mubr.bf16.mxu0 0
        %3780 = vmatmul.mubr.bf16.gmra.mxu0 %v3403
        %v3781 = vpop.f32.mrf.mxu0
        %v3782 = vadd.f32 %v3455, %v3781
        %v3783 = vpop.f32.mrf.mxu0
        %v3784 = vadd.f32 %v3459, %v3783
        %v3785 = vpop.f32.mrf.mxu0
        %v3786 = vadd.f32 %v3455, %v3785
        %v3787 = vpop.f32.mrf.mxu0
        %v3788 = vadd.f32 %v3459, %v3787
        %3789 = vmatprep.mubr.bf16.mxu0 0
        %3790 = vmatmul.mubr.bf16.gmra.mxu0 %v3404
        %v3791 = vpop.f32.mrf.mxu0
        %v3792 = vadd.f32 %v3455, %v3791
        %v3793 = vpop.f32.mrf.mxu0
        %v3794 = vadd.f32 %v3459, %v3793
        %v3795 = vpop.f32.mrf.mxu0
        %v3796 = vadd.f32 %v3455, %v3795
        %v3797 = vpop.f32.mrf.mxu0
        %v3798 = vadd.f32 %v3459, %v3797
        %3799 = vmatprep.mubr.bf16.mxu0 0
        %3800 = vmatmul.mubr.bf16.gmra.mxu0 %v3405
        %v3801 = vpop.f32.mrf.mxu0
        %v3802 = vadd.f32 %v3455, %v3801
        %v3803 = vpop.f32.mrf.mxu0
        %v3804 = vadd.f32 %v3459, %v3803
        %v3805 = vpop.f32.mrf.mxu0
        %v3806 = vadd.f32 %v3455, %v3805
        %v3807 = vpop.f32.mrf.mxu0
        %v3808 = vadd.f32 %v3459, %v3807
        %3809 = vmatprep.mubr.bf16.mxu0 0
        %3810 = vmatmul.mubr.bf16.gmra.mxu0 %v3406
        %v3811 = vpop.f32.mrf.mxu0
        %v3812 = vadd.f32 %v3455, %v3811
        %v3813 = vpop.f32.mrf.mxu0
        %v3814 = vadd.f32 %v3459, %v3813
        %v3815 = vpop.f32.mrf.mxu0
        %v3816 = vadd.f32 %v3455, %v3815
        %v3817 = vpop.f32.mrf.mxu0
        %v3818 = vadd.f32 %v3459, %v3817
        %3819 = vmatprep.mubr.bf16.mxu0 0
        %3820 = vmatmul.mubr.bf16.gmra.mxu0 %v3407
        %v3821 = vpop.f32.mrf.mxu0
        %v3822 = vadd.f32 %v3455, %v3821
        %v3823 = vpop.f32.mrf.mxu0
        %v3824 = vadd.f32 %v3459, %v3823
        %v3825 = vpop.f32.mrf.mxu0
        %v3826 = vadd.f32 %v3455, %v3825
        %v3827 = vpop.f32.mrf.mxu0
        %v3828 = vadd.f32 %v3459, %v3827
        %3829 = vmatprep.mubr.bf16.mxu0 0
        %3830 = vmatmul.mubr.bf16.gmra.mxu0 %v3408
        %v3831 = vpop.f32.mrf.mxu0
        %v3832 = vadd.f32 %v3455, %v3831
        %v3833 = vpop.f32.mrf.mxu0
        %v3834 = vadd.f32 %v3459, %v3833
        %v3835 = vpop.f32.mrf.mxu0
        %v3836 = vadd.f32 %v3455, %v3835
        %v3837 = vpop.f32.mrf.mxu0
        %v3838 = vadd.f32 %v3459, %v3837
        %3839 = vmatprep.mubr.bf16.mxu0 0
        %3840 = vmatmul.mubr.bf16.gmra.mxu0 %v3409
        %v3841 = vpop.f32.mrf.mxu0
        %v3842 = vadd.f32 %v3455, %v3841
        %v3843 = vpop.f32.mrf.mxu0
        %v3844 = vadd.f32 %v3459, %v3843
        %v3845 = vpop.f32.mrf.mxu0
        %v3846 = vadd.f32 %v3455, %v3845
        %v3847 = vpop.f32.mrf.mxu0
        %v3848 = vadd.f32 %v3459, %v3847
        %3849 = vdwg.mxu0
        %v3850 = vmax.f32 %v3659, 0.0
        %v3851 = vmax.f32 %v3661, 0.0
        %v3852 = vmax.f32 %v3772, 0.0
        %v3853 = vmax.f32 %v3774, 0.0
        %v3854 = vmax.f32 %v3663, 0.0
        %v3855 = vmax.f32 %v3665, 0.0
        %v3856 = vmax.f32 %v3776, 0.0
        %v3857 = vmax.f32 %v3778, 0.0
        %v3858 = vmax.f32 %v3669, 0.0
        %v3859 = vmax.f32 %v3671, 0.0
        %v3860 = vmax.f32 %v3782, 0.0
        %v3861 = vmax.f32 %v3784, 0.0
        %v3862 = vmax.f32 %v3673, 0.0
        %v3863 = vmax.f32 %v3675, 0.0
        %v3864 = vmax.f32 %v3786, 0.0
        %v3865 = vmax.f32 %v3788, 0.0
        %v3866 = vmax.f32 %v3679, 0.0
        %v3867 = vmax.f32 %v3681, 0.0
        %v3868 = vmax.f32 %v3792, 0.0
        %v3869 = vmax.f32 %v3794, 0.0
        %v3870 = vmax.f32 %v3683, 0.0
        %v3871 = vmax.f32 %v3685, 0.0
        %v3872 = vmax.f32 %v3796, 0.0
        %v3873 = vmax.f32 %v3798, 0.0
        %v3874 = vmax.f32 %v3689, 0.0
        %v3875 = vmax.f32 %v3691, 0.0
        %v3876 = vmax.f32 %v3802, 0.0
        %v3877 = vmax.f32 %v3804, 0.0
        %v3878 = vmax.f32 %v3693, 0.0
        %v3879 = vmax.f32 %v3695, 0.0
        %v3880 = vmax.f32 %v3806, 0.0
        %v3881 = vmax.f32 %v3808, 0.0
        %v3882 = vmax.f32 %v3699, 0.0
        %v3883 = vmax.f32 %v3701, 0.0
        %v3884 = vmax.f32 %v3812, 0.0
        %v3885 = vmax.f32 %v3814, 0.0
        %v3886 = vmax.f32 %v3703, 0.0
        %v3887 = vmax.f32 %v3705, 0.0
        %v3888 = vmax.f32 %v3816, 0.0
        %v3889 = vmax.f32 %v3818, 0.0
        %v3890 = vmax.f32 %v3709, 0.0
        %v3891 = vmax.f32 %v3711, 0.0
        %v3892 = vmax.f32 %v3822, 0.0
        %v3893 = vmax.f32 %v3824, 0.0
        %v3894 = vmax.f32 %v3713, 0.0
        %v3895 = vmax.f32 %v3715, 0.0
        %v3896 = vmax.f32 %v3826, 0.0
        %v3897 = vmax.f32 %v3828, 0.0
        %v3898 = vmax.f32 %v3719, 0.0
        %v3899 = vmax.f32 %v3721, 0.0
        %v3900 = vmax.f32 %v3832, 0.0
        %v3901 = vmax.f32 %v3834, 0.0
        %v3902 = vmax.f32 %v3723, 0.0
        %v3903 = vmax.f32 %v3725, 0.0
        %v3904 = vmax.f32 %v3836, 0.0
        %v3905 = vmax.f32 %v3838, 0.0
        %v3906 = vmax.f32 %v3729, 0.0
        %v3907 = vmax.f32 %v3731, 0.0
        %v3908 = vmax.f32 %v3842, 0.0
        %v3909 = vmax.f32 %v3844, 0.0
        %v3910 = vmax.f32 %v3733, 0.0
        %v3911 = vmax.f32 %v3735, 0.0
        %v3912 = vmax.f32 %v3846, 0.0
        %v3913 = vmax.f32 %v3848, 0.0
        %v3914 = vmin.f32 %v3850, 6.0
        %v3915 = vmin.f32 %v3851, 6.0
        %v3916 = vmin.f32 %v3852, 6.0
        %v3917 = vmin.f32 %v3853, 6.0
        %v3918 = vmin.f32 %v3854, 6.0
        %v3919 = vmin.f32 %v3855, 6.0
        %v3920 = vmin.f32 %v3856, 6.0
        %v3921 = vmin.f32 %v3857, 6.0
        %v3922 = vmin.f32 %v3858, 6.0
        %v3923 = vmin.f32 %v3859, 6.0
        %v3924 = vmin.f32 %v3860, 6.0
        %v3925 = vmin.f32 %v3861, 6.0
        %v3926 = vmin.f32 %v3862, 6.0
        %v3927 = vmin.f32 %v3863, 6.0
        %v3928 = vmin.f32 %v3864, 6.0
        %v3929 = vmin.f32 %v3865, 6.0
        %v3930 = vmin.f32 %v3866, 6.0
        %v3931 = vmin.f32 %v3867, 6.0
        %v3932 = vmin.f32 %v3868, 6.0
        %v3933 = vmin.f32 %v3869, 6.0
        %v3934 = vmin.f32 %v3870, 6.0
        %v3935 = vmin.f32 %v3871, 6.0
        %v3936 = vmin.f32 %v3872, 6.0
        %v3937 = vmin.f32 %v3873, 6.0
        %v3938 = vmin.f32 %v3874, 6.0
        %v3939 = vmin.f32 %v3875, 6.0
        %v3940 = vmin.f32 %v3876, 6.0
        %v3941 = vmin.f32 %v3877, 6.0
        %v3942 = vmin.f32 %v3878, 6.0
        %v3943 = vmin.f32 %v3879, 6.0
        %v3944 = vmin.f32 %v3880, 6.0
        %v3945 = vmin.f32 %v3881, 6.0
        %v3946 = vmin.f32 %v3882, 6.0
        %v3947 = vmin.f32 %v3883, 6.0
        %v3948 = vmin.f32 %v3884, 6.0
        %v3949 = vmin.f32 %v3885, 6.0
        %v3950 = vmin.f32 %v3886, 6.0
        %v3951 = vmin.f32 %v3887, 6.0
        %v3952 = vmin.f32 %v3888, 6.0
        %v3953 = vmin.f32 %v3889, 6.0
        %v3954 = vmin.f32 %v3890, 6.0
        %v3955 = vmin.f32 %v3891, 6.0
        %v3956 = vmin.f32 %v3892, 6.0
        %v3957 = vmin.f32 %v3893, 6.0
        %v3958 = vmin.f32 %v3894, 6.0
        %v3959 = vmin.f32 %v3895, 6.0
        %v3960 = vmin.f32 %v3896, 6.0
        %v3961 = vmin.f32 %v3897, 6.0
        %v3962 = vmin.f32 %v3898, 6.0
        %v3963 = vmin.f32 %v3899, 6.0
        %v3964 = vmin.f32 %v3900, 6.0
        %v3965 = vmin.f32 %v3901, 6.0
        %v3966 = vmin.f32 %v3902, 6.0
        %v3967 = vmin.f32 %v3903, 6.0
        %v3968 = vmin.f32 %v3904, 6.0
        %v3969 = vmin.f32 %v3905, 6.0
        %v3970 = vmin.f32 %v3906, 6.0
        %v3971 = vmin.f32 %v3907, 6.0
        %v3972 = vmin.f32 %v3908, 6.0
        %v3973 = vmin.f32 %v3909, 6.0
        %v3974 = vmin.f32 %v3910, 6.0
        %v3975 = vmin.f32 %v3911, 6.0
        %v3976 = vmin.f32 %v3912, 6.0
        %v3977 = vmin.f32 %v3913, 6.0
        %v3978 = vpack.c.bf16 %v3918, %v3914
        %v3979 = vpack.c.bf16 %v3919, %v3915
        %v3980 = vpack.c.bf16 %v3920, %v3916
        %v3981 = vpack.c.bf16 %v3921, %v3917
        %v3982 = vpack.c.bf16 %v3926, %v3922
        %v3983 = vpack.c.bf16 %v3927, %v3923
        %v3984 = vpack.c.bf16 %v3928, %v3924
        %v3985 = vpack.c.bf16 %v3929, %v3925
        %v3986 = vpack.c.bf16 %v3934, %v3930
        %v3987 = vpack.c.bf16 %v3935, %v3931
        %v3988 = vpack.c.bf16 %v3936, %v3932
        %v3989 = vpack.c.bf16 %v3937, %v3933
        %v3990 = vpack.c.bf16 %v3942, %v3938
        %v3991 = vpack.c.bf16 %v3943, %v3939
        %v3992 = vpack.c.bf16 %v3944, %v3940
        %v3993 = vpack.c.bf16 %v3945, %v3941
        %v3994 = vpack.c.bf16 %v3950, %v3946
        %v3995 = vpack.c.bf16 %v3951, %v3947
        %v3996 = vpack.c.bf16 %v3952, %v3948
        %v3997 = vpack.c.bf16 %v3953, %v3949
        %v3998 = vpack.c.bf16 %v3958, %v3954
        %v3999 = vpack.c.bf16 %v3959, %v3955
        %v4000 = vpack.c.bf16 %v3960, %v3956
        %v4001 = vpack.c.bf16 %v3961, %v3957
        %v4002 = vpack.c.bf16 %v3966, %v3962
        %v4003 = vpack.c.bf16 %v3967, %v3963
        %v4004 = vpack.c.bf16 %v3968, %v3964
        %v4005 = vpack.c.bf16 %v3969, %v3965
        %v4006 = vpack.c.bf16 %v3974, %v3970
        %v4007 = vpack.c.bf16 %v3975, %v3971
        %v4008 = vpack.c.bf16 %v3976, %v3972
        %v4009 = vpack.c.bf16 %v3977, %v3973
        %v4010 = vld [vmem:[%s8] sm:$0xf]
        %v4011 = vld [vmem:[%s8 + $0x4] sm:$0xf]
        %v4012 = vld [vmem:[%s8 + $0x8] sm:$0xf]
        %v4013 = vld [vmem:[%s8 + $0xc] sm:$0xf]
        %v4014 = vld [vmem:[%s8 + $0x10] sm:$0xf]
        %v4015 = vld [vmem:[%s8 + $0x14] sm:$0xf]
        %v4016 = vld [vmem:[%s8 + $0x18] sm:$0xf]
        %v4017 = vld [vmem:[%s8 + $0x1c] sm:$0xf]
        %v4018 = vld [vmem:[%s8 + $0x20] sm:$0xf]
        %v4019 = vld [vmem:[%s8 + $0x24] sm:$0xf]
        %v4020 = vld [vmem:[%s8 + $0x28] sm:$0xf]
        %v4021 = vld [vmem:[%s8 + $0x2c] sm:$0xf]
        %v4022 = vld [vmem:[%s8 + $0x30] sm:$0xf]
        %v4023 = vld [vmem:[%s8 + $0x34] sm:$0xf]
        %v4024 = vld [vmem:[%s8 + $0x38] sm:$0xf]
        %v4025 = vld [vmem:[%s8 + $0x3c] sm:$0xf]
        %v4026 = vld [vmem:[%s8 + $0x40] sm:$0xf]
        %v4027 = vld [vmem:[%s8 + $0x44] sm:$0xf]
        %v4028 = vld [vmem:[%s8 + $0x48] sm:$0xf]
        %v4029 = vld [vmem:[%s8 + $0x4c] sm:$0xf]
        %v4030 = vld [vmem:[%s8 + $0x50] sm:$0xf]
        %v4031 = vld [vmem:[%s8 + $0x54] sm:$0xf]
        %v4032 = vld [vmem:[%s8 + $0x58] sm:$0xf]
        %v4033 = vld [vmem:[%s8 + $0x5c] sm:$0xf]
        %v4034 = vld [vmem:[%s8 + $0x60] sm:$0xf]
        %v4035 = vld [vmem:[%s8 + $0x64] sm:$0xf]
        %v4036 = vld [vmem:[%s8 + $0x68] sm:$0xf]
        %v4037 = vld [vmem:[%s8 + $0x6c] sm:$0xf]
        %v4038 = vld [vmem:[%s8 + $0x70] sm:$0xf]
        %v4039 = vld [vmem:[%s8 + $0x74] sm:$0xf]
        %v4040 = vld [vmem:[%s8 + $0x78] sm:$0xf]
        %v4041 = vld [vmem:[%s8 + $0x7c] sm:$0xf]
        %v4042 = vld [vmem:[%s8 + $0x80] sm:$0xf]
        %v4043 = vld [vmem:[%s8 + $0x84] sm:$0xf]
        %v4044 = vld [vmem:[%s8 + $0x88] sm:$0xf]
        %v4045 = vld [vmem:[%s8 + $0x8c] sm:$0xf]
        %v4046 = vld [vmem:[%s8 + $0x90] sm:$0xf]
        %v4047 = vld [vmem:[%s8 + $0x94] sm:$0xf]
        %v4048 = vld [vmem:[%s8 + $0x98] sm:$0xf]
        %v4049 = vld [vmem:[%s8 + $0x9c] sm:$0xf]
        %v4050 = vld [vmem:[%s8 + $0xa0] sm:$0xf]
        %v4051 = vld [vmem:[%s8 + $0xa4] sm:$0xf]
        %v4052 = vld [vmem:[%s8 + $0xa8] sm:$0xf]
        %v4053 = vld [vmem:[%s8 + $0xac] sm:$0xf]
        %v4054 = vld [vmem:[%s8 + $0xb0] sm:$0xf]
        %v4055 = vld [vmem:[%s8 + $0xb4] sm:$0xf]
        %v4056 = vld [vmem:[%s8 + $0xb8] sm:$0xf]
        %v4057 = vld [vmem:[%s8 + $0xbc] sm:$0xf]
        %v4058 = vld [vmem:[%s8 + $0xc0] sm:$0xf]
        %v4059 = vld [vmem:[%s8 + $0xc4] sm:$0xf]
        %v4060 = vld [vmem:[%s8 + $0xc8] sm:$0xf]
        %v4061 = vld [vmem:[%s8 + $0xcc] sm:$0xf]
        %v4062 = vld [vmem:[%s8 + $0xd0] sm:$0xf]
        %v4063 = vld [vmem:[%s8 + $0xd4] sm:$0xf]
        %v4064 = vld [vmem:[%s8 + $0xd8] sm:$0xf]
        %v4065 = vld [vmem:[%s8 + $0xdc] sm:$0xf]
        %v4066 = vld [vmem:[%s8 + $0xe0] sm:$0xf]
        %v4067 = vld [vmem:[%s8 + $0xe4] sm:$0xf]
        %v4068 = vld [vmem:[%s8 + $0xe8] sm:$0xf]
        %v4069 = vld [vmem:[%s8 + $0xec] sm:$0xf]
        %v4070 = vld [vmem:[%s8 + $0xf0] sm:$0xf]
        %v4071 = vld [vmem:[%s8 + $0xf4] sm:$0xf]
        %v4072 = vld [vmem:[%s8 + $0xf8] sm:$0xf]
        %v4073 = vld [vmem:[%s8 + $0xfc] sm:$0xf]
        %v4074 = vld [vmem:[%s9] sm:$0x1]
        %v4076 = vlaneseq
        %v4077 = vshrl.u32 %v4076, 7
        %v4078 = vsub.s32 0, %v4077
        %v4079 = vrot.slane %v4074, %v4078
        %v4145 = vunpack.c.l.b16 %v4010
        %v4146 = vunpack.c.l.b16 %v4011
        %v4147 = vunpack.c.l.b16 %v4012
        %v4148 = vunpack.c.l.b16 %v4013
        %v4149 = vunpack.c.l.b16 %v4014
        %v4150 = vunpack.c.l.b16 %v4015
        %v4151 = vunpack.c.l.b16 %v4016
        %v4152 = vunpack.c.l.b16 %v4017
        %v4153 = vunpack.c.l.b16 %v4018
        %v4154 = vunpack.c.l.b16 %v4019
        %v4155 = vunpack.c.l.b16 %v4020
        %v4156 = vunpack.c.l.b16 %v4021
        %v4157 = vunpack.c.l.b16 %v4022
        %v4158 = vunpack.c.l.b16 %v4023
        %v4159 = vunpack.c.l.b16 %v4024
        %v4160 = vunpack.c.l.b16 %v4025
        %v4161 = vunpack.c.l.b16 %v4026
        %v4162 = vunpack.c.l.b16 %v4027
        %v4163 = vunpack.c.l.b16 %v4028
        %v4164 = vunpack.c.l.b16 %v4029
        %v4165 = vunpack.c.l.b16 %v4030
        %v4166 = vunpack.c.l.b16 %v4031
        %v4167 = vunpack.c.l.b16 %v4032
        %v4168 = vunpack.c.l.b16 %v4033
        %v4169 = vunpack.c.l.b16 %v4034
        %v4170 = vunpack.c.l.b16 %v4035
        %v4171 = vunpack.c.l.b16 %v4036
        %v4172 = vunpack.c.l.b16 %v4037
        %v4173 = vunpack.c.l.b16 %v4038
        %v4174 = vunpack.c.l.b16 %v4039
        %v4175 = vunpack.c.l.b16 %v4040
        %v4176 = vunpack.c.l.b16 %v4041
        %v4177 = vunpack.c.l.b16 %v4042
        %v4178 = vunpack.c.l.b16 %v4043
        %v4179 = vunpack.c.l.b16 %v4044
        %v4180 = vunpack.c.l.b16 %v4045
        %v4181 = vunpack.c.l.b16 %v4046
        %v4182 = vunpack.c.l.b16 %v4047
        %v4183 = vunpack.c.l.b16 %v4048
        %v4184 = vunpack.c.l.b16 %v4049
        %v4185 = vunpack.c.l.b16 %v4050
        %v4186 = vunpack.c.l.b16 %v4051
        %v4187 = vunpack.c.l.b16 %v4052
        %v4188 = vunpack.c.l.b16 %v4053
        %v4189 = vunpack.c.l.b16 %v4054
        %v4190 = vunpack.c.l.b16 %v4055
        %v4191 = vunpack.c.l.b16 %v4056
        %v4192 = vunpack.c.l.b16 %v4057
        %v4193 = vunpack.c.l.b16 %v4058
        %v4194 = vunpack.c.l.b16 %v4059
        %v4195 = vunpack.c.l.b16 %v4060
        %v4196 = vunpack.c.l.b16 %v4061
        %v4197 = vunpack.c.l.b16 %v4062
        %v4198 = vunpack.c.l.b16 %v4063
        %v4199 = vunpack.c.l.b16 %v4064
        %v4200 = vunpack.c.l.b16 %v4065
        %v4201 = vunpack.c.l.b16 %v4066
        %v4202 = vunpack.c.l.b16 %v4067
        %v4203 = vunpack.c.l.b16 %v4068
        %v4204 = vunpack.c.l.b16 %v4069
        %v4205 = vunpack.c.l.b16 %v4070
        %v4206 = vunpack.c.l.b16 %v4071
        %v4207 = vunpack.c.l.b16 %v4072
        %v4208 = vunpack.c.l.b16 %v4073
        %v4209 = vpack.c.b16 %v4146, %v4145
        %v4210 = vpack.c.b16 %v4148, %v4147
        %v4211 = vpack.c.b16 %v4150, %v4149
        %v4212 = vpack.c.b16 %v4152, %v4151
        %v4213 = vpack.c.b16 %v4154, %v4153
        %v4214 = vpack.c.b16 %v4156, %v4155
        %v4215 = vpack.c.b16 %v4158, %v4157
        %v4216 = vpack.c.b16 %v4160, %v4159
        %v4217 = vpack.c.b16 %v4162, %v4161
        %v4218 = vpack.c.b16 %v4164, %v4163
        %v4219 = vpack.c.b16 %v4166, %v4165
        %v4220 = vpack.c.b16 %v4168, %v4167
        %v4221 = vpack.c.b16 %v4170, %v4169
        %v4222 = vpack.c.b16 %v4172, %v4171
        %v4223 = vpack.c.b16 %v4174, %v4173
        %v4224 = vpack.c.b16 %v4176, %v4175
        %v4225 = vpack.c.b16 %v4178, %v4177
        %v4226 = vpack.c.b16 %v4180, %v4179
        %v4227 = vpack.c.b16 %v4182, %v4181
        %v4228 = vpack.c.b16 %v4184, %v4183
        %v4229 = vpack.c.b16 %v4186, %v4185
        %v4230 = vpack.c.b16 %v4188, %v4187
        %v4231 = vpack.c.b16 %v4190, %v4189
        %v4232 = vpack.c.b16 %v4192, %v4191
        %v4233 = vpack.c.b16 %v4194, %v4193
        %v4234 = vpack.c.b16 %v4196, %v4195
        %v4235 = vpack.c.b16 %v4198, %v4197
        %v4236 = vpack.c.b16 %v4200, %v4199
        %v4237 = vpack.c.b16 %v4202, %v4201
        %v4238 = vpack.c.b16 %v4204, %v4203
        %v4239 = vpack.c.b16 %v4206, %v4205
        %v4240 = vpack.c.b16 %v4208, %v4207
        %4273 = vmatprep.subr.bf16.mxu0 0
        %4274 = vmatpush1.bf16.msra.mxu0 %v4216
        %4275 = vmatprep.subr.bf16.mxu0 0
        %4276 = vmatpush1.bf16.msra.mxu0 %v4215
        %4277 = vmatprep.subr.bf16.mxu0 0
        %4278 = vmatpush1.bf16.msra.mxu0 %v4214
        %4279 = vmatprep.subr.bf16.mxu0 0
        %4280 = vmatpush1.bf16.msra.mxu0 %v4213
        %4281 = vmatprep.subr.bf16.mxu0 0
        %4282 = vmatpush1.bf16.msra.mxu0 %v4212
        %4283 = vmatprep.subr.bf16.mxu0 0
        %4284 = vmatpush1.bf16.msra.mxu0 %v4211
        %4285 = vmatprep.subr.bf16.mxu0 0
        %4286 = vmatpush1.bf16.msra.mxu0 %v4210
        %4287 = vmatprep.subr.bf16.mxu0 0
        %4288 = vmatpush1.bf16.msra.mxu0 %v4209
        %4289 = vmatprep.subr.bf16.mxu0 0
        %4290 = vmatpush2.bf16.msra.mxu0 %v4224
        %4291 = vmatprep.subr.bf16.mxu0 0
        %4292 = vmatpush2.bf16.msra.mxu0 %v4223
        %4293 = vmatprep.subr.bf16.mxu0 0
        %4294 = vmatpush2.bf16.msra.mxu0 %v4222
        %4295 = vmatprep.subr.bf16.mxu0 0
        %4296 = vmatpush2.bf16.msra.mxu0 %v4221
        %4297 = vmatprep.subr.bf16.mxu0 0
        %4298 = vmatpush2.bf16.msra.mxu0 %v4220
        %4299 = vmatprep.subr.bf16.mxu0 0
        %4300 = vmatpush2.bf16.msra.mxu0 %v4219
        %4301 = vmatprep.subr.bf16.mxu0 0
        %4302 = vmatpush2.bf16.msra.mxu0 %v4218
        %4303 = vmatprep.subr.bf16.mxu0 0
        %4304 = vmatpush2.bf16.msra.mxu0 %v4217
        %4305 = vmatprep.mubr.bf16.mxu0 %v3979
        %4306 = vmatmul.mubr.bf16.gmra.mxu0 %v3978
        %v4307 = vpop.f32.mrf.mxu0
        %v4308 = vadd.f32 %v4079, %v4307
        %v4309 = vpop.f32.mrf.mxu0
        %v4310 = vpop.f32.mrf.mxu0
        %v4311 = vadd.f32 %v4079, %v4310
        %v4312 = vpop.f32.mrf.mxu0
        %4313 = vmatprep.mubr.bf16.mxu0 %v3983
        %4314 = vmatmul.mubr.bf16.gmra.mxu0 %v3982
        %v4315 = vpop.f32.mrf.mxu0
        %v4316 = vadd.f32 %v4079, %v4315
        %v4317 = vpop.f32.mrf.mxu0
        %v4318 = vpop.f32.mrf.mxu0
        %v4319 = vadd.f32 %v4079, %v4318
        %v4320 = vpop.f32.mrf.mxu0
        %4321 = vmatprep.mubr.bf16.mxu0 %v3987
        %4322 = vmatmul.mubr.bf16.gmra.mxu0 %v3986
        %v4323 = vpop.f32.mrf.mxu0
        %v4324 = vadd.f32 %v4079, %v4323
        %v4325 = vpop.f32.mrf.mxu0
        %v4326 = vpop.f32.mrf.mxu0
        %v4327 = vadd.f32 %v4079, %v4326
        %v4328 = vpop.f32.mrf.mxu0
        %4329 = vmatprep.mubr.bf16.mxu0 %v3991
        %4330 = vmatmul.mubr.bf16.gmra.mxu0 %v3990
        %v4331 = vpop.f32.mrf.mxu0
        %v4332 = vadd.f32 %v4079, %v4331
        %v4333 = vpop.f32.mrf.mxu0
        %v4334 = vpop.f32.mrf.mxu0
        %v4335 = vadd.f32 %v4079, %v4334
        %v4336 = vpop.f32.mrf.mxu0
        %4337 = vmatprep.mubr.bf16.mxu0 %v3995
        %4338 = vmatmul.mubr.bf16.gmra.mxu0 %v3994
        %v4339 = vpop.f32.mrf.mxu0
        %v4340 = vadd.f32 %v4079, %v4339
        %v4341 = vpop.f32.mrf.mxu0
        %v4342 = vpop.f32.mrf.mxu0
        %v4343 = vadd.f32 %v4079, %v4342
        %v4344 = vpop.f32.mrf.mxu0
        %4345 = vmatprep.mubr.bf16.mxu0 %v3999
        %4346 = vmatmul.mubr.bf16.gmra.mxu0 %v3998
        %v4347 = vpop.f32.mrf.mxu0
        %v4348 = vadd.f32 %v4079, %v4347
        %v4349 = vpop.f32.mrf.mxu0
        %v4350 = vpop.f32.mrf.mxu0
        %v4351 = vadd.f32 %v4079, %v4350
        %v4352 = vpop.f32.mrf.mxu0
        %4353 = vmatprep.mubr.bf16.mxu0 %v4003
        %4354 = vmatmul.mubr.bf16.gmra.mxu0 %v4002
        %v4355 = vpop.f32.mrf.mxu0
        %v4356 = vadd.f32 %v4079, %v4355
        %v4357 = vpop.f32.mrf.mxu0
        %v4358 = vpop.f32.mrf.mxu0
        %v4359 = vadd.f32 %v4079, %v4358
        %v4360 = vpop.f32.mrf.mxu0
        %4361 = vmatprep.mubr.bf16.mxu0 %v4007
        %4362 = vmatmul.mubr.bf16.gmra.mxu0 %v4006
        %v4363 = vpop.f32.mrf.mxu0
        %v4364 = vadd.f32 %v4079, %v4363
        %v4365 = vpop.f32.mrf.mxu0
        %v4366 = vpop.f32.mrf.mxu0
        %v4367 = vadd.f32 %v4079, %v4366
        %v4368 = vpop.f32.mrf.mxu0
        %4369 = vdwg.mxu0
        %4370 = vmatprep.subr.bf16.mxu0 0
        %4371 = vmatpush1.bf16.msra.mxu0 %v4232
        %4372 = vmatprep.subr.bf16.mxu0 0
        %4373 = vmatpush1.bf16.msra.mxu0 %v4231
        %4374 = vmatprep.subr.bf16.mxu0 0
        %4375 = vmatpush1.bf16.msra.mxu0 %v4230
        %4376 = vmatprep.subr.bf16.mxu0 0
        %4377 = vmatpush1.bf16.msra.mxu0 %v4229
        %4378 = vmatprep.subr.bf16.mxu0 0
        %4379 = vmatpush1.bf16.msra.mxu0 %v4228
        %4380 = vmatprep.subr.bf16.mxu0 0
        %4381 = vmatpush1.bf16.msra.mxu0 %v4227
        %4382 = vmatprep.subr.bf16.mxu0 0
        %4383 = vmatpush1.bf16.msra.mxu0 %v4226
        %4384 = vmatprep.subr.bf16.mxu0 0
        %4385 = vmatpush1.bf16.msra.mxu0 %v4225
        %4386 = vmatprep.subr.bf16.mxu0 0
        %4387 = vmatpush2.bf16.msra.mxu0 %v4240
        %4388 = vmatprep.subr.bf16.mxu0 0
        %4389 = vmatpush2.bf16.msra.mxu0 %v4239
        %4390 = vmatprep.subr.bf16.mxu0 0
        %4391 = vmatpush2.bf16.msra.mxu0 %v4238
        %4392 = vmatprep.subr.bf16.mxu0 0
        %4393 = vmatpush2.bf16.msra.mxu0 %v4237
        %4394 = vmatprep.subr.bf16.mxu0 0
        %4395 = vmatpush2.bf16.msra.mxu0 %v4236
        %4396 = vmatprep.subr.bf16.mxu0 0
        %4397 = vmatpush2.bf16.msra.mxu0 %v4235
        %4398 = vmatprep.subr.bf16.mxu0 0
        %4399 = vmatpush2.bf16.msra.mxu0 %v4234
        %4400 = vmatprep.subr.bf16.mxu0 0
        %4401 = vmatpush2.bf16.msra.mxu0 %v4233
        %4402 = vmatprep.mubr.bf16.mxu0 %v3981
        %4403 = vmatmul.mubr.bf16.gmra.mxu0 %v3980
        %v4404 = vpop.f32.mrf.mxu0
        %v4405 = vadd.f32 %v4308, %v4404
        %v4406 = vpop.f32.mrf.mxu0
        %v4407 = vpop.f32.mrf.mxu0
        %v4408 = vadd.f32 %v4311, %v4407
        %v4409 = vpop.f32.mrf.mxu0
        %4410 = vmatprep.mubr.bf16.mxu0 %v3985
        %4411 = vmatmul.mubr.bf16.gmra.mxu0 %v3984
        %v4412 = vpop.f32.mrf.mxu0
        %v4413 = vadd.f32 %v4316, %v4412
        %v4414 = vpop.f32.mrf.mxu0
        %v4415 = vpop.f32.mrf.mxu0
        %v4416 = vadd.f32 %v4319, %v4415
        %v4417 = vpop.f32.mrf.mxu0
        %4418 = vmatprep.mubr.bf16.mxu0 %v3989
        %4419 = vmatmul.mubr.bf16.gmra.mxu0 %v3988
        %v4420 = vpop.f32.mrf.mxu0
        %v4421 = vadd.f32 %v4324, %v4420
        %v4422 = vpop.f32.mrf.mxu0
        %v4423 = vpop.f32.mrf.mxu0
        %v4424 = vadd.f32 %v4327, %v4423
        %v4425 = vpop.f32.mrf.mxu0
        %4426 = vmatprep.mubr.bf16.mxu0 %v3993
        %4427 = vmatmul.mubr.bf16.gmra.mxu0 %v3992
        %v4428 = vpop.f32.mrf.mxu0
        %v4429 = vadd.f32 %v4332, %v4428
        %v4430 = vpop.f32.mrf.mxu0
        %v4431 = vpop.f32.mrf.mxu0
        %v4432 = vadd.f32 %v4335, %v4431
        %v4433 = vpop.f32.mrf.mxu0
        %4434 = vmatprep.mubr.bf16.mxu0 %v3997
        %4435 = vmatmul.mubr.bf16.gmra.mxu0 %v3996
        %v4436 = vpop.f32.mrf.mxu0
        %v4437 = vadd.f32 %v4340, %v4436
        %v4438 = vpop.f32.mrf.mxu0
        %v4439 = vpop.f32.mrf.mxu0
        %v4440 = vadd.f32 %v4343, %v4439
        %v4441 = vpop.f32.mrf.mxu0
        %4442 = vmatprep.mubr.bf16.mxu0 %v4001
        %4443 = vmatmul.mubr.bf16.gmra.mxu0 %v4000
        %v4444 = vpop.f32.mrf.mxu0
        %v4445 = vadd.f32 %v4348, %v4444
        %v4446 = vpop.f32.mrf.mxu0
        %v4447 = vpop.f32.mrf.mxu0
        %v4448 = vadd.f32 %v4351, %v4447
        %v4449 = vpop.f32.mrf.mxu0
        %4450 = vmatprep.mubr.bf16.mxu0 %v4005
        %4451 = vmatmul.mubr.bf16.gmra.mxu0 %v4004
        %v4452 = vpop.f32.mrf.mxu0
        %v4453 = vadd.f32 %v4356, %v4452
        %v4454 = vpop.f32.mrf.mxu0
        %v4455 = vpop.f32.mrf.mxu0
        %v4456 = vadd.f32 %v4359, %v4455
        %v4457 = vpop.f32.mrf.mxu0
        %4458 = vmatprep.mubr.bf16.mxu0 %v4009
        %4459 = vmatmul.mubr.bf16.gmra.mxu0 %v4008
        %v4460 = vpop.f32.mrf.mxu0
        %v4461 = vadd.f32 %v4364, %v4460
        %v4462 = vpop.f32.mrf.mxu0
        %v4463 = vpop.f32.mrf.mxu0
        %v4464 = vadd.f32 %v4367, %v4463
        %v4465 = vpop.f32.mrf.mxu0
        %4466 = vdwg.mxu0
        %v4467 = vadd.f32 %v3386, %v4405
        %v4468 = vadd.f32 %v3387, %v4408
        %v4469 = vadd.f32 %v3388, %v4413
        %v4470 = vadd.f32 %v3389, %v4416
        %v4471 = vadd.f32 %v3390, %v4421
        %v4472 = vadd.f32 %v3391, %v4424
        %v4473 = vadd.f32 %v3392, %v4429
        %v4474 = vadd.f32 %v3393, %v4432
        %v4475 = vadd.f32 %v3394, %v4437
        %v4476 = vadd.f32 %v3395, %v4440
        %v4477 = vadd.f32 %v3396, %v4445
        %v4478 = vadd.f32 %v3397, %v4448
        %v4479 = vadd.f32 %v3398, %v4453
        %v4480 = vadd.f32 %v3399, %v4456
        %v4481 = vadd.f32 %v3400, %v4461
        %v4482 = vadd.f32 %v3401, %v4464
        %4483 = vst [vmem:[%s366] sm:$0xff] %v4467
        %4484 = vst [vmem:[%s366 + $0x8] sm:$0xff] %v4468
        %4485 = vst [vmem:[%s366 + $0x10] sm:$0xff] %v4469
        %4486 = vst [vmem:[%s366 + $0x18] sm:$0xff] %v4470
        %4487 = vst [vmem:[%s366 + $0x20] sm:$0xff] %v4471
        %4488 = vst [vmem:[%s366 + $0x28] sm:$0xff] %v4472
        %4489 = vst [vmem:[%s366 + $0x30] sm:$0xff] %v4473
        %4490 = vst [vmem:[%s366 + $0x38] sm:$0xff] %v4474
        %4491 = vst [vmem:[%s366 + $0x40] sm:$0xff] %v4475
        %4492 = vst [vmem:[%s366 + $0x48] sm:$0xff] %v4476
        %4493 = vst [vmem:[%s366 + $0x50] sm:$0xff] %v4477
        %4494 = vst [vmem:[%s366 + $0x58] sm:$0xff] %v4478
        %4495 = vst [vmem:[%s366 + $0x60] sm:$0xff] %v4479
        %4496 = vst [vmem:[%s366 + $0x68] sm:$0xff] %v4480
        %4497 = vst [vmem:[%s366 + $0x70] sm:$0xff] %v4481
        %4498 = vst [vmem:[%s366 + $0x78] sm:$0xff] %v4482
        %s4499 = sand.u32 %s261, 1
        %s4500 = scalar_lea.sflag [#allocation4], %s4499
        %s4501 = sand.u32 %s261, 1
        %s4502 = smul.addr %s4501, 128
        %s4503 = scalar_lea.vmem [#allocation3], %s4502
        // Predicated region
        $region65: #{local_block_forward.1} parent=59 // pred_check
          %p4504 = pneg %p271
        $region66: #{local_block_forward.1} parent=59 // pred_check_branch
          %4506 = sbr.rel (%p4504) target = $region68
        $region67: #{local_block_forward.1} parent=59 // pred_region
          %s4507 = smul.u32 8, %s29
          %s4509 = ssub.s32 2048, 2048
          %4510 = vsyncadd %s4500, %s4509
          %s4511 = smul.addr %s4507, 2
          %s4512 = smul.addr %s28, 32
          %s4513 = sadd.s32 %s4511, %s4512
          %s4514 = smul.addr %s4513, 128
          %s4515 = scalar_lea.hbm %s10, %s4514
          %s4516 = sshll.u32 %s4503, 4
          %s4517 = int_to_ptr.vmem [resolvable:$true] %s4516
          %4522 = dma.vmem_to_hbm [thread:$0]  %s4517, 2048, %s4515, %s4500, 128, 128, 8
        $region68: #{local_block_forward.1} parent=59 // pred_fallthru
          _
      $region60: #{local_block_forward.1} parent=5 // pred_fallthru
        _
      %p4523 = scmp.le.s32.totalorder 2, %s19
      // Predicated region
      $region69: #{local_block_forward.1} parent=5 // pred_check
        %p4524 = pneg %p4523
      $region70: #{local_block_forward.1} parent=5 // pred_check_branch
        %4526 = sbr.rel (%p4524) target = $region72
      $region71: #{local_block_forward.1} parent=5 // pred_region
        %s4527 = ssub.s32 %s19, 2
        // Predicated region
        $region73: #{local_block_forward.1} parent=71 // pred_check
          %p4528 = pneg %p277
        $region74: #{local_block_forward.1} parent=71 // pred_check_branch
          %4530 = sbr.rel (%p4528) target = $region76
        $region75: #{local_block_forward.1} parent=71 // pred_region
          %s4531 = sand.u32 %s262, 1
          %s4532 = scalar_lea.sflag [#allocation4], %s4531
          %s4533 = sand.u32 %s262, 1
          %s4534 = smul.addr %s4533, 128
          %s4535 = scalar_lea.vmem [#allocation3], %s4534
          %4536 = dma.done %s4532, 2048
        $region76: #{local_block_forward.1} parent=71 // pred_fallthru
          _
      $region72: #{local_block_forward.1} parent=5 // pred_fallthru
        _
    $region6: #{local_block_forward.1} parent=1 // loop_footer
      %s23 = sadd.s32 1, %s19
    $region7: #{local_block_forward.1} parent=1 // loop_footer_branch
      %18 = sbr.rel target = $region3
    $region8: #{local_block_forward.1} parent=1 // loop_exit
      _
    %4537 = vsyncpa [#allocation4], 1
    %s4538 = scalar_lea.sflag [#allocation4], 1
    %4539 = vsyncpa %s4538, 1

</llo_original>
